<compile_context>
chip_gen: v7x
topology: tpu7x:2x2x1
jax: 0.10.0
libtpu: 0.0.40
codegen_flags: <defaults>
</compile_context>

<pallas_src>
import functools

import jax
import jax.numpy as jnp
from jax.experimental import pallas as pl
from jax.experimental.pallas import tpu as pltpu


def _layernorm(v, w, b, eps=1e-5):
    mu = jnp.mean(v, axis=-1, keepdims=True)
    var = jnp.mean((v - mu) ** 2, axis=-1, keepdims=True)
    return (v - mu) * jax.lax.rsqrt(var + eps) * w + b


def _gelu_exact(x):
    # PyTorch nn.GELU default (erf formulation)
    return 0.5 * x * (1.0 + jax.lax.erf(x * 0.7071067811865475))


def _flash_block_kernel(
    xres_ref, q_ref, k_ref, v_ref,
    wp_ref, bproj_ref,
    ln2w_ref, ln2b_ref,
    wfc1_ref, bfc1_ref,
    wfc2_ref, bfc2_ref,
    out_ref,
    m_sc, l_sc, acc_sc,
    *, num_heads,
):
    f32 = jnp.float32
    bf16 = jnp.bfloat16
    ki = pl.program_id(2)

    @pl.when(ki == 0)
    def _init():
        m_sc[...] = jnp.full(m_sc.shape, -1e30, f32)
        l_sc[...] = jnp.zeros(l_sc.shape, f32)
        acc_sc[...] = jnp.zeros(acc_sc.shape, f32)

    q = q_ref[0]                                    # (H, TQ, d) bf16, scale pre-folded
    k = k_ref[0]                                    # (H, TK, d) bf16
    v = v_ref[0]                                    # (H, TK, d) bf16

    # logits for this (query-tile, kv-tile) pair
    s = jax.lax.dot_general(q, k, (((2,), (2,)), ((0,), (0,))),
                            preferred_element_type=f32)              # (H, TQ, TK)

    # online softmax update
    m_prev = m_sc[...]
    m_new = jnp.maximum(m_prev, jnp.max(s, axis=-1, keepdims=True))
    alpha = jnp.exp(m_prev - m_new)
    p = jnp.exp(s - m_new)
    l_sc[...] = alpha * l_sc[...] + jnp.sum(p, axis=-1, keepdims=True)
    pv = jax.lax.dot_general(p.astype(bf16), v, (((2,), (1,)), ((0,), (0,))),
                             preferred_element_type=f32)              # (H, TQ, d)
    acc_sc[...] = alpha * acc_sc[...] + pv
    m_sc[...] = m_new

    @pl.when(ki == pl.num_programs(2) - 1)
    def _finalize():
        o = (acc_sc[...] * pl.reciprocal(l_sc[...], approx=True)).astype(bf16)  # (H,TQ,d)

        # Head merge: accumulate per-head partial projections into one (TQ, C)
        # f32 buffer (no (H,TQ,C) intermediate, no transpose).
        proj = jnp.dot(o[0], wp_ref[0], preferred_element_type=f32)
        for h in range(1, num_heads):
            proj = proj + jnp.dot(o[h], wp_ref[h], preferred_element_type=f32)

        x1 = xres_ref[0].astype(f32) + proj + bproj_ref[...].astype(f32)        # (TQ, C)

        # MLP sub-block
        xn2 = _layernorm(x1, ln2w_ref[...].astype(f32), ln2b_ref[...].astype(f32)).astype(bf16)
        hdn = jnp.dot(xn2, wfc1_ref[...], preferred_element_type=f32) + bfc1_ref[...].astype(f32)
        hdn = _gelu_exact(hdn).astype(bf16)
        mlp = jnp.dot(hdn, wfc2_ref[...], preferred_element_type=f32) + bfc2_ref[...].astype(f32)

        out_ref[0] = (x1 + mlp).astype(out_ref.dtype)


def _prep_weights(params, num_heads):
    """Pre-transpose / head-split the PyTorch-layout weights once on the host."""
    C = params["wproj"].shape[0]
    d = C // num_heads
    scale = d ** -0.5
    f32, bf16 = jnp.float32, jnp.bfloat16

    wqkv_t = params["wqkv"].T.astype(f32)                              # (C, 3C)
    wq_t = (wqkv_t[:, 0 * C:1 * C] * scale).astype(bf16)               # scale folded into Wq
    wk_t = wqkv_t[:, 1 * C:2 * C].astype(bf16)
    wv_t = wqkv_t[:, 2 * C:3 * C].astype(bf16)
    wp_h = params["wproj"].T.reshape(num_heads, d, C).astype(bf16)     # (H, d, C)
    wfc1_t = params["wfc1"].T.astype(bf16)                             # (C, hid)
    wfc2_t = params["wfc2"].T.astype(bf16)                             # (hid, C)
    return wq_t, wk_t, wv_t, wp_h, wfc1_t, wfc2_t


def self_attn_block(x, pos, params, *, num_heads, tq=128, tk=128):
    """SelfAttnBlockAPI forward (block_style='attn'). `pos` is unused here."""
    del pos
    B, N, C = x.shape
    assert C % num_heads == 0
    H = num_heads
    d = C // H
    hid = params["wfc1"].shape[0]

    tq = min(tq, N)
    tk = min(tk, N)
    assert N % tq == 0 and N % tk == 0, "N must be divisible by the tile sizes"

    f32, bf16 = jnp.float32, jnp.bfloat16
    wq_t, wk_t, wv_t, wp_h, wfc1_t, wfc2_t = _prep_weights(params, num_heads)

    # --- LayerNorm1 + Q/K/V projection hoisted out of the kernel (one XLA GEMM
    # per token instead of once per query tile); q/k/v are head-major bf16. ---
    xn = _layernorm(x.astype(f32), params["ln1_w"][0], params["ln1_b"][0]).astype(bf16)

    def to_heads(y):                                                   # (B,N,C)->(B,H,N,d)
        return jnp.transpose(y.reshape(B, N, H, d), (0, 2, 1, 3))

    q = to_heads(jnp.dot(xn, wq_t, preferred_element_type=f32).astype(bf16))
    k = to_heads(jnp.dot(xn, wk_t, preferred_element_type=f32).astype(bf16))
    v = to_heads(jnp.dot(xn, wv_t, preferred_element_type=f32).astype(bf16))

    kernel = functools.partial(_flash_block_kernel, num_heads=H)
    grid = (B, N // tq, N // tk)

    qtile = lambda b, qi, ki: (b, qi, 0)       # x residual / output tile
    qhead = lambda b, qi, ki: (b, 0, qi, 0)    # Q tile
    khead = lambda b, qi, ki: (b, 0, ki, 0)    # K / V tile (streamed along kv axis)
    w2 = lambda b, qi, ki: (0, 0)              # constant 2-D operands
    w3 = lambda b, qi, ki: (0, 0, 0)           # constant 3-D operands

    def run(single_buffer_consts):
        # Weights / biases never change block index -> single-buffer them to
        # halve their VMEM footprint (important on v7x's 64 MiB per-TC VMEM).
        cmode = {"pipeline_mode": pl.Buffered(1)} if single_buffer_consts else {}
        return pl.pallas_call(
            kernel,
            out_shape=jax.ShapeDtypeStruct((B, N, C), x.dtype),
            grid=grid,
            in_specs=[
                pl.BlockSpec((1, tq, C), qtile),                       # x (residual tile)
                pl.BlockSpec((1, H, tq, d), qhead),                    # Q tile
                pl.BlockSpec((1, H, tk, d), khead),                    # K tile
                pl.BlockSpec((1, H, tk, d), khead),                    # V tile
                pl.BlockSpec((H, d, C), w3, **cmode),                  # Wproj (head-major)
                pl.BlockSpec((1, C), w2, **cmode),                     # bproj
                pl.BlockSpec((1, C), w2, **cmode),                     # ln2 w
                pl.BlockSpec((1, C), w2, **cmode),                     # ln2 b
                pl.BlockSpec((C, hid), w2, **cmode),                   # Wfc1^T
                pl.BlockSpec((1, hid), w2, **cmode),                   # bfc1
                pl.BlockSpec((hid, C), w2, **cmode),                   # Wfc2^T
                pl.BlockSpec((1, C), w2, **cmode),                     # bfc2
            ],
            out_specs=pl.BlockSpec((1, tq, C), qtile),
            scratch_shapes=[
                pltpu.VMEM((H, tq, 1), jnp.float32),   # m   (running max)
                pltpu.VMEM((H, tq, 1), jnp.float32),   # l   (running denominator)
                pltpu.VMEM((H, tq, d), jnp.float32),   # acc (running numerator)
            ],
            compiler_params=pltpu.CompilerParams(
                dimension_semantics=("parallel", "parallel", "arbitrary"),
                vmem_limit_bytes=48 * 1024 * 1024,
            ),
        )(
            x, q, k, v,
            wp_h, params["bproj"],
            params["ln2_w"], params["ln2_b"],
            wfc1_t, params["bfc1"],
            wfc2_t, params["bfc2"],
        )

    try:
        return run(True)
    except Exception:  # pragma: no cover - JAX without BlockSpec pipeline_mode support
        return run(False)


def reference_block(x, params, *, num_heads):
    """Plain-JAX f32 reference of the same forward (for self-check)."""
    B, N, C = x.shape
    d = C // num_heads

    def ln(v, w, b):
        mu = jnp.mean(v, -1, keepdims=True)
        var = jnp.mean((v - mu) ** 2, -1, keepdims=True)
        return (v - mu) / jnp.sqrt(var + 1e-5) * w[0] + b[0]

    xn = ln(x, params["ln1_w"], params["ln1_b"])
    qkv = jnp.einsum("bnc,oc->bno", xn, params["wqkv"]).reshape(B, N, 3, num_heads, d)
    qkv = jnp.transpose(qkv, (2, 0, 3, 1, 4))
    q, k, v = qkv[0], qkv[1], qkv[2]
    a = jnp.einsum("bhnd,bhmd->bhnm", q, k) * (d ** -0.5)
    a = jax.nn.softmax(a, axis=-1)
    o = jnp.einsum("bhnm,bhmd->bhnd", a, v)
    o = jnp.transpose(o, (0, 2, 1, 3)).reshape(B, N, C)
    o = jnp.einsum("bnc,oc->bno", o, params["wproj"]) + params["bproj"][0]
    x = x + o
    xn2 = ln(x, params["ln2_w"], params["ln2_b"])
    h = jnp.einsum("bnc,hc->bnh", xn2, params["wfc1"]) + params["bfc1"][0]
    h = jax.nn.gelu(h, approximate=False)
    m = jnp.einsum("bnh,ch->bnc", h, params["wfc2"]) + params["bfc2"][0]
    return x + m


def init_params(key, dim, mlp_ratio=4.0):
    hidden = int(dim * mlp_ratio)
    ks = jax.random.split(key, 4)
    s = 0.02
    return {
        "ln1_w": jnp.ones((1, dim), jnp.float32),
        "ln1_b": jnp.zeros((1, dim), jnp.float32),
        "wqkv": s * jax.random.normal(ks[0], (3 * dim, dim), jnp.float32),
        "wproj": s * jax.random.normal(ks[1], (dim, dim), jnp.float32),
        "bproj": jnp.zeros((1, dim), jnp.float32),
        "ln2_w": jnp.ones((1, dim), jnp.float32),
        "ln2_b": jnp.zeros((1, dim), jnp.float32),
        "wfc1": s * jax.random.normal(ks[2], (hidden, dim), jnp.float32),
        "bfc1": jnp.zeros((1, hidden), jnp.float32),
        "wfc2": s * jax.random.normal(ks[3], (dim, hidden), jnp.float32),
        "bfc2": jnp.zeros((1, dim), jnp.float32),
    }


def _run_case(B, N, dim, num_heads, tol, key):
    kx, kp, kparam = jax.random.split(key, 3)
    x = jax.random.normal(kx, (B, N, dim), jnp.float32)
    pos = jax.random.normal(kp, (B, N, dim), jnp.float32)   # unused in 'attn' config
    params = init_params(kparam, dim)

    out = jax.block_until_ready(self_attn_block(x, pos, params, num_heads=num_heads))
    ref = jax.block_until_ready(reference_block(x, params, num_heads=num_heads))
    assert out.shape == (B, N, dim)
    err = float(jnp.max(jnp.abs(out - ref)))
    # tolerance accounts for bf16 MXU operands (accumulation is f32)
    assert err < tol, f"max abs err {err} >= {tol} for shape {(B, N, dim)}"
    return err


if __name__ == "__main__":
    key = jax.random.PRNGKey(0)
    k1, k2 = jax.random.split(key)
    # tiny shape: single query tile, single KV tile (init+finalize same step)
    _run_case(2, 8, 32, 4, 5e-3, k1)
    # multi query-tile + multi KV-tile path (exercises online softmax across grid steps)
    _run_case(1, 256, 128, 4, 1e-2, k2)
    print("KERNEL_OK")
</pallas_src>

<mosaic_0001>
module attributes {stable_mosaic.version = 11 : i64} {
  func.func @_flash_block_kernel(%arg0: i32, %arg1: i32, %arg2: i32, %arg3: memref<1x8x32xf32, #tpu.memory_space<vmem>>, %arg4: memref<1x4x8x8xbf16, #tpu.memory_space<vmem>>, %arg5: memref<1x4x8x8xbf16, #tpu.memory_space<vmem>>, %arg6: memref<1x4x8x8xbf16, #tpu.memory_space<vmem>>, %arg7: memref<4x8x32xbf16, #tpu.memory_space<vmem>>, %arg8: memref<1x32xf32, #tpu.memory_space<vmem>>, %arg9: memref<1x32xf32, #tpu.memory_space<vmem>>, %arg10: memref<1x32xf32, #tpu.memory_space<vmem>>, %arg11: memref<32x128xbf16, #tpu.memory_space<vmem>>, %arg12: memref<1x128xf32, #tpu.memory_space<vmem>>, %arg13: memref<128x32xbf16, #tpu.memory_space<vmem>>, %arg14: memref<1x32xf32, #tpu.memory_space<vmem>>, %arg15: memref<1x8x32xf32, #tpu.memory_space<vmem>>, %arg16: memref<4x8x1xf32, #tpu.memory_space<vmem>>, %arg17: memref<4x8x1xf32, #tpu.memory_space<vmem>>, %arg18: memref<4x8x8xf32, #tpu.memory_space<vmem>>) attributes {dimension_semantics = [#tpu.dimension_semantics<parallel>, #tpu.dimension_semantics<parallel>, #tpu.dimension_semantics<arbitrary>], iteration_bounds = array<i64: 2, 1, 1>, scalar_prefetch = 0 : i64, scratch_operands = 3 : i64, tpu.core_type = #tpu.core_type<tc>, window_params = [{transform_indices = @transform_0, window_bounds = array<i64: 1, 8, 32>}, {transform_indices = @transform_1, window_bounds = array<i64: 1, 4, 8, 8>}, {transform_indices = @transform_2, window_bounds = array<i64: 1, 4, 8, 8>}, {transform_indices = @transform_3, window_bounds = array<i64: 1, 4, 8, 8>}, {pipeline_mode = #tpu.pipeline_mode<synchronous>, transform_indices = @transform_4, window_bounds = array<i64: 4, 8, 32>}, {pipeline_mode = #tpu.pipeline_mode<synchronous>, transform_indices = @transform_5, window_bounds = array<i64: 1, 32>}, {pipeline_mode = #tpu.pipeline_mode<synchronous>, transform_indices = @transform_6, window_bounds = array<i64: 1, 32>}, {pipeline_mode = #tpu.pipeline_mode<synchronous>, transform_indices = @transform_7, window_bounds = array<i64: 1, 32>}, {pipeline_mode = #tpu.pipeline_mode<synchronous>, transform_indices = @transform_8, window_bounds = array<i64: 32, 128>}, {pipeline_mode = #tpu.pipeline_mode<synchronous>, transform_indices = @transform_9, window_bounds = array<i64: 1, 128>}, {pipeline_mode = #tpu.pipeline_mode<synchronous>, transform_indices = @transform_10, window_bounds = array<i64: 128, 32>}, {pipeline_mode = #tpu.pipeline_mode<synchronous>, transform_indices = @transform_11, window_bounds = array<i64: 1, 32>}, {transform_indices = @transform_12, window_bounds = array<i64: 1, 8, 32>}]} {
    %c0_i32 = arith.constant 0 : i32
    %0 = arith.cmpi eq, %arg2, %c0_i32 : i32
    %1 = arith.extui %0 : i1 to i32
    %c0_i32_0 = arith.constant 0 : i32
    %2 = arith.cmpi ne, %1, %c0_i32_0 : i32
    scf.if %2 {
      %cst_35 = arith.constant -1.000000e+30 : f32
      %36 = vector.broadcast %cst_35 : f32 to vector<4x8x1xf32>
      %c0_36 = arith.constant 0 : index
      %c0_37 = arith.constant 0 : index
      %c0_38 = arith.constant 0 : index
      %37 = vector.load %arg16[%c0_36, %c0_37, %c0_38] : memref<4x8x1xf32, #tpu.memory_space<vmem>>, vector<4x8x1xf32>
      tpu.vector_store %arg16[%c0_36, %c0_37, %c0_38], %36 {strides = array<i32>} : memref<4x8x1xf32, #tpu.memory_space<vmem>>, vector<4x8x1xf32>,
      %cst_39 = arith.constant 0.000000e+00 : f32
      %38 = vector.broadcast %cst_39 : f32 to vector<4x8x1xf32>
      %c0_40 = arith.constant 0 : index
      %c0_41 = arith.constant 0 : index
      %c0_42 = arith.constant 0 : index
      %39 = vector.load %arg17[%c0_40, %c0_41, %c0_42] : memref<4x8x1xf32, #tpu.memory_space<vmem>>, vector<4x8x1xf32>
      tpu.vector_store %arg17[%c0_40, %c0_41, %c0_42], %38 {strides = array<i32>} : memref<4x8x1xf32, #tpu.memory_space<vmem>>, vector<4x8x1xf32>,
      %cst_43 = arith.constant 0.000000e+00 : f32
      %40 = vector.broadcast %cst_43 : f32 to vector<4x8x8xf32>
      %c0_44 = arith.constant 0 : index
      %c0_45 = arith.constant 0 : index
      %c0_46 = arith.constant 0 : index
      %41 = vector.load %arg18[%c0_44, %c0_45, %c0_46] : memref<4x8x8xf32, #tpu.memory_space<vmem>>, vector<4x8x8xf32>
      tpu.vector_store %arg18[%c0_44, %c0_45, %c0_46], %40 {strides = array<i32>} : memref<4x8x8xf32, #tpu.memory_space<vmem>>, vector<4x8x8xf32>,
    } else {
    }
    %c0 = arith.constant 0 : index
    %c0_1 = arith.constant 0 : index
    %c0_2 = arith.constant 0 : index
    %c0_3 = arith.constant 0 : index
    %3 = vector.load %arg4[%c0, %c0_1, %c0_2, %c0_3] : memref<1x4x8x8xbf16, #tpu.memory_space<vmem>>, vector<1x4x8x8xbf16>
    %4 = vector.shape_cast %3 : vector<1x4x8x8xbf16> to vector<4x8x8xbf16>
    %c0_4 = arith.constant 0 : index
    %c0_5 = arith.constant 0 : index
    %c0_6 = arith.constant 0 : index
    %c0_7 = arith.constant 0 : index
    %5 = vector.load %arg5[%c0_4, %c0_5, %c0_6, %c0_7] : memref<1x4x8x8xbf16, #tpu.memory_space<vmem>>, vector<1x4x8x8xbf16>
    %6 = vector.shape_cast %5 : vector<1x4x8x8xbf16> to vector<4x8x8xbf16>
    %c0_8 = arith.constant 0 : index
    %c0_9 = arith.constant 0 : index
    %c0_10 = arith.constant 0 : index
    %c0_11 = arith.constant 0 : index
    %7 = vector.load %arg6[%c0_8, %c0_9, %c0_10, %c0_11] : memref<1x4x8x8xbf16, #tpu.memory_space<vmem>>, vector<1x4x8x8xbf16>
    %8 = vector.shape_cast %7 : vector<1x4x8x8xbf16> to vector<4x8x8xbf16>
    %cst = arith.constant dense<0.000000e+00> : vector<4x8x8xf32>
    %9 = tpu.matmul %4, %6, %cst {dimension_numbers = #tpu.dot_dimension_numbers<[2], [2], [1], [1], [0, 0, 0, 1, 1, 1], [0], [0]>} : vector<4x8x8xbf16>, vector<4x8x8xbf16>, vector<4x8x8xf32> -> vector<4x8x8xf32>
    %c0_12 = arith.constant 0 : index
    %c0_13 = arith.constant 0 : index
    %c0_14 = arith.constant 0 : index
    %10 = vector.load %arg16[%c0_12, %c0_13, %c0_14] : memref<4x8x1xf32, #tpu.memory_space<vmem>>, vector<4x8x1xf32>
    %cst_15 = arith.constant dense<0xFF800000> : vector<4x8xf32>
    %11 = vector.multi_reduction <maximumf>, %9, %cst_15 [2] : vector<4x8x8xf32> to vector<4x8xf32>
    %12 = vector.shape_cast %11 : vector<4x8xf32> to vector<4x8x1xf32>
    %13 = arith.maximumf %10, %12 : vector<4x8x1xf32>
    %14 = arith.subf %10, %13 : vector<4x8x1xf32>
    %15 = math.exp %14 : vector<4x8x1xf32>
    %16 = vector.broadcast %13 : vector<4x8x1xf32> to vector<4x8x8xf32>
    %17 = arith.subf %9, %16 : vector<4x8x8xf32>
    %18 = math.exp %17 : vector<4x8x8xf32>
    %c0_16 = arith.constant 0 : index
    %c0_17 = arith.constant 0 : index
    %c0_18 = arith.constant 0 : index
    %19 = vector.load %arg17[%c0_16, %c0_17, %c0_18] : memref<4x8x1xf32, #tpu.memory_space<vmem>>, vector<4x8x1xf32>
    %20 = arith.mulf %15, %19 : vector<4x8x1xf32>
    %cst_19 = arith.constant dense<0.000000e+00> : vector<4x8xf32>
    %21 = vector.multi_reduction <add>, %18, %cst_19 [2] : vector<4x8x8xf32> to vector<4x8xf32>
    %22 = vector.shape_cast %21 : vector<4x8xf32> to vector<4x8x1xf32>
    %23 = arith.addf %20, %22 : vector<4x8x1xf32>
    %c0_20 = arith.constant 0 : index
    %c0_21 = arith.constant 0 : index
    %c0_22 = arith.constant 0 : index
    %24 = vector.load %arg17[%c0_20, %c0_21, %c0_22] : memref<4x8x1xf32, #tpu.memory_space<vmem>>, vector<4x8x1xf32>
    tpu.vector_store %arg17[%c0_20, %c0_21, %c0_22], %23 {strides = array<i32>} : memref<4x8x1xf32, #tpu.memory_space<vmem>>, vector<4x8x1xf32>,
    %25 = arith.truncf %18 : vector<4x8x8xf32> to vector<4x8x8xbf16>
    %cst_23 = arith.constant dense<0.000000e+00> : vector<4x8x8xf32>
    %26 = tpu.matmul %25, %8, %cst_23 {dimension_numbers = #tpu.dot_dimension_numbers<[2], [1], [1], [2], [0, 0, 0, 1, 1, 2], [0], [0]>} : vector<4x8x8xbf16>, vector<4x8x8xbf16>, vector<4x8x8xf32> -> vector<4x8x8xf32>
    %c0_24 = arith.constant 0 : index
    %c0_25 = arith.constant 0 : index
    %c0_26 = arith.constant 0 : index
    %27 = vector.load %arg18[%c0_24, %c0_25, %c0_26] : memref<4x8x8xf32, #tpu.memory_space<vmem>>, vector<4x8x8xf32>
    %28 = vector.broadcast %15 : vector<4x8x1xf32> to vector<4x8x8xf32>
    %29 = arith.mulf %28, %27 : vector<4x8x8xf32>
    %30 = arith.addf %29, %26 : vector<4x8x8xf32>
    %c0_27 = arith.constant 0 : index
    %c0_28 = arith.constant 0 : index
    %c0_29 = arith.constant 0 : index
    %31 = vector.load %arg18[%c0_27, %c0_28, %c0_29] : memref<4x8x8xf32, #tpu.memory_space<vmem>>, vector<4x8x8xf32>
    tpu.vector_store %arg18[%c0_27, %c0_28, %c0_29], %30 {strides = array<i32>} : memref<4x8x8xf32, #tpu.memory_space<vmem>>, vector<4x8x8xf32>,
    %c0_30 = arith.constant 0 : index
    %c0_31 = arith.constant 0 : index
    %c0_32 = arith.constant 0 : index
    %32 = vector.load %arg16[%c0_30, %c0_31, %c0_32] : memref<4x8x1xf32, #tpu.memory_space<vmem>>, vector<4x8x1xf32>
    tpu.vector_store %arg16[%c0_30, %c0_31, %c0_32], %13 {strides = array<i32>} : memref<4x8x1xf32, #tpu.memory_space<vmem>>, vector<4x8x1xf32>,
    %c0_i32_33 = arith.constant 0 : i32
    %33 = arith.cmpi eq, %arg2, %c0_i32_33 : i32
    %34 = arith.extui %33 : i1 to i32
    %c0_i32_34 = arith.constant 0 : i32
    %35 = arith.cmpi ne, %34, %c0_i32_34 : i32
    scf.if %35 {
      %c0_35 = arith.constant 0 : index
      %c0_36 = arith.constant 0 : index
      %c0_37 = arith.constant 0 : index
      %36 = vector.load %arg18[%c0_35, %c0_36, %c0_37] : memref<4x8x8xf32, #tpu.memory_space<vmem>>, vector<4x8x8xf32>
      %c0_38 = arith.constant 0 : index
      %c0_39 = arith.constant 0 : index
      %c0_40 = arith.constant 0 : index
      %37 = vector.load %arg17[%c0_38, %c0_39, %c0_40] : memref<4x8x1xf32, #tpu.memory_space<vmem>>, vector<4x8x1xf32>
      %38 = tpu.reciprocal %37 {approx = true} : vector<4x8x1xf32> -> vector<4x8x1xf32>
      %39 = vector.broadcast %38 : vector<4x8x1xf32> to vector<4x8x8xf32>
      %40 = arith.mulf %36, %39 : vector<4x8x8xf32>
      %41 = arith.truncf %40 : vector<4x8x8xf32> to vector<4x8x8xbf16>
      %42 = vector.extract_strided_slice %41 {offsets = [0, 0, 0], sizes = [1, 8, 8], strides = [1, 1, 1]} : vector<4x8x8xbf16> to vector<1x8x8xbf16>
      %43 = vector.shape_cast %42 : vector<1x8x8xbf16> to vector<8x8xbf16>
      %c0_41 = arith.constant 0 : index
      %c0_42 = arith.constant 0 : index
      %c0_43 = arith.constant 0 : index
      %44 = vector.load %arg7[%c0_41, %c0_42, %c0_43] : memref<4x8x32xbf16, #tpu.memory_space<vmem>>, vector<1x8x32xbf16>
      %45 = vector.shape_cast %44 : vector<1x8x32xbf16> to vector<8x32xbf16>
      %cst_44 = arith.constant dense<0.000000e+00> : vector<8x32xf32>
      %46 = tpu.matmul %43, %45, %cst_44 {dimension_numbers = #tpu.dot_dimension_numbers<[1], [0], [0], [1], [0, 0, 1, 1], [], []>} : vector<8x8xbf16>, vector<8x32xbf16>, vector<8x32xf32> -> vector<8x32xf32>
      %47 = vector.extract_strided_slice %41 {offsets = [1, 0, 0], sizes = [1, 8, 8], strides = [1, 1, 1]} : vector<4x8x8xbf16> to vector<1x8x8xbf16>
      %48 = vector.shape_cast %47 : vector<1x8x8xbf16> to vector<8x8xbf16>
      %c1 = arith.constant 1 : index
      %c0_45 = arith.constant 0 : index
      %c0_46 = arith.constant 0 : index
      %49 = vector.load %arg7[%c1, %c0_45, %c0_46] : memref<4x8x32xbf16, #tpu.memory_space<vmem>>, vector<1x8x32xbf16>
      %50 = vector.shape_cast %49 : vector<1x8x32xbf16> to vector<8x32xbf16>
      %cst_47 = arith.constant dense<0.000000e+00> : vector<8x32xf32>
      %51 = tpu.matmul %48, %50, %cst_47 {dimension_numbers = #tpu.dot_dimension_numbers<[1], [0], [0], [1], [0, 0, 1, 1], [], []>} : vector<8x8xbf16>, vector<8x32xbf16>, vector<8x32xf32> -> vector<8x32xf32>
      %52 = arith.addf %46, %51 : vector<8x32xf32>
      %53 = vector.extract_strided_slice %41 {offsets = [2, 0, 0], sizes = [1, 8, 8], strides = [1, 1, 1]} : vector<4x8x8xbf16> to vector<1x8x8xbf16>
      %54 = vector.shape_cast %53 : vector<1x8x8xbf16> to vector<8x8xbf16>
      %c2 = arith.constant 2 : index
      %c0_48 = arith.constant 0 : index
      %c0_49 = arith.constant 0 : index
      %55 = vector.load %arg7[%c2, %c0_48, %c0_49] : memref<4x8x32xbf16, #tpu.memory_space<vmem>>, vector<1x8x32xbf16>
      %56 = vector.shape_cast %55 : vector<1x8x32xbf16> to vector<8x32xbf16>
      %cst_50 = arith.constant dense<0.000000e+00> : vector<8x32xf32>
      %57 = tpu.matmul %54, %56, %cst_50 {dimension_numbers = #tpu.dot_dimension_numbers<[1], [0], [0], [1], [0, 0, 1, 1], [], []>} : vector<8x8xbf16>, vector<8x32xbf16>, vector<8x32xf32> -> vector<8x32xf32>
      %58 = arith.addf %52, %57 : vector<8x32xf32>
      %59 = vector.extract_strided_slice %41 {offsets = [3, 0, 0], sizes = [1, 8, 8], strides = [1, 1, 1]} : vector<4x8x8xbf16> to vector<1x8x8xbf16>
      %60 = vector.shape_cast %59 : vector<1x8x8xbf16> to vector<8x8xbf16>
      %c3 = arith.constant 3 : index
      %c0_51 = arith.constant 0 : index
      %c0_52 = arith.constant 0 : index
      %61 = vector.load %arg7[%c3, %c0_51, %c0_52] : memref<4x8x32xbf16, #tpu.memory_space<vmem>>, vector<1x8x32xbf16>
      %62 = vector.shape_cast %61 : vector<1x8x32xbf16> to vector<8x32xbf16>
      %cst_53 = arith.constant dense<0.000000e+00> : vector<8x32xf32>
      %63 = tpu.matmul %60, %62, %cst_53 {dimension_numbers = #tpu.dot_dimension_numbers<[1], [0], [0], [1], [0, 0, 1, 1], [], []>} : vector<8x8xbf16>, vector<8x32xbf16>, vector<8x32xf32> -> vector<8x32xf32>
      %64 = arith.addf %58, %63 : vector<8x32xf32>
      %c0_54 = arith.constant 0 : index
      %c0_55 = arith.constant 0 : index
      %c0_56 = arith.constant 0 : index
      %65 = vector.load %arg3[%c0_54, %c0_55, %c0_56] : memref<1x8x32xf32, #tpu.memory_space<vmem>>, vector<1x8x32xf32>
      %66 = vector.shape_cast %65 : vector<1x8x32xf32> to vector<8x32xf32>
      %67 = arith.addf %66, %64 : vector<8x32xf32>
      %c0_57 = arith.constant 0 : index
      %c0_58 = arith.constant 0 : index
      %68 = vector.load %arg8[%c0_57, %c0_58] : memref<1x32xf32, #tpu.memory_space<vmem>>, vector<1x32xf32>
      %69 = vector.broadcast %68 : vector<1x32xf32> to vector<8x32xf32>
      %70 = arith.addf %67, %69 : vector<8x32xf32>
      %c0_59 = arith.constant 0 : index
      %c0_60 = arith.constant 0 : index
      %71 = vector.load %arg9[%c0_59, %c0_60] : memref<1x32xf32, #tpu.memory_space<vmem>>, vector<1x32xf32>
      %c0_61 = arith.constant 0 : index
      %c0_62 = arith.constant 0 : index
      %72 = vector.load %arg10[%c0_61, %c0_62] : memref<1x32xf32, #tpu.memory_space<vmem>>, vector<1x32xf32>
      %cst_63 = arith.constant dense<0.000000e+00> : vector<8xf32>
      %73 = vector.multi_reduction <add>, %70, %cst_63 [1] : vector<8x32xf32> to vector<8xf32>
      %74 = vector.shape_cast %73 : vector<8xf32> to vector<8x1xf32>
      %cst_64 = arith.constant 3.200000e+01 : f32
      %75 = vector.broadcast %cst_64 : f32 to vector<8x1xf32>
      %76 = arith.divf %74, %75 : vector<8x1xf32>
      %77 = vector.broadcast %76 : vector<8x1xf32> to vector<8x32xf32>
      %78 = arith.subf %70, %77 : vector<8x32xf32>
      %79 = arith.mulf %78, %78 : vector<8x32xf32>
      %cst_65 = arith.constant dense<0.000000e+00> : vector<8xf32>
      %80 = vector.multi_reduction <add>, %79, %cst_65 [1] : vector<8x32xf32> to vector<8xf32>
      %81 = vector.shape_cast %80 : vector<8xf32> to vector<8x1xf32>
      %cst_66 = arith.constant 3.200000e+01 : f32
      %82 = vector.broadcast %cst_66 : f32 to vector<8x1xf32>
      %83 = arith.divf %81, %82 : vector<8x1xf32>
      %84 = vector.broadcast %76 : vector<8x1xf32> to vector<8x32xf32>
      %85 = arith.subf %70, %84 : vector<8x32xf32>
      %cst_67 = arith.constant 9.99999974E-6 : f32
      %86 = vector.broadcast %cst_67 : f32 to vector<8x1xf32>
      %87 = arith.addf %83, %86 : vector<8x1xf32>
      %88 = math.rsqrt %87 : vector<8x1xf32>
      %89 = vector.broadcast %88 : vector<8x1xf32> to vector<8x32xf32>
      %90 = arith.mulf %85, %89 : vector<8x32xf32>
      %91 = vector.broadcast %71 : vector<1x32xf32> to vector<8x32xf32>
      %92 = arith.mulf %90, %91 : vector<8x32xf32>
      %93 = vector.broadcast %72 : vector<1x32xf32> to vector<8x32xf32>
      %94 = arith.addf %92, %93 : vector<8x32xf32>
      %95 = arith.truncf %94 : vector<8x32xf32> to vector<8x32xbf16>
      %c0_68 = arith.constant 0 : index
      %c0_69 = arith.constant 0 : index
      %96 = vector.load %arg11[%c0_68, %c0_69] : memref<32x128xbf16, #tpu.memory_space<vmem>>, vector<32x128xbf16>
      %cst_70 = arith.constant dense<0.000000e+00> : vector<8x128xf32>
      %97 = tpu.matmul %95, %96, %cst_70 {dimension_numbers = #tpu.dot_dimension_numbers<[1], [0], [0], [1], [0, 0, 1, 1], [], []>} : vector<8x32xbf16>, vector<32x128xbf16>, vector<8x128xf32> -> vector<8x128xf32>
      %c0_71 = arith.constant 0 : index
      %c0_72 = arith.constant 0 : index
      %98 = vector.load %arg12[%c0_71, %c0_72] : memref<1x128xf32, #tpu.memory_space<vmem>>, vector<1x128xf32>
      %99 = vector.broadcast %98 : vector<1x128xf32> to vector<8x128xf32>
      %100 = arith.addf %97, %99 : vector<8x128xf32>
      %cst_73 = arith.constant 5.000000e-01 : f32
      %101 = vector.broadcast %cst_73 : f32 to vector<8x128xf32>
      %102 = arith.mulf %101, %100 : vector<8x128xf32>
      %cst_74 = arith.constant 0.707106769 : f32
      %103 = vector.broadcast %cst_74 : f32 to vector<8x128xf32>
      %104 = arith.mulf %100, %103 : vector<8x128xf32>
      %105 = math.erf %104 : vector<8x128xf32>
      %cst_75 = arith.constant 1.000000e+00 : f32
      %106 = vector.broadcast %cst_75 : f32 to vector<8x128xf32>
      %107 = arith.addf %106, %105 : vector<8x128xf32>
      %108 = arith.mulf %102, %107 : vector<8x128xf32>
      %109 = arith.truncf %108 : vector<8x128xf32> to vector<8x128xbf16>
      %c0_76 = arith.constant 0 : index
      %c0_77 = arith.constant 0 : index
      %110 = vector.load %arg13[%c0_76, %c0_77] : memref<128x32xbf16, #tpu.memory_space<vmem>>, vector<128x32xbf16>
      %cst_78 = arith.constant dense<0.000000e+00> : vector<8x32xf32>
      %111 = tpu.matmul %109, %110, %cst_78 {dimension_numbers = #tpu.dot_dimension_numbers<[1], [0], [0], [1], [0, 0, 1, 1], [], []>} : vector<8x128xbf16>, vector<128x32xbf16>, vector<8x32xf32> -> vector<8x32xf32>
      %c0_79 = arith.constant 0 : index
      %c0_80 = arith.constant 0 : index
      %112 = vector.load %arg14[%c0_79, %c0_80] : memref<1x32xf32, #tpu.memory_space<vmem>>, vector<1x32xf32>
      %113 = vector.broadcast %112 : vector<1x32xf32> to vector<8x32xf32>
      %114 = arith.addf %111, %113 : vector<8x32xf32>
      %115 = arith.addf %70, %114 : vector<8x32xf32>
      %c0_81 = arith.constant 0 : index
      %c0_82 = arith.constant 0 : index
      %c0_83 = arith.constant 0 : index
      %116 = vector.load %arg15[%c0_81, %c0_82, %c0_83] : memref<1x8x32xf32, #tpu.memory_space<vmem>>, vector<1x8x32xf32>
      %117 = vector.shape_cast %116 : vector<1x8x32xf32> to vector<8x32xf32>
      %118 = vector.shape_cast %115 : vector<8x32xf32> to vector<1x8x32xf32>
      tpu.vector_store %arg15[%c0_81, %c0_82, %c0_83], %118 {strides = array<i32>} : memref<1x8x32xf32, #tpu.memory_space<vmem>>, vector<1x8x32xf32>,
    } else {
    }
    return
  }
  func.func @transform_0(%arg0: i32, %arg1: i32, %arg2: i32) -> (i32, i32, i32) {
    %c0_i32 = arith.constant 0 : i32
    %c0_i32_0 = arith.constant 0 : i32
    return %arg0, %arg1, %c0_i32 : i32, i32, i32
  }
  func.func @transform_1(%arg0: i32, %arg1: i32, %arg2: i32) -> (i32, i32, i32, i32) {
    %c0_i32 = arith.constant 0 : i32
    %c0_i32_0 = arith.constant 0 : i32
    %c0_i32_1 = arith.constant 0 : i32
    return %arg0, %c0_i32, %arg1, %c0_i32_0 : i32, i32, i32, i32
  }
  func.func @transform_2(%arg0: i32, %arg1: i32, %arg2: i32) -> (i32, i32, i32, i32) {
    %c0_i32 = arith.constant 0 : i32
    %c0_i32_0 = arith.constant 0 : i32
    %c0_i32_1 = arith.constant 0 : i32
    return %arg0, %c0_i32, %arg2, %c0_i32_0 : i32, i32, i32, i32
  }
  func.func @transform_3(%arg0: i32, %arg1: i32, %arg2: i32) -> (i32, i32, i32, i32) {
    %c0_i32 = arith.constant 0 : i32
    %c0_i32_0 = arith.constant 0 : i32
    %c0_i32_1 = arith.constant 0 : i32
    return %arg0, %c0_i32, %arg2, %c0_i32_0 : i32, i32, i32, i32
  }
  func.func @transform_4(%arg0: i32, %arg1: i32, %arg2: i32) -> (i32, i32, i32) {
    %c0_i32 = arith.constant 0 : i32
    %c0_i32_0 = arith.constant 0 : i32
    %c0_i32_1 = arith.constant 0 : i32
    %c0_i32_2 = arith.constant 0 : i32
    return %c0_i32, %c0_i32_0, %c0_i32_1 : i32, i32, i32
  }
  func.func @transform_5(%arg0: i32, %arg1: i32, %arg2: i32) -> (i32, i32) {
    %c0_i32 = arith.constant 0 : i32
    %c0_i32_0 = arith.constant 0 : i32
    %c0_i32_1 = arith.constant 0 : i32
    return %c0_i32, %c0_i32_0 : i32, i32
  }
  func.func @transform_6(%arg0: i32, %arg1: i32, %arg2: i32) -> (i32, i32) {
    %c0_i32 = arith.constant 0 : i32
    %c0_i32_0 = arith.constant 0 : i32
    %c0_i32_1 = arith.constant 0 : i32
    return %c0_i32, %c0_i32_0 : i32, i32
  }
  func.func @transform_7(%arg0: i32, %arg1: i32, %arg2: i32) -> (i32, i32) {
    %c0_i32 = arith.constant 0 : i32
    %c0_i32_0 = arith.constant 0 : i32
    %c0_i32_1 = arith.constant 0 : i32
    return %c0_i32, %c0_i32_0 : i32, i32
  }
  func.func @transform_8(%arg0: i32, %arg1: i32, %arg2: i32) -> (i32, i32) {
    %c0_i32 = arith.constant 0 : i32
    %c0_i32_0 = arith.constant 0 : i32
    %c0_i32_1 = arith.constant 0 : i32
    return %c0_i32, %c0_i32_0 : i32, i32
  }
  func.func @transform_9(%arg0: i32, %arg1: i32, %arg2: i32) -> (i32, i32) {
    %c0_i32 = arith.constant 0 : i32
    %c0_i32_0 = arith.constant 0 : i32
    %c0_i32_1 = arith.constant 0 : i32
    return %c0_i32, %c0_i32_0 : i32, i32
  }
  func.func @transform_10(%arg0: i32, %arg1: i32, %arg2: i32) -> (i32, i32) {
    %c0_i32 = arith.constant 0 : i32
    %c0_i32_0 = arith.constant 0 : i32
    %c0_i32_1 = arith.constant 0 : i32
    return %c0_i32, %c0_i32_0 : i32, i32
  }
  func.func @transform_11(%arg0: i32, %arg1: i32, %arg2: i32) -> (i32, i32) {
    %c0_i32 = arith.constant 0 : i32
    %c0_i32_0 = arith.constant 0 : i32
    %c0_i32_1 = arith.constant 0 : i32
    return %c0_i32, %c0_i32_0 : i32, i32
  }
  func.func @transform_12(%arg0: i32, %arg1: i32, %arg2: i32) -> (i32, i32, i32) {
    %c0_i32 = arith.constant 0 : i32
    %c0_i32_0 = arith.constant 0 : i32
    return %arg0, %arg1, %c0_i32 : i32, i32, i32
  }
}

module attributes {stable_mosaic.version = 11 : i64} {
  func.func @_flash_block_kernel(%arg0: i32, %arg1: i32, %arg2: i32, %arg3: memref<1x8x32xf32, #tpu.memory_space<vmem>>, %arg4: memref<1x4x8x8xbf16, #tpu.memory_space<vmem>>, %arg5: memref<1x4x8x8xbf16, #tpu.memory_space<vmem>>, %arg6: memref<1x4x8x8xbf16, #tpu.memory_space<vmem>>, %arg7: memref<4x8x32xbf16, #tpu.memory_space<vmem>>, %arg8: memref<1x32xf32, #tpu.memory_space<vmem>>, %arg9: memref<1x32xf32, #tpu.memory_space<vmem>>, %arg10: memref<1x32xf32, #tpu.memory_space<vmem>>, %arg11: memref<32x128xbf16, #tpu.memory_space<vmem>>, %arg12: memref<1x128xf32, #tpu.memory_space<vmem>>, %arg13: memref<128x32xbf16, #tpu.memory_space<vmem>>, %arg14: memref<1x32xf32, #tpu.memory_space<vmem>>, %arg15: memref<1x8x32xf32, #tpu.memory_space<vmem>>, %arg16: memref<4x8x1xf32, #tpu.memory_space<vmem>>, %arg17: memref<4x8x1xf32, #tpu.memory_space<vmem>>, %arg18: memref<4x8x8xf32, #tpu.memory_space<vmem>>) attributes {dimension_semantics = [#tpu.dimension_semantics<parallel>, #tpu.dimension_semantics<parallel>, #tpu.dimension_semantics<arbitrary>], iteration_bounds = array<i64: 2, 1, 1>, scalar_prefetch = 0 : i64, scratch_operands = 3 : i64, tpu.core_type = #tpu.core_type<tc>, window_params = [{transform_indices = @transform_0, window_bounds = array<i64: 1, 8, 32>}, {transform_indices = @transform_1, window_bounds = array<i64: 1, 4, 8, 8>}, {transform_indices = @transform_2, window_bounds = array<i64: 1, 4, 8, 8>}, {transform_indices = @transform_3, window_bounds = array<i64: 1, 4, 8, 8>}, {pipeline_mode = #tpu.pipeline_mode<synchronous>, transform_indices = @transform_4, window_bounds = array<i64: 4, 8, 32>}, {pipeline_mode = #tpu.pipeline_mode<synchronous>, transform_indices = @transform_5, window_bounds = array<i64: 1, 32>}, {pipeline_mode = #tpu.pipeline_mode<synchronous>, transform_indices = @transform_6, window_bounds = array<i64: 1, 32>}, {pipeline_mode = #tpu.pipeline_mode<synchronous>, transform_indices = @transform_7, window_bounds = array<i64: 1, 32>}, {pipeline_mode = #tpu.pipeline_mode<synchronous>, transform_indices = @transform_8, window_bounds = array<i64: 32, 128>}, {pipeline_mode = #tpu.pipeline_mode<synchronous>, transform_indices = @transform_9, window_bounds = array<i64: 1, 128>}, {pipeline_mode = #tpu.pipeline_mode<synchronous>, transform_indices = @transform_10, window_bounds = array<i64: 128, 32>}, {pipeline_mode = #tpu.pipeline_mode<synchronous>, transform_indices = @transform_11, window_bounds = array<i64: 1, 32>}, {transform_indices = @transform_12, window_bounds = array<i64: 1, 8, 32>}]} {
    %c0_i32 = arith.constant 0 : i32
    %0 = arith.cmpi eq, %arg2, %c0_i32 : i32
    %1 = arith.extui %0 : i1 to i32
    %c0_i32_0 = arith.constant 0 : i32
    %2 = arith.cmpi ne, %1, %c0_i32_0 : i32
    scf.if %2 {
      %cst_35 = arith.constant -1.000000e+30 : f32
      %36 = vector.broadcast %cst_35 : f32 to vector<4x8x1xf32>
      %c0_36 = arith.constant 0 : index
      %c0_37 = arith.constant 0 : index
      %c0_38 = arith.constant 0 : index
      %37 = vector.load %arg16[%c0_36, %c0_37, %c0_38] : memref<4x8x1xf32, #tpu.memory_space<vmem>>, vector<4x8x1xf32>
      tpu.vector_store %arg16[%c0_36, %c0_37, %c0_38], %36 {strides = array<i32>} : memref<4x8x1xf32, #tpu.memory_space<vmem>>, vector<4x8x1xf32>,
      %cst_39 = arith.constant 0.000000e+00 : f32
      %38 = vector.broadcast %cst_39 : f32 to vector<4x8x1xf32>
      %c0_40 = arith.constant 0 : index
      %c0_41 = arith.constant 0 : index
      %c0_42 = arith.constant 0 : index
      %39 = vector.load %arg17[%c0_40, %c0_41, %c0_42] : memref<4x8x1xf32, #tpu.memory_space<vmem>>, vector<4x8x1xf32>
      tpu.vector_store %arg17[%c0_40, %c0_41, %c0_42], %38 {strides = array<i32>} : memref<4x8x1xf32, #tpu.memory_space<vmem>>, vector<4x8x1xf32>,
      %cst_43 = arith.constant 0.000000e+00 : f32
      %40 = vector.broadcast %cst_43 : f32 to vector<4x8x8xf32>
      %c0_44 = arith.constant 0 : index
      %c0_45 = arith.constant 0 : index
      %c0_46 = arith.constant 0 : index
      %41 = vector.load %arg18[%c0_44, %c0_45, %c0_46] : memref<4x8x8xf32, #tpu.memory_space<vmem>>, vector<4x8x8xf32>
      tpu.vector_store %arg18[%c0_44, %c0_45, %c0_46], %40 {strides = array<i32>} : memref<4x8x8xf32, #tpu.memory_space<vmem>>, vector<4x8x8xf32>,
    } else {
    }
    %c0 = arith.constant 0 : index
    %c0_1 = arith.constant 0 : index
    %c0_2 = arith.constant 0 : index
    %c0_3 = arith.constant 0 : index
    %3 = vector.load %arg4[%c0, %c0_1, %c0_2, %c0_3] : memref<1x4x8x8xbf16, #tpu.memory_space<vmem>>, vector<1x4x8x8xbf16>
    %4 = vector.shape_cast %3 : vector<1x4x8x8xbf16> to vector<4x8x8xbf16>
    %c0_4 = arith.constant 0 : index
    %c0_5 = arith.constant 0 : index
    %c0_6 = arith.constant 0 : index
    %c0_7 = arith.constant 0 : index
    %5 = vector.load %arg5[%c0_4, %c0_5, %c0_6, %c0_7] : memref<1x4x8x8xbf16, #tpu.memory_space<vmem>>, vector<1x4x8x8xbf16>
    %6 = vector.shape_cast %5 : vector<1x4x8x8xbf16> to vector<4x8x8xbf16>
    %c0_8 = arith.constant 0 : index
    %c0_9 = arith.constant 0 : index
    %c0_10 = arith.constant 0 : index
    %c0_11 = arith.constant 0 : index
    %7 = vector.load %arg6[%c0_8, %c0_9, %c0_10, %c0_11] : memref<1x4x8x8xbf16, #tpu.memory_space<vmem>>, vector<1x4x8x8xbf16>
    %8 = vector.shape_cast %7 : vector<1x4x8x8xbf16> to vector<4x8x8xbf16>
    %cst = arith.constant dense<0.000000e+00> : vector<4x8x8xf32>
    %9 = tpu.matmul %4, %6, %cst {dimension_numbers = #tpu.dot_dimension_numbers<[2], [2], [1], [1], [0, 0, 0, 1, 1, 1], [0], [0]>} : vector<4x8x8xbf16>, vector<4x8x8xbf16>, vector<4x8x8xf32> -> vector<4x8x8xf32>
    %c0_12 = arith.constant 0 : index
    %c0_13 = arith.constant 0 : index
    %c0_14 = arith.constant 0 : index
    %10 = vector.load %arg16[%c0_12, %c0_13, %c0_14] : memref<4x8x1xf32, #tpu.memory_space<vmem>>, vector<4x8x1xf32>
    %cst_15 = arith.constant dense<0xFF800000> : vector<4x8xf32>
    %11 = vector.multi_reduction <maximumf>, %9, %cst_15 [2] : vector<4x8x8xf32> to vector<4x8xf32>
    %12 = vector.shape_cast %11 : vector<4x8xf32> to vector<4x8x1xf32>
    %13 = arith.maximumf %10, %12 : vector<4x8x1xf32>
    %14 = arith.subf %10, %13 : vector<4x8x1xf32>
    %15 = math.exp %14 : vector<4x8x1xf32>
    %16 = vector.broadcast %13 : vector<4x8x1xf32> to vector<4x8x8xf32>
    %17 = arith.subf %9, %16 : vector<4x8x8xf32>
    %18 = math.exp %17 : vector<4x8x8xf32>
    %c0_16 = arith.constant 0 : index
    %c0_17 = arith.constant 0 : index
    %c0_18 = arith.constant 0 : index
    %19 = vector.load %arg17[%c0_16, %c0_17, %c0_18] : memref<4x8x1xf32, #tpu.memory_space<vmem>>, vector<4x8x1xf32>
    %20 = arith.mulf %15, %19 : vector<4x8x1xf32>
    %cst_19 = arith.constant dense<0.000000e+00> : vector<4x8xf32>
    %21 = vector.multi_reduction <add>, %18, %cst_19 [2] : vector<4x8x8xf32> to vector<4x8xf32>
    %22 = vector.shape_cast %21 : vector<4x8xf32> to vector<4x8x1xf32>
    %23 = arith.addf %20, %22 : vector<4x8x1xf32>
    %c0_20 = arith.constant 0 : index
    %c0_21 = arith.constant 0 : index
    %c0_22 = arith.constant 0 : index
    %24 = vector.load %arg17[%c0_20, %c0_21, %c0_22] : memref<4x8x1xf32, #tpu.memory_space<vmem>>, vector<4x8x1xf32>
    tpu.vector_store %arg17[%c0_20, %c0_21, %c0_22], %23 {strides = array<i32>} : memref<4x8x1xf32, #tpu.memory_space<vmem>>, vector<4x8x1xf32>,
    %25 = arith.truncf %18 : vector<4x8x8xf32> to vector<4x8x8xbf16>
    %cst_23 = arith.constant dense<0.000000e+00> : vector<4x8x8xf32>
    %26 = tpu.matmul %25, %8, %cst_23 {dimension_numbers = #tpu.dot_dimension_numbers<[2], [1], [1], [2], [0, 0, 0, 1, 1, 2], [0], [0]>} : vector<4x8x8xbf16>, vector<4x8x8xbf16>, vector<4x8x8xf32> -> vector<4x8x8xf32>
    %c0_24 = arith.constant 0 : index
    %c0_25 = arith.constant 0 : index
    %c0_26 = arith.constant 0 : index
    %27 = vector.load %arg18[%c0_24, %c0_25, %c0_26] : memref<4x8x8xf32, #tpu.memory_space<vmem>>, vector<4x8x8xf32>
    %28 = vector.broadcast %15 : vector<4x8x1xf32> to vector<4x8x8xf32>
    %29 = arith.mulf %28, %27 : vector<4x8x8xf32>
    %30 = arith.addf %29, %26 : vector<4x8x8xf32>
    %c0_27 = arith.constant 0 : index
    %c0_28 = arith.constant 0 : index
    %c0_29 = arith.constant 0 : index
    %31 = vector.load %arg18[%c0_27, %c0_28, %c0_29] : memref<4x8x8xf32, #tpu.memory_space<vmem>>, vector<4x8x8xf32>
    tpu.vector_store %arg18[%c0_27, %c0_28, %c0_29], %30 {strides = array<i32>} : memref<4x8x8xf32, #tpu.memory_space<vmem>>, vector<4x8x8xf32>,
    %c0_30 = arith.constant 0 : index
    %c0_31 = arith.constant 0 : index
    %c0_32 = arith.constant 0 : index
    %32 = vector.load %arg16[%c0_30, %c0_31, %c0_32] : memref<4x8x1xf32, #tpu.memory_space<vmem>>, vector<4x8x1xf32>
    tpu.vector_store %arg16[%c0_30, %c0_31, %c0_32], %13 {strides = array<i32>} : memref<4x8x1xf32, #tpu.memory_space<vmem>>, vector<4x8x1xf32>,
    %c0_i32_33 = arith.constant 0 : i32
    %33 = arith.cmpi eq, %arg2, %c0_i32_33 : i32
    %34 = arith.extui %33 : i1 to i32
    %c0_i32_34 = arith.constant 0 : i32
    %35 = arith.cmpi ne, %34, %c0_i32_34 : i32
    scf.if %35 {
      %c0_35 = arith.constant 0 : index
      %c0_36 = arith.constant 0 : index
      %c0_37 = arith.constant 0 : index
      %36 = vector.load %arg18[%c0_35, %c0_36, %c0_37] : memref<4x8x8xf32, #tpu.memory_space<vmem>>, vector<4x8x8xf32>
      %c0_38 = arith.constant 0 : index
      %c0_39 = arith.constant 0 : index
      %c0_40 = arith.constant 0 : index
      %37 = vector.load %arg17[%c0_38, %c0_39, %c0_40] : memref<4x8x1xf32, #tpu.memory_space<vmem>>, vector<4x8x1xf32>
      %38 = tpu.reciprocal %37 {approx = true} : vector<4x8x1xf32> -> vector<4x8x1xf32>
      %39 = vector.broadcast %38 : vector<4x8x1xf32> to vector<4x8x8xf32>
      %40 = arith.mulf %36, %39 : vector<4x8x8xf32>
      %41 = arith.truncf %40 : vector<4x8x8xf32> to vector<4x8x8xbf16>
      %42 = vector.extract_strided_slice %41 {offsets = [0, 0, 0], sizes = [1, 8, 8], strides = [1, 1, 1]} : vector<4x8x8xbf16> to vector<1x8x8xbf16>
      %43 = vector.shape_cast %42 : vector<1x8x8xbf16> to vector<8x8xbf16>
      %c0_41 = arith.constant 0 : index
      %c0_42 = arith.constant 0 : index
      %c0_43 = arith.constant 0 : index
      %44 = vector.load %arg7[%c0_41, %c0_42, %c0_43] : memref<4x8x32xbf16, #tpu.memory_space<vmem>>, vector<1x8x32xbf16>
      %45 = vector.shape_cast %44 : vector<1x8x32xbf16> to vector<8x32xbf16>
      %cst_44 = arith.constant dense<0.000000e+00> : vector<8x32xf32>
      %46 = tpu.matmul %43, %45, %cst_44 {dimension_numbers = #tpu.dot_dimension_numbers<[1], [0], [0], [1], [0, 0, 1, 1], [], []>} : vector<8x8xbf16>, vector<8x32xbf16>, vector<8x32xf32> -> vector<8x32xf32>
      %47 = vector.extract_strided_slice %41 {offsets = [1, 0, 0], sizes = [1, 8, 8], strides = [1, 1, 1]} : vector<4x8x8xbf16> to vector<1x8x8xbf16>
      %48 = vector.shape_cast %47 : vector<1x8x8xbf16> to vector<8x8xbf16>
      %c1 = arith.constant 1 : index
      %c0_45 = arith.constant 0 : index
      %c0_46 = arith.constant 0 : index
      %49 = vector.load %arg7[%c1, %c0_45, %c0_46] : memref<4x8x32xbf16, #tpu.memory_space<vmem>>, vector<1x8x32xbf16>
      %50 = vector.shape_cast %49 : vector<1x8x32xbf16> to vector<8x32xbf16>
      %cst_47 = arith.constant dense<0.000000e+00> : vector<8x32xf32>
      %51 = tpu.matmul %48, %50, %cst_47 {dimension_numbers = #tpu.dot_dimension_numbers<[1], [0], [0], [1], [0, 0, 1, 1], [], []>} : vector<8x8xbf16>, vector<8x32xbf16>, vector<8x32xf32> -> vector<8x32xf32>
      %52 = arith.addf %46, %51 : vector<8x32xf32>
      %53 = vector.extract_strided_slice %41 {offsets = [2, 0, 0], sizes = [1, 8, 8], strides = [1, 1, 1]} : vector<4x8x8xbf16> to vector<1x8x8xbf16>
      %54 = vector.shape_cast %53 : vector<1x8x8xbf16> to vector<8x8xbf16>
      %c2 = arith.constant 2 : index
      %c0_48 = arith.constant 0 : index
      %c0_49 = arith.constant 0 : index
      %55 = vector.load %arg7[%c2, %c0_48, %c0_49] : memref<4x8x32xbf16, #tpu.memory_space<vmem>>, vector<1x8x32xbf16>
      %56 = vector.shape_cast %55 : vector<1x8x32xbf16> to vector<8x32xbf16>
      %cst_50 = arith.constant dense<0.000000e+00> : vector<8x32xf32>
      %57 = tpu.matmul %54, %56, %cst_50 {dimension_numbers = #tpu.dot_dimension_numbers<[1], [0], [0], [1], [0, 0, 1, 1], [], []>} : vector<8x8xbf16>, vector<8x32xbf16>, vector<8x32xf32> -> vector<8x32xf32>
      %58 = arith.addf %52, %57 : vector<8x32xf32>
      %59 = vector.extract_strided_slice %41 {offsets = [3, 0, 0], sizes = [1, 8, 8], strides = [1, 1, 1]} : vector<4x8x8xbf16> to vector<1x8x8xbf16>
      %60 = vector.shape_cast %59 : vector<1x8x8xbf16> to vector<8x8xbf16>
      %c3 = arith.constant 3 : index
      %c0_51 = arith.constant 0 : index
      %c0_52 = arith.constant 0 : index
      %61 = vector.load %arg7[%c3, %c0_51, %c0_52] : memref<4x8x32xbf16, #tpu.memory_space<vmem>>, vector<1x8x32xbf16>
      %62 = vector.shape_cast %61 : vector<1x8x32xbf16> to vector<8x32xbf16>
      %cst_53 = arith.constant dense<0.000000e+00> : vector<8x32xf32>
      %63 = tpu.matmul %60, %62, %cst_53 {dimension_numbers = #tpu.dot_dimension_numbers<[1], [0], [0], [1], [0, 0, 1, 1], [], []>} : vector<8x8xbf16>, vector<8x32xbf16>, vector<8x32xf32> -> vector<8x32xf32>
      %64 = arith.addf %58, %63 : vector<8x32xf32>
      %c0_54 = arith.constant 0 : index
      %c0_55 = arith.constant 0 : index
      %c0_56 = arith.constant 0 : index
      %65 = vector.load %arg3[%c0_54, %c0_55, %c0_56] : memref<1x8x32xf32, #tpu.memory_space<vmem>>, vector<1x8x32xf32>
      %66 = vector.shape_cast %65 : vector<1x8x32xf32> to vector<8x32xf32>
      %67 = arith.addf %66, %64 : vector<8x32xf32>
      %c0_57 = arith.constant 0 : index
      %c0_58 = arith.constant 0 : index
      %68 = vector.load %arg8[%c0_57, %c0_58] : memref<1x32xf32, #tpu.memory_space<vmem>>, vector<1x32xf32>
      %69 = vector.broadcast %68 : vector<1x32xf32> to vector<8x32xf32>
      %70 = arith.addf %67, %69 : vector<8x32xf32>
      %c0_59 = arith.constant 0 : index
      %c0_60 = arith.constant 0 : index
      %71 = vector.load %arg9[%c0_59, %c0_60] : memref<1x32xf32, #tpu.memory_space<vmem>>, vector<1x32xf32>
      %c0_61 = arith.constant 0 : index
      %c0_62 = arith.constant 0 : index
      %72 = vector.load %arg10[%c0_61, %c0_62] : memref<1x32xf32, #tpu.memory_space<vmem>>, vector<1x32xf32>
      %cst_63 = arith.constant dense<0.000000e+00> : vector<8xf32>
      %73 = vector.multi_reduction <add>, %70, %cst_63 [1] : vector<8x32xf32> to vector<8xf32>
      %74 = vector.shape_cast %73 : vector<8xf32> to vector<8x1xf32>
      %cst_64 = arith.constant 3.200000e+01 : f32
      %75 = vector.broadcast %cst_64 : f32 to vector<8x1xf32>
      %76 = arith.divf %74, %75 : vector<8x1xf32>
      %77 = vector.broadcast %76 : vector<8x1xf32> to vector<8x32xf32>
      %78 = arith.subf %70, %77 : vector<8x32xf32>
      %79 = arith.mulf %78, %78 : vector<8x32xf32>
      %cst_65 = arith.constant dense<0.000000e+00> : vector<8xf32>
      %80 = vector.multi_reduction <add>, %79, %cst_65 [1] : vector<8x32xf32> to vector<8xf32>
      %81 = vector.shape_cast %80 : vector<8xf32> to vector<8x1xf32>
      %cst_66 = arith.constant 3.200000e+01 : f32
      %82 = vector.broadcast %cst_66 : f32 to vector<8x1xf32>
      %83 = arith.divf %81, %82 : vector<8x1xf32>
      %84 = vector.broadcast %76 : vector<8x1xf32> to vector<8x32xf32>
      %85 = arith.subf %70, %84 : vector<8x32xf32>
      %cst_67 = arith.constant 9.99999974E-6 : f32
      %86 = vector.broadcast %cst_67 : f32 to vector<8x1xf32>
      %87 = arith.addf %83, %86 : vector<8x1xf32>
      %88 = math.rsqrt %87 : vector<8x1xf32>
      %89 = vector.broadcast %88 : vector<8x1xf32> to vector<8x32xf32>
      %90 = arith.mulf %85, %89 : vector<8x32xf32>
      %91 = vector.broadcast %71 : vector<1x32xf32> to vector<8x32xf32>
      %92 = arith.mulf %90, %91 : vector<8x32xf32>
      %93 = vector.broadcast %72 : vector<1x32xf32> to vector<8x32xf32>
      %94 = arith.addf %92, %93 : vector<8x32xf32>
      %95 = arith.truncf %94 : vector<8x32xf32> to vector<8x32xbf16>
      %c0_68 = arith.constant 0 : index
      %c0_69 = arith.constant 0 : index
      %96 = vector.load %arg11[%c0_68, %c0_69] : memref<32x128xbf16, #tpu.memory_space<vmem>>, vector<32x128xbf16>
      %cst_70 = arith.constant dense<0.000000e+00> : vector<8x128xf32>
      %97 = tpu.matmul %95, %96, %cst_70 {dimension_numbers = #tpu.dot_dimension_numbers<[1], [0], [0], [1], [0, 0, 1, 1], [], []>} : vector<8x32xbf16>, vector<32x128xbf16>, vector<8x128xf32> -> vector<8x128xf32>
      %c0_71 = arith.constant 0 : index
      %c0_72 = arith.constant 0 : index
      %98 = vector.load %arg12[%c0_71, %c0_72] : memref<1x128xf32, #tpu.memory_space<vmem>>, vector<1x128xf32>
      %99 = vector.broadcast %98 : vector<1x128xf32> to vector<8x128xf32>
      %100 = arith.addf %97, %99 : vector<8x128xf32>
      %cst_73 = arith.constant 5.000000e-01 : f32
      %101 = vector.broadcast %cst_73 : f32 to vector<8x128xf32>
      %102 = arith.mulf %101, %100 : vector<8x128xf32>
      %cst_74 = arith.constant 0.707106769 : f32
      %103 = vector.broadcast %cst_74 : f32 to vector<8x128xf32>
      %104 = arith.mulf %100, %103 : vector<8x128xf32>
      %105 = math.erf %104 : vector<8x128xf32>
      %cst_75 = arith.constant 1.000000e+00 : f32
      %106 = vector.broadcast %cst_75 : f32 to vector<8x128xf32>
      %107 = arith.addf %106, %105 : vector<8x128xf32>
      %108 = arith.mulf %102, %107 : vector<8x128xf32>
      %109 = arith.truncf %108 : vector<8x128xf32> to vector<8x128xbf16>
      %c0_76 = arith.constant 0 : index
      %c0_77 = arith.constant 0 : index
      %110 = vector.load %arg13[%c0_76, %c0_77] : memref<128x32xbf16, #tpu.memory_space<vmem>>, vector<128x32xbf16>
      %cst_78 = arith.constant dense<0.000000e+00> : vector<8x32xf32>
      %111 = tpu.matmul %109, %110, %cst_78 {dimension_numbers = #tpu.dot_dimension_numbers<[1], [0], [0], [1], [0, 0, 1, 1], [], []>} : vector<8x128xbf16>, vector<128x32xbf16>, vector<8x32xf32> -> vector<8x32xf32>
      %c0_79 = arith.constant 0 : index
      %c0_80 = arith.constant 0 : index
      %112 = vector.load %arg14[%c0_79, %c0_80] : memref<1x32xf32, #tpu.memory_space<vmem>>, vector<1x32xf32>
      %113 = vector.broadcast %112 : vector<1x32xf32> to vector<8x32xf32>
      %114 = arith.addf %111, %113 : vector<8x32xf32>
      %115 = arith.addf %70, %114 : vector<8x32xf32>
      %c0_81 = arith.constant 0 : index
      %c0_82 = arith.constant 0 : index
      %c0_83 = arith.constant 0 : index
      %116 = vector.load %arg15[%c0_81, %c0_82, %c0_83] : memref<1x8x32xf32, #tpu.memory_space<vmem>>, vector<1x8x32xf32>
      %117 = vector.shape_cast %116 : vector<1x8x32xf32> to vector<8x32xf32>
      %118 = vector.shape_cast %115 : vector<8x32xf32> to vector<1x8x32xf32>
      tpu.vector_store %arg15[%c0_81, %c0_82, %c0_83], %118 {strides = array<i32>} : memref<1x8x32xf32, #tpu.memory_space<vmem>>, vector<1x8x32xf32>,
    } else {
    }
    return
  }
  func.func @transform_0(%arg0: i32, %arg1: i32, %arg2: i32) -> (i32, i32, i32) {
    %c0_i32 = arith.constant 0 : i32
    %c0_i32_0 = arith.constant 0 : i32
    return %arg0, %arg1, %c0_i32 : i32, i32, i32
  }
  func.func @transform_1(%arg0: i32, %arg1: i32, %arg2: i32) -> (i32, i32, i32, i32) {
    %c0_i32 = arith.constant 0 : i32
    %c0_i32_0 = arith.constant 0 : i32
    %c0_i32_1 = arith.constant 0 : i32
    return %arg0, %c0_i32, %arg1, %c0_i32_0 : i32, i32, i32, i32
  }
  func.func @transform_2(%arg0: i32, %arg1: i32, %arg2: i32) -> (i32, i32, i32, i32) {
    %c0_i32 = arith.constant 0 : i32
    %c0_i32_0 = arith.constant 0 : i32
    %c0_i32_1 = arith.constant 0 : i32
    return %arg0, %c0_i32, %arg2, %c0_i32_0 : i32, i32, i32, i32
  }
  func.func @transform_3(%arg0: i32, %arg1: i32, %arg2: i32) -> (i32, i32, i32, i32) {
    %c0_i32 = arith.constant 0 : i32
    %c0_i32_0 = arith.constant 0 : i32
    %c0_i32_1 = arith.constant 0 : i32
    return %arg0, %c0_i32, %arg2, %c0_i32_0 : i32, i32, i32, i32
  }
  func.func @transform_4(%arg0: i32, %arg1: i32, %arg2: i32) -> (i32, i32, i32) {
    %c0_i32 = arith.constant 0 : i32
    %c0_i32_0 = arith.constant 0 : i32
    %c0_i32_1 = arith.constant 0 : i32
    %c0_i32_2 = arith.constant 0 : i32
    return %c0_i32, %c0_i32_0, %c0_i32_1 : i32, i32, i32
  }
  func.func @transform_5(%arg0: i32, %arg1: i32, %arg2: i32) -> (i32, i32) {
    %c0_i32 = arith.constant 0 : i32
    %c0_i32_0 = arith.constant 0 : i32
    %c0_i32_1 = arith.constant 0 : i32
    return %c0_i32, %c0_i32_0 : i32, i32
  }
  func.func @transform_6(%arg0: i32, %arg1: i32, %arg2: i32) -> (i32, i32) {
    %c0_i32 = arith.constant 0 : i32
    %c0_i32_0 = arith.constant 0 : i32
    %c0_i32_1 = arith.constant 0 : i32
    return %c0_i32, %c0_i32_0 : i32, i32
  }
  func.func @transform_7(%arg0: i32, %arg1: i32, %arg2: i32) -> (i32, i32) {
    %c0_i32 = arith.constant 0 : i32
    %c0_i32_0 = arith.constant 0 : i32
    %c0_i32_1 = arith.constant 0 : i32
    return %c0_i32, %c0_i32_0 : i32, i32
  }
  func.func @transform_8(%arg0: i32, %arg1: i32, %arg2: i32) -> (i32, i32) {
    %c0_i32 = arith.constant 0 : i32
    %c0_i32_0 = arith.constant 0 : i32
    %c0_i32_1 = arith.constant 0 : i32
    return %c0_i32, %c0_i32_0 : i32, i32
  }
  func.func @transform_9(%arg0: i32, %arg1: i32, %arg2: i32) -> (i32, i32) {
    %c0_i32 = arith.constant 0 : i32
    %c0_i32_0 = arith.constant 0 : i32
    %c0_i32_1 = arith.constant 0 : i32
    return %c0_i32, %c0_i32_0 : i32, i32
  }
  func.func @transform_10(%arg0: i32, %arg1: i32, %arg2: i32) -> (i32, i32) {
    %c0_i32 = arith.constant 0 : i32
    %c0_i32_0 = arith.constant 0 : i32
    %c0_i32_1 = arith.constant 0 : i32
    return %c0_i32, %c0_i32_0 : i32, i32
  }
  func.func @transform_11(%arg0: i32, %arg1: i32, %arg2: i32) -> (i32, i32) {
    %c0_i32 = arith.constant 0 : i32
    %c0_i32_0 = arith.constant 0 : i32
    %c0_i32_1 = arith.constant 0 : i32
    return %c0_i32, %c0_i32_0 : i32, i32
  }
  func.func @transform_12(%arg0: i32, %arg1: i32, %arg2: i32) -> (i32, i32, i32) {
    %c0_i32 = arith.constant 0 : i32
    %c0_i32_0 = arith.constant 0 : i32
    return %arg0, %arg1, %c0_i32 : i32, i32, i32
  }
}

</mosaic_0001>

<llo_original>
// kernel: tpu_custom_call.1
$region0: #{tpu_custom_call.1}
  #allocation0 [shape = 'u32[]', space=smem, size = 0x4, offset = 0x4, fixed_abs, tag = 'smem constant byte address 0x4 - core index']
  #allocation1 [shape = 'u32[144,128]{1,0:T(1,128)}', space=vmem, size = 0x12000, scoped, tag = 'internal scratch']
  #allocation2 [shape = 'f32[4,8,1]{2,1,0:T(8,128)}', space=vmem, size = 0x4000, scoped, tag = 'scratch operand']
  #allocation3 [shape = 'f32[4,8,1]{2,1,0:T(8,128)}', space=vmem, size = 0x4000, scoped, tag = 'scratch operand']
  #allocation4 [shape = 'f32[4,8,8]{2,1,0:T(8,128)}', space=vmem, size = 0x4000, scoped, tag = 'scratch operand']
  %s0 = inlined_call_operand.vmem [shape: f32[2,8,32], index: 0, kind: input, shape index: {}]
  %s1 = inlined_call_operand.vmem [shape: bf16[2,4,8,8], index: 1, kind: input, shape index: {}]
  %s2 = inlined_call_operand.vmem [shape: bf16[2,4,8,8], index: 2, kind: input, shape index: {}]
  %s3 = inlined_call_operand.hbm [shape: bf16[2,4,8,8], index: 3, kind: input, shape index: {}]
  %s4 = inlined_call_operand.hbm [shape: bf16[4,8,32], index: 4, kind: input, shape index: {}]
  %s5 = inlined_call_operand.vmem [shape: f32[1,32], index: 5, kind: input, shape index: {}]
  %s6 = inlined_call_operand.vmem [shape: f32[1,32], index: 6, kind: input, shape index: {}]
  %s7 = inlined_call_operand.hbm [shape: f32[1,32], index: 7, kind: input, shape index: {}]
  %s8 = inlined_call_operand.vmem [shape: bf16[32,128], index: 8, kind: input, shape index: {}]
  %s9 = inlined_call_operand.hbm [shape: f32[1,128], index: 9, kind: input, shape index: {}]
  %s10 = inlined_call_operand.vmem [shape: bf16[128,32], index: 10, kind: input, shape index: {}]
  %s11 = inlined_call_operand.vmem [shape: f32[1,32], index: 11, kind: input, shape index: {}]
  %s12 = inlined_call_operand.hbm [shape: f32[2,8,32], index: 12, kind: output, shape index: {}]
  %s13 = sld [smem:[#allocation0]]
  $region105: #{tpu_custom_call.1} parent=0
    _
  %s15 = ssub.s32 1, %s13
  %s16 = scalar_select 0, %s15, %s13
  $region1: #{tpu_custom_call.1} parent=0
    #allocation5 [shape = 'u8[16384]{0}', space=vmem, size = 0x4000, scoped, tag = 'input window, operand 3']
    #allocation6 [shape = 's32[2]{0}', space=sflag, size = 0x8, scoped, tag = 'scoped memory for tpu_custom_call.1']
    #allocation7 [shape = 's32[2]{0}', space=sflag, size = 0x8, scoped, tag = 'scoped memory for tpu_custom_call.1']
    #allocation8 [shape = 'u8[8192]{0}', space=vmem, size = 0x2000, scoped, tag = 'input window, operand 4, single buffered']
    #allocation9 [shape = 's32[1]{0}', space=sflag, size = 0x4, scoped, tag = 'scoped memory for tpu_custom_call.1']
    #allocation10 [shape = 'u8[512]{0}', space=vmem, size = 0x400, scoped, tag = 'input window, operand 7, single buffered']
    #allocation11 [shape = 'u8[512]{0}', space=vmem, size = 0x400, scoped, tag = 'input window, operand 9, single buffered']
    #allocation12 [shape = 's32[1]{0}', space=sflag, size = 0x4, scoped, tag = 'scoped memory for tpu_custom_call.1']
    #allocation13 [shape = 'u8[8192]{0}', space=vmem, size = 0x2000, scoped, tag = 'output window, operand 0']
    %17 = vsyncpa [#allocation6], 0
    %s18 = scalar_lea.sflag [#allocation6], 1
    %19 = vsyncpa %s18, 0
    %20 = vsyncpa [#allocation9], 0
    %21 = vsyncpa [#allocation12], 0
    %22 = vsyncpa [#allocation7], 0
    %s23 = scalar_lea.sflag [#allocation7], 1
    %24 = vsyncpa %s23, 0
    loop: start=0, step=1, limit=4
    $region2: #{tpu_custom_call.1} parent=1 // loop_pre_header
      _
    $region3: #{tpu_custom_call.1} parent=1 // loop_header
      %s26 = sphi 0, %s30
      %p27 = scmp.ge.s32.totalorder %s26, 4
      %s33 = sphi 0, %s52
      %s34 = sphi 0, %s48
      %s35 = sphi 0, %s44
      %s36 = sphi 0, %s33
      %s37 = sphi 0, %s34
      %s38 = sphi 0, %s35
      %s39 = sphi 0, %s36
      %s40 = sphi 0, %s37
      %s41 = sphi 0, %s38
      %s57 = sphi 0, %s59
      %s60 = sphi 0, %s57
      %s61 = sphi 0, %s60
      %s77 = sphi 0, %s61
      %s85 = sphi 0, %s87
      %s88 = sphi 0, %s85
      %s89 = sphi 0, %s88
      %s105 = sphi 0, %s89
      %s113 = sphi 0, %s115
      %s116 = sphi 0, %s113
      %s117 = sphi 0, %s116
      %s133 = sphi 0, %s117
      %s141 = sphi 0, %s143
      %s144 = sphi 0, %s141
      %s145 = sphi 0, %s144
      %s161 = sphi 0, %s145
      %s165 = sphi 0, %s165
      %s167 = sphi 0, %s165
      %s168 = sphi 0, %s167
      %s182 = sphi 0, %s168
      %s186 = sphi 0, %s186
      %s188 = sphi 0, %s186
      %s189 = sphi 0, %s188
      %s203 = sphi 0, %s189
      %s207 = sphi 0, %s207
      %s209 = sphi 0, %s207
      %s210 = sphi 0, %s209
      %s224 = sphi 0, %s210
      %s228 = sphi 0, %s228
      %s230 = sphi 0, %s228
      %s231 = sphi 0, %s230
      %s245 = sphi 0, %s231
      %s249 = sphi 0, %s249
      %s251 = sphi 0, %s249
      %s252 = sphi 0, %s251
      %s266 = sphi 0, %s252
      %s270 = sphi 0, %s270
      %s272 = sphi 0, %s270
      %s273 = sphi 0, %s272
      %s287 = sphi 0, %s273
      %s291 = sphi 0, %s291
      %s293 = sphi 0, %s291
      %s294 = sphi 0, %s293
      %s308 = sphi 0, %s294
      %s312 = sphi 0, %s312
      %s314 = sphi 0, %s312
      %s315 = sphi 0, %s314
      %s329 = sphi 0, %s315
      %s337 = sphi 0, %s339
      %s340 = sphi 0, %s337
      %s341 = sphi 0, %s340
      %s357 = sphi 0, %s341
    $region4: #{tpu_custom_call.1} parent=1 // loop_header_branch
      %29 = sbr.rel (%p27) target = $region8
    $region5: #{tpu_custom_call.1} parent=1 // loop_body
      %s31 = ssub.s32 %s26, 1
      %s32 = ssub.s32 %s26, 2
      %s42 = sadd.s32 1, %s35
      %p43 = scmp.ge.s32.totalorder %s42, 1
      %s44 = scalar_select %p43, 0, %s42
      %s45 = sadd.s32 1, %s34
      %s46 = scalar_select %p43, %s45, %s34
      %p47 = scmp.ge.s32.totalorder %s46, 1
      %s48 = scalar_select %p47, 0, %s46
      %s49 = sadd.s32 1, %s33
      %s50 = scalar_select %p47, %s49, %s33
      %p51 = scmp.ge.s32.totalorder %s50, 2
      %s52 = scalar_select %p51, 0, %s50
      %s53 = ssub.s32 %s33, %s52
      %s54 = ssub.s32 %s34, %s48
      %s55 = sor.u32 %s53, %s54
      %p56 = scmp.eq.s32.totalorder %s55, 0
      %s58 = sadd.s32 %s57, 1
      %s59 = scalar_select %p56, %s57, %s58
      %p62 = pneg %p56
      %p63 = scmp.eq.s32.totalorder %s26, 1
      %p64 = por %p62, %p63
      %p65 = scmp.ne.s32.totalorder %s57, %s60
      %p66 = scmp.eq.s32.totalorder %s26, 0
      %p67 = por %p65, %p66
      %p68 = scmp.ne.s32.totalorder %s57, %s60
      %p69 = scmp.eq.s32.totalorder %s31, 1
      %p70 = por %p68, %p69
      %p71 = scmp.ne.s32.totalorder %s60, %s61
      %p72 = scmp.eq.s32.totalorder %s31, 0
      %p73 = por %p71, %p72
      %p74 = scmp.ne.s32.totalorder %s60, %s61
      %p75 = scmp.eq.s32.totalorder %s32, 1
      %p76 = por %p74, %p75
      %p78 = scmp.ne.s32.totalorder %s61, %s77
      %p79 = scmp.eq.s32.totalorder %s32, 0
      %p80 = por %p78, %p79
      %s81 = ssub.s32 %s33, %s52
      %s82 = ssub.s32 %s34, %s48
      %s83 = sor.u32 %s81, %s82
      %p84 = scmp.eq.s32.totalorder %s83, 0
      %s86 = sadd.s32 %s85, 1
      %s87 = scalar_select %p84, %s85, %s86
      %p90 = pneg %p84
      %p91 = scmp.eq.s32.totalorder %s26, 1
      %p92 = por %p90, %p91
      %p93 = scmp.ne.s32.totalorder %s85, %s88
      %p94 = scmp.eq.s32.totalorder %s26, 0
      %p95 = por %p93, %p94
      %p96 = scmp.ne.s32.totalorder %s85, %s88
      %p97 = scmp.eq.s32.totalorder %s31, 1
      %p98 = por %p96, %p97
      %p99 = scmp.ne.s32.totalorder %s88, %s89
      %p100 = scmp.eq.s32.totalorder %s31, 0
      %p101 = por %p99, %p100
      %p102 = scmp.ne.s32.totalorder %s88, %s89
      %p103 = scmp.eq.s32.totalorder %s32, 1
      %p104 = por %p102, %p103
      %p106 = scmp.ne.s32.totalorder %s89, %s105
      %p107 = scmp.eq.s32.totalorder %s32, 0
      %p108 = por %p106, %p107
      %s109 = ssub.s32 %s33, %s52
      %s110 = ssub.s32 %s35, %s44
      %s111 = sor.u32 %s109, %s110
      %p112 = scmp.eq.s32.totalorder %s111, 0
      %s114 = sadd.s32 %s113, 1
      %s115 = scalar_select %p112, %s113, %s114
      %p118 = pneg %p112
      %p119 = scmp.eq.s32.totalorder %s26, 1
      %p120 = por %p118, %p119
      %p121 = scmp.ne.s32.totalorder %s113, %s116
      %p122 = scmp.eq.s32.totalorder %s26, 0
      %p123 = por %p121, %p122
      %p124 = scmp.ne.s32.totalorder %s113, %s116
      %p125 = scmp.eq.s32.totalorder %s31, 1
      %p126 = por %p124, %p125
      %p127 = scmp.ne.s32.totalorder %s116, %s117
      %p128 = scmp.eq.s32.totalorder %s31, 0
      %p129 = por %p127, %p128
      %p130 = scmp.ne.s32.totalorder %s116, %s117
      %p131 = scmp.eq.s32.totalorder %s32, 1
      %p132 = por %p130, %p131
      %p134 = scmp.ne.s32.totalorder %s117, %s133
      %p135 = scmp.eq.s32.totalorder %s32, 0
      %p136 = por %p134, %p135
      %s137 = ssub.s32 %s33, %s52
      %s138 = ssub.s32 %s35, %s44
      %s139 = sor.u32 %s137, %s138
      %p140 = scmp.eq.s32.totalorder %s139, 0
      %s142 = sadd.s32 %s141, 1
      %s143 = scalar_select %p140, %s141, %s142
      %p146 = pneg %p140
      %p147 = scmp.eq.s32.totalorder %s26, 1
      %p148 = por %p146, %p147
      %p149 = scmp.ne.s32.totalorder %s141, %s144
      %p150 = scmp.eq.s32.totalorder %s26, 0
      %p151 = por %p149, %p150
      %p152 = scmp.ne.s32.totalorder %s141, %s144
      %p153 = scmp.eq.s32.totalorder %s31, 1
      %p154 = por %p152, %p153
      %p155 = scmp.ne.s32.totalorder %s144, %s145
      %p156 = scmp.eq.s32.totalorder %s31, 0
      %p157 = por %p155, %p156
      %p158 = scmp.ne.s32.totalorder %s144, %s145
      %p159 = scmp.eq.s32.totalorder %s32, 1
      %p160 = por %p158, %p159
      %p162 = scmp.ne.s32.totalorder %s145, %s161
      %p163 = scmp.eq.s32.totalorder %s32, 0
      %p164 = por %p162, %p163
      %s166 = sadd.s32 %s165, 1
      %p169 = scmp.eq.s32.totalorder %s26, 1
      %p170 = scmp.ne.s32.totalorder %s165, %s167
      %p171 = scmp.eq.s32.totalorder %s26, 0
      %p172 = por %p170, %p171
      %p173 = scmp.ne.s32.totalorder %s165, %s167
      %p174 = scmp.eq.s32.totalorder %s31, 1
      %p175 = por %p173, %p174
      %p176 = scmp.ne.s32.totalorder %s167, %s168
      %p177 = scmp.eq.s32.totalorder %s31, 0
      %p178 = por %p176, %p177
      %p179 = scmp.ne.s32.totalorder %s167, %s168
      %p180 = scmp.eq.s32.totalorder %s32, 1
      %p181 = por %p179, %p180
      %p183 = scmp.ne.s32.totalorder %s168, %s182
      %p184 = scmp.eq.s32.totalorder %s32, 0
      %p185 = por %p183, %p184
      %s187 = sadd.s32 %s186, 1
      %p190 = scmp.eq.s32.totalorder %s26, 1
      %p191 = scmp.ne.s32.totalorder %s186, %s188
      %p192 = scmp.eq.s32.totalorder %s26, 0
      %p193 = por %p191, %p192
      %p194 = scmp.ne.s32.totalorder %s186, %s188
      %p195 = scmp.eq.s32.totalorder %s31, 1
      %p196 = por %p194, %p195
      %p197 = scmp.ne.s32.totalorder %s188, %s189
      %p198 = scmp.eq.s32.totalorder %s31, 0
      %p199 = por %p197, %p198
      %p200 = scmp.ne.s32.totalorder %s188, %s189
      %p201 = scmp.eq.s32.totalorder %s32, 1
      %p202 = por %p200, %p201
      %p204 = scmp.ne.s32.totalorder %s189, %s203
      %p205 = scmp.eq.s32.totalorder %s32, 0
      %p206 = por %p204, %p205
      %s208 = sadd.s32 %s207, 1
      %p211 = scmp.eq.s32.totalorder %s26, 1
      %p212 = scmp.ne.s32.totalorder %s207, %s209
      %p213 = scmp.eq.s32.totalorder %s26, 0
      %p214 = por %p212, %p213
      %p215 = scmp.ne.s32.totalorder %s207, %s209
      %p216 = scmp.eq.s32.totalorder %s31, 1
      %p217 = por %p215, %p216
      %p218 = scmp.ne.s32.totalorder %s209, %s210
      %p219 = scmp.eq.s32.totalorder %s31, 0
      %p220 = por %p218, %p219
      %p221 = scmp.ne.s32.totalorder %s209, %s210
      %p222 = scmp.eq.s32.totalorder %s32, 1
      %p223 = por %p221, %p222
      %p225 = scmp.ne.s32.totalorder %s210, %s224
      %p226 = scmp.eq.s32.totalorder %s32, 0
      %p227 = por %p225, %p226
      %s229 = sadd.s32 %s228, 1
      %p232 = scmp.eq.s32.totalorder %s26, 1
      %p233 = scmp.ne.s32.totalorder %s228, %s230
      %p234 = scmp.eq.s32.totalorder %s26, 0
      %p235 = por %p233, %p234
      %p236 = scmp.ne.s32.totalorder %s228, %s230
      %p237 = scmp.eq.s32.totalorder %s31, 1
      %p238 = por %p236, %p237
      %p239 = scmp.ne.s32.totalorder %s230, %s231
      %p240 = scmp.eq.s32.totalorder %s31, 0
      %p241 = por %p239, %p240
      %p242 = scmp.ne.s32.totalorder %s230, %s231
      %p243 = scmp.eq.s32.totalorder %s32, 1
      %p244 = por %p242, %p243
      %p246 = scmp.ne.s32.totalorder %s231, %s245
      %p247 = scmp.eq.s32.totalorder %s32, 0
      %p248 = por %p246, %p247
      %s250 = sadd.s32 %s249, 1
      %p253 = scmp.eq.s32.totalorder %s26, 1
      %p254 = scmp.ne.s32.totalorder %s249, %s251
      %p255 = scmp.eq.s32.totalorder %s26, 0
      %p256 = por %p254, %p255
      %p257 = scmp.ne.s32.totalorder %s249, %s251
      %p258 = scmp.eq.s32.totalorder %s31, 1
      %p259 = por %p257, %p258
      %p260 = scmp.ne.s32.totalorder %s251, %s252
      %p261 = scmp.eq.s32.totalorder %s31, 0
      %p262 = por %p260, %p261
      %p263 = scmp.ne.s32.totalorder %s251, %s252
      %p264 = scmp.eq.s32.totalorder %s32, 1
      %p265 = por %p263, %p264
      %p267 = scmp.ne.s32.totalorder %s252, %s266
      %p268 = scmp.eq.s32.totalorder %s32, 0
      %p269 = por %p267, %p268
      %s271 = sadd.s32 %s270, 1
      %p274 = scmp.eq.s32.totalorder %s26, 1
      %p275 = scmp.ne.s32.totalorder %s270, %s272
      %p276 = scmp.eq.s32.totalorder %s26, 0
      %p277 = por %p275, %p276
      %p278 = scmp.ne.s32.totalorder %s270, %s272
      %p279 = scmp.eq.s32.totalorder %s31, 1
      %p280 = por %p278, %p279
      %p281 = scmp.ne.s32.totalorder %s272, %s273
      %p282 = scmp.eq.s32.totalorder %s31, 0
      %p283 = por %p281, %p282
      %p284 = scmp.ne.s32.totalorder %s272, %s273
      %p285 = scmp.eq.s32.totalorder %s32, 1
      %p286 = por %p284, %p285
      %p288 = scmp.ne.s32.totalorder %s273, %s287
      %p289 = scmp.eq.s32.totalorder %s32, 0
      %p290 = por %p288, %p289
      %s292 = sadd.s32 %s291, 1
      %p295 = scmp.eq.s32.totalorder %s26, 1
      %p296 = scmp.ne.s32.totalorder %s291, %s293
      %p297 = scmp.eq.s32.totalorder %s26, 0
      %p298 = por %p296, %p297
      %p299 = scmp.ne.s32.totalorder %s291, %s293
      %p300 = scmp.eq.s32.totalorder %s31, 1
      %p301 = por %p299, %p300
      %p302 = scmp.ne.s32.totalorder %s293, %s294
      %p303 = scmp.eq.s32.totalorder %s31, 0
      %p304 = por %p302, %p303
      %p305 = scmp.ne.s32.totalorder %s293, %s294
      %p306 = scmp.eq.s32.totalorder %s32, 1
      %p307 = por %p305, %p306
      %p309 = scmp.ne.s32.totalorder %s294, %s308
      %p310 = scmp.eq.s32.totalorder %s32, 0
      %p311 = por %p309, %p310
      %s313 = sadd.s32 %s312, 1
      %p316 = scmp.eq.s32.totalorder %s26, 1
      %p317 = scmp.ne.s32.totalorder %s312, %s314
      %p318 = scmp.eq.s32.totalorder %s26, 0
      %p319 = por %p317, %p318
      %p320 = scmp.ne.s32.totalorder %s312, %s314
      %p321 = scmp.eq.s32.totalorder %s31, 1
      %p322 = por %p320, %p321
      %p323 = scmp.ne.s32.totalorder %s314, %s315
      %p324 = scmp.eq.s32.totalorder %s31, 0
      %p325 = por %p323, %p324
      %p326 = scmp.ne.s32.totalorder %s314, %s315
      %p327 = scmp.eq.s32.totalorder %s32, 1
      %p328 = por %p326, %p327
      %p330 = scmp.ne.s32.totalorder %s315, %s329
      %p331 = scmp.eq.s32.totalorder %s32, 0
      %p332 = por %p330, %p331
      %s333 = ssub.s32 %s33, %s52
      %s334 = ssub.s32 %s34, %s48
      %s335 = sor.u32 %s333, %s334
      %p336 = scmp.eq.s32.totalorder %s335, 0
      %s338 = sadd.s32 %s337, 1
      %s339 = scalar_select %p336, %s337, %s338
      %p342 = pneg %p336
      %p343 = scmp.eq.s32.totalorder %s26, 1
      %p344 = por %p342, %p343
      %p345 = scmp.ne.s32.totalorder %s337, %s340
      %p346 = scmp.eq.s32.totalorder %s26, 0
      %p347 = por %p345, %p346
      %p348 = scmp.ne.s32.totalorder %s337, %s340
      %p349 = scmp.eq.s32.totalorder %s31, 1
      %p350 = por %p348, %p349
      %p351 = scmp.ne.s32.totalorder %s340, %s341
      %p352 = scmp.eq.s32.totalorder %s31, 0
      %p353 = por %p351, %p352
      %p354 = scmp.ne.s32.totalorder %s340, %s341
      %p355 = scmp.eq.s32.totalorder %s32, 1
      %p356 = por %p354, %p355
      %p358 = scmp.ne.s32.totalorder %s341, %s357
      %p359 = scmp.eq.s32.totalorder %s32, 0
      %p360 = por %p358, %p359
      %p361 = scmp.le.s32.totalorder 1, %s26
      %p362 = scmp.lt.s32.totalorder %s26, 3
      %p363 = pnand %p361, %p362
      %p364 = pneg %p363
      // Predicated region
      $region9: #{tpu_custom_call.1} parent=5 // pred_check
        _
      $region10: #{tpu_custom_call.1} parent=5 // pred_check_branch
        %366 = sbr.rel (%p363) target = $region12
      $region11: #{tpu_custom_call.1} parent=5 // pred_region
        %s367 = ssub.s32 %s26, 1
        // Predicated region
        $region13: #{tpu_custom_call.1} parent=11 // pred_check
          %p368 = pneg %p178
        $region14: #{tpu_custom_call.1} parent=11 // pred_check_branch
          %370 = sbr.rel (%p368) target = $region16
        $region15: #{tpu_custom_call.1} parent=11 // pred_region
          %s372 = ssub.s32 256, 256
          %373 = vsyncadd [#allocation9], %s372
          %s374 = sshll.u32 [#allocation8], 4
          %s375 = int_to_ptr.vmem [resolvable:$true] %s374
          %380 = dma.hbm_to_vmem [thread:$0]  %s4, 256, %s375, [#allocation9], 64, 64, 4
        $region16: #{tpu_custom_call.1} parent=11 // pred_fallthru
          _
        // Predicated region
        $region17: #{tpu_custom_call.1} parent=11 // pred_check
          %p381 = pneg %p199
        $region18: #{tpu_custom_call.1} parent=11 // pred_check_branch
          %383 = sbr.rel (%p381) target = $region20
        $region19: #{tpu_custom_call.1} parent=11 // pred_region
          _
        $region20: #{tpu_custom_call.1} parent=11 // pred_fallthru
          _
        // Predicated region
        $region21: #{tpu_custom_call.1} parent=11 // pred_check
          %p384 = pneg %p220
        $region22: #{tpu_custom_call.1} parent=11 // pred_check_branch
          %386 = sbr.rel (%p384) target = $region24
        $region23: #{tpu_custom_call.1} parent=11 // pred_region
          _
        $region24: #{tpu_custom_call.1} parent=11 // pred_fallthru
          _
        // Predicated region
        $region25: #{tpu_custom_call.1} parent=11 // pred_check
          %p387 = pneg %p241
        $region26: #{tpu_custom_call.1} parent=11 // pred_check_branch
          %389 = sbr.rel (%p387) target = $region28
        $region27: #{tpu_custom_call.1} parent=11 // pred_region
          %s391 = ssub.s32 16, 16
          %392 = vsyncadd [#allocation9], %s391
          %s394 = sshll.u32 [#allocation10], 4
          %s395 = int_to_ptr.vmem [resolvable:$true] %s394
          %397 = dma.hbm_to_vmem [thread:$0]  %s7, 16, %s395, [#allocation9]
        $region28: #{tpu_custom_call.1} parent=11 // pred_fallthru
          _
        // Predicated region
        $region29: #{tpu_custom_call.1} parent=11 // pred_check
          %p398 = pneg %p262
        $region30: #{tpu_custom_call.1} parent=11 // pred_check_branch
          %400 = sbr.rel (%p398) target = $region32
        $region31: #{tpu_custom_call.1} parent=11 // pred_region
          _
        $region32: #{tpu_custom_call.1} parent=11 // pred_fallthru
          _
        // Predicated region
        $region33: #{tpu_custom_call.1} parent=11 // pred_check
          %p401 = pneg %p283
        $region34: #{tpu_custom_call.1} parent=11 // pred_check_branch
          %403 = sbr.rel (%p401) target = $region36
        $region35: #{tpu_custom_call.1} parent=11 // pred_region
          %s405 = ssub.s32 16, 16
          %406 = vsyncadd [#allocation12], %s405
          %s408 = sshll.u32 [#allocation11], 4
          %s409 = int_to_ptr.vmem [resolvable:$true] %s408
          %411 = dma.hbm_to_vmem [thread:$0]  %s9, 16, %s409, [#allocation12]
        $region36: #{tpu_custom_call.1} parent=11 // pred_fallthru
          _
        // Predicated region
        $region37: #{tpu_custom_call.1} parent=11 // pred_check
          %p412 = pneg %p304
        $region38: #{tpu_custom_call.1} parent=11 // pred_check_branch
          %414 = sbr.rel (%p412) target = $region40
        $region39: #{tpu_custom_call.1} parent=11 // pred_region
          _
        $region40: #{tpu_custom_call.1} parent=11 // pred_fallthru
          _
        // Predicated region
        $region41: #{tpu_custom_call.1} parent=11 // pred_check
          %p415 = pneg %p325
        $region42: #{tpu_custom_call.1} parent=11 // pred_check_branch
          %417 = sbr.rel (%p415) target = $region44
        $region43: #{tpu_custom_call.1} parent=11 // pred_region
          _
        $region44: #{tpu_custom_call.1} parent=11 // pred_fallthru
          _
      $region12: #{tpu_custom_call.1} parent=5 // pred_fallthru
        _
      %p418 = scmp.lt.s32.totalorder %s26, 2
      // Predicated region
      $region45: #{tpu_custom_call.1} parent=5 // pred_check
        %p419 = pneg %p418
      $region46: #{tpu_custom_call.1} parent=5 // pred_check_branch
        %421 = sbr.rel (%p419) target = $region48
      $region47: #{tpu_custom_call.1} parent=5 // pred_region
        // Predicated region
        $region49: #{tpu_custom_call.1} parent=47 // pred_check
          %p422 = pneg %p67
        $region50: #{tpu_custom_call.1} parent=47 // pred_check_branch
          %424 = sbr.rel (%p422) target = $region52
        $region51: #{tpu_custom_call.1} parent=47 // pred_region
          %p425 = scmp.lt.s32.totalorder %s33, 1
          %s426 = scalar_select %p425, %s33, 1
          %p427 = scmp.lt.s32.totalorder %s34, 0
          %s428 = scalar_select %p427, %s34, 0
          %s429 = sadd.s32 %s428, %s426
          %s430 = smul.addr %s429, 8
          %s431 = scalar_lea.vmem %s0, %s430
        $region52: #{tpu_custom_call.1} parent=47 // pred_fallthru
          _
        // Predicated region
        $region53: #{tpu_custom_call.1} parent=47 // pred_check
          %p432 = pneg %p95
        $region54: #{tpu_custom_call.1} parent=47 // pred_check_branch
          %434 = sbr.rel (%p432) target = $region56
        $region55: #{tpu_custom_call.1} parent=47 // pred_region
          %p435 = scmp.lt.s32.totalorder %s33, 1
          %s436 = scalar_select %p435, %s33, 1
          %p437 = scmp.lt.s32.totalorder %s34, 0
          %s438 = scalar_select %p437, %s34, 0
          %s439 = smul.addr %s436, 4
          %s440 = sadd.s32 %s438, %s439
          %s441 = smul.addr %s440, 4
          %s442 = scalar_lea.vmem %s1, %s441
        $region56: #{tpu_custom_call.1} parent=47 // pred_fallthru
          _
        // Predicated region
        $region57: #{tpu_custom_call.1} parent=47 // pred_check
          %p443 = pneg %p123
        $region58: #{tpu_custom_call.1} parent=47 // pred_check_branch
          %445 = sbr.rel (%p443) target = $region60
        $region59: #{tpu_custom_call.1} parent=47 // pred_region
          %p446 = scmp.lt.s32.totalorder %s33, 1
          %s447 = scalar_select %p446, %s33, 1
          %p448 = scmp.lt.s32.totalorder %s35, 0
          %s449 = scalar_select %p448, %s35, 0
          %s450 = smul.addr %s447, 4
          %s451 = sadd.s32 %s449, %s450
          %s452 = smul.addr %s451, 4
          %s453 = scalar_lea.vmem %s2, %s452
        $region60: #{tpu_custom_call.1} parent=47 // pred_fallthru
          _
        // Predicated region
        $region61: #{tpu_custom_call.1} parent=47 // pred_check
          %p454 = pneg %p151
        $region62: #{tpu_custom_call.1} parent=47 // pred_check_branch
          %456 = sbr.rel (%p454) target = $region64
        $region63: #{tpu_custom_call.1} parent=47 // pred_region
          %s457 = sand.u32 %s141, 1
          %s458 = scalar_lea.sflag [#allocation6], %s457
          %s459 = sand.u32 %s141, 1
          %s460 = smul.addr %s459, 16
          %s461 = scalar_lea.vmem [#allocation5], %s460
          %s463 = ssub.s32 256, 256
          %464 = vsyncadd %s458, %s463
          %s465 = smul.addr %s33, 4
          %s466 = sadd.s32 %s35, %s465
          %s467 = smul.addr %s466, 64
          %s468 = scalar_lea.hbm %s3, %s467
          %s469 = sshll.u32 %s461, 4
          %s470 = int_to_ptr.vmem [resolvable:$true] %s469
          %475 = dma.hbm_to_vmem [thread:$0]  %s468, 256, %s470, %s458, 64, 64, 4
        $region64: #{tpu_custom_call.1} parent=47 // pred_fallthru
          _
      $region48: #{tpu_custom_call.1} parent=5 // pred_fallthru
        _
      %p476 = scmp.le.s32.totalorder 1, %s26
      %p477 = scmp.lt.s32.totalorder %s26, 3
      %p478 = pnand %p476, %p477
      %p479 = pneg %p478
      // Predicated region
      $region65: #{tpu_custom_call.1} parent=5 // pred_check
        _
      $region66: #{tpu_custom_call.1} parent=5 // pred_check_branch
        %481 = sbr.rel (%p478) target = $region68
      $region67: #{tpu_custom_call.1} parent=5 // pred_region
        %s482 = ssub.s32 %s26, 1
        %s483 = sand.u32 %s144, 1
        %s484 = scalar_lea.sflag [#allocation6], %s483
        %s485 = sand.u32 %s144, 1
        %s486 = smul.addr %s485, 16
        %s487 = scalar_lea.vmem [#allocation5], %s486
        // Predicated region
        $region69: #{tpu_custom_call.1} parent=67 // pred_check
          %p488 = pneg %p157
        $region70: #{tpu_custom_call.1} parent=67 // pred_check_branch
          %490 = sbr.rel (%p488) target = $region72
        $region71: #{tpu_custom_call.1} parent=67 // pred_region
          %491 = dma.done %s484, 256
        $region72: #{tpu_custom_call.1} parent=67 // pred_fallthru
          _
        // Predicated region
        $region73: #{tpu_custom_call.1} parent=67 // pred_check
          %p492 = pneg %p178
        $region74: #{tpu_custom_call.1} parent=67 // pred_check_branch
          %494 = sbr.rel (%p492) target = $region76
        $region75: #{tpu_custom_call.1} parent=67 // pred_region
          %495 = dma.done [#allocation9], 256
        $region76: #{tpu_custom_call.1} parent=67 // pred_fallthru
          _
        // Predicated region
        $region77: #{tpu_custom_call.1} parent=67 // pred_check
          %p496 = pneg %p241
        $region78: #{tpu_custom_call.1} parent=67 // pred_check_branch
          %498 = sbr.rel (%p496) target = $region80
        $region79: #{tpu_custom_call.1} parent=67 // pred_region
          %499 = dma.done [#allocation9], 16
        $region80: #{tpu_custom_call.1} parent=67 // pred_fallthru
          _
        // Predicated region
        $region81: #{tpu_custom_call.1} parent=67 // pred_check
          %p500 = pneg %p283
        $region82: #{tpu_custom_call.1} parent=67 // pred_check_branch
          %502 = sbr.rel (%p500) target = $region84
        $region83: #{tpu_custom_call.1} parent=67 // pred_region
          %503 = dma.done [#allocation12], 16
        $region84: #{tpu_custom_call.1} parent=67 // pred_fallthru
          _
        %p504 = scmp.lt.s32.totalorder %s36, 1
        %s505 = scalar_select %p504, %s36, 1
        %p506 = scmp.lt.s32.totalorder %s37, 0
        %s507 = scalar_select %p506, %s37, 0
        %s508 = sadd.s32 %s507, %s505
        %s509 = smul.addr %s508, 8
        %s510 = scalar_lea.vmem %s0, %s509
        %p511 = pneg %p73
        %p512 = pneg %p70
        %p513 = scmp.lt.s32.totalorder %s36, 1
        %s514 = scalar_select %p513, %s36, 1
        %p515 = scmp.lt.s32.totalorder %s37, 0
        %s516 = scalar_select %p515, %s37, 0
        %s517 = smul.addr %s514, 4
        %s518 = sadd.s32 %s516, %s517
        %s519 = smul.addr %s518, 4
        %s520 = scalar_lea.vmem %s1, %s519
        %p521 = pneg %p101
        %p522 = pneg %p98
        %p523 = scmp.lt.s32.totalorder %s36, 1
        %s524 = scalar_select %p523, %s36, 1
        %p525 = scmp.lt.s32.totalorder %s38, 0
        %s526 = scalar_select %p525, %s38, 0
        %s527 = smul.addr %s524, 4
        %s528 = sadd.s32 %s526, %s527
        %s529 = smul.addr %s528, 4
        %s530 = scalar_lea.vmem %s2, %s529
        %p531 = pneg %p129
        %p532 = pneg %p126
        %s533 = sand.u32 %s144, 1
        %s534 = scalar_lea.sflag [#allocation6], %s533
        %s535 = sand.u32 %s144, 1
        %s536 = smul.addr %s535, 16
        %s537 = scalar_lea.vmem [#allocation5], %s536
        %p538 = pneg %p157
        %p539 = pneg %p154
        %p540 = pneg %p178
        %p541 = pneg %p175
        %p542 = pneg %p199
        %p543 = pneg %p196
        %p544 = pneg %p220
        %p545 = pneg %p217
        %p546 = pneg %p241
        %p547 = pneg %p238
        %p548 = pneg %p262
        %p549 = pneg %p259
        %p550 = pneg %p283
        %p551 = pneg %p280
        %p552 = pneg %p304
        %p553 = pneg %p301
        %p554 = pneg %p325
        %p555 = pneg %p322
        %p556 = pneg %p353
        %p557 = pneg %p350
        %s558 = sand.u32 %s340, 1
        %s559 = scalar_lea.sflag [#allocation7], %s558
        %s560 = sand.u32 %s340, 1
        %s561 = smul.addr %s560, 8
        %s562 = scalar_lea.vmem [#allocation13], %s561
        %p563 = scmp.lt.s32.totalorder %s36, 1
        %s564 = scalar_select %p563, %s36, 1
        %p565 = scmp.lt.s32.totalorder %s37, 0
        %s566 = scalar_select %p565, %s37, 0
        %s567 = sadd.s32 %s566, %s564
        %s568 = smul.addr %s567, 8
        %s569 = scalar_lea.vmem %s0, %s568
        %p570 = scmp.lt.s32.totalorder %s36, 1
        %s571 = scalar_select %p570, %s36, 1
        %p572 = scmp.lt.s32.totalorder %s37, 0
        %s573 = scalar_select %p572, %s37, 0
        %s574 = smul.addr %s571, 4
        %s575 = sadd.s32 %s573, %s574
        %s576 = smul.addr %s575, 4
        %s577 = scalar_lea.vmem %s1, %s576
        %p578 = scmp.lt.s32.totalorder %s36, 1
        %s579 = scalar_select %p578, %s36, 1
        %p580 = scmp.lt.s32.totalorder %s38, 0
        %s581 = scalar_select %p580, %s38, 0
        %s582 = smul.addr %s579, 4
        %s583 = sadd.s32 %s581, %s582
        %s584 = smul.addr %s583, 4
        %s585 = scalar_lea.vmem %s2, %s584
        %p587 = scmp.eq.s32.totalorder %s38, 0
        // Predicated region
        $region85: #{tpu_custom_call.1} parent=67 // pred_check
          %p588 = pneg %p587
        $region86: #{tpu_custom_call.1} parent=67 // pred_check_branch
          %590 = sbr.rel (%p588) target = $region88
        $region87: #{tpu_custom_call.1} parent=67 // pred_region
          %vm591 = vcmask 7168
          %592 = vst.msk [vmem:[#allocation2] sm:$0xff] %vm591, -1e+30
          %593 = vst.msk [vmem:[#allocation2 + $0x8] sm:$0xff] %vm591, -1e+30
          %594 = vst.msk [vmem:[#allocation2 + $0x10] sm:$0xff] %vm591, -1e+30
          %595 = vst.msk [vmem:[#allocation2 + $0x18] sm:$0xff] %vm591, -1e+30
          %596 = vst.msk [vmem:[#allocation3] sm:$0xff] %vm591, 0.0
          %597 = vst.msk [vmem:[#allocation3 + $0x8] sm:$0xff] %vm591, 0.0
          %598 = vst.msk [vmem:[#allocation3 + $0x10] sm:$0xff] %vm591, 0.0
          %599 = vst.msk [vmem:[#allocation3 + $0x18] sm:$0xff] %vm591, 0.0
          %vm600 = vcmask 64512
          %601 = vst.msk [vmem:[#allocation4] sm:$0xff] %vm600, 0.0
          %602 = vst.msk [vmem:[#allocation4 + $0x8] sm:$0xff] %vm600, 0.0
          %603 = vst.msk [vmem:[#allocation4 + $0x10] sm:$0xff] %vm600, 0.0
          %604 = vst.msk [vmem:[#allocation4 + $0x18] sm:$0xff] %vm600, 0.0
        $region88: #{tpu_custom_call.1} parent=67 // pred_fallthru
          _
        %v605 = vld [vmem:[%s577] sm:$0xf]
        %v606 = vld [vmem:[%s577 + $0x4] sm:$0xf]
        %v607 = vld [vmem:[%s577 + $0x8] sm:$0xf]
        %v608 = vld [vmem:[%s577 + $0xc] sm:$0xf]
        %v609 = vld [vmem:[%s585] sm:$0xf]
        %v610 = vld [vmem:[%s585 + $0x4] sm:$0xf]
        %v611 = vld [vmem:[%s585 + $0x8] sm:$0xf]
        %v612 = vld [vmem:[%s585 + $0xc] sm:$0xf]
        %v613 = vld [vmem:[%s487] sm:$0xf]
        %v614 = vld [vmem:[%s487 + $0x4] sm:$0xf]
        %v615 = vld [vmem:[%s487 + $0x8] sm:$0xf]
        %v616 = vld [vmem:[%s487 + $0xc] sm:$0xf]
        %vm617 = vcmask 64512
        %v619 = vsel %vm617, %v605, 0
        %v622 = vsel %vm617, %v609, 0
        %624 = vmatprep.subr.bf16.mxu0 0
        %625 = vmatpush1.bf16.xpose.msra.mxu0 %v622
        %626 = vmatprep.subr.bf16.mxu0 0
        %627 = vmatpush1.bf16.xpose.msra.mxu0 0
        %628 = vmatprep.subr.bf16.mxu0 0
        %629 = vmatpush1.bf16.xpose.msra.mxu0 0
        %630 = vmatprep.subr.bf16.mxu0 0
        %631 = vmatpush1.bf16.xpose.msra.mxu0 0
        %632 = vmatprep.subr.bf16.mxu0 0
        %633 = vmatpush1.bf16.xpose.msra.mxu0 0
        %634 = vmatprep.subr.bf16.mxu0 0
        %635 = vmatpush1.bf16.xpose.msra.mxu0 0
        %636 = vmatprep.subr.bf16.mxu0 0
        %637 = vmatpush1.bf16.xpose.msra.mxu0 0
        %638 = vmatprep.subr.bf16.mxu0 0
        %639 = vmatpush1.bf16.xpose.msra.mxu0 0
        %640 = vmatprep.subr.bf16.mxu0 0
        %641 = vmatpush1.bf16.xpose.msra.mxu0 0
        %642 = vmatprep.subr.bf16.mxu0 0
        %643 = vmatpush1.bf16.xpose.msra.mxu0 0
        %644 = vmatprep.subr.bf16.mxu0 0
        %645 = vmatpush1.bf16.xpose.msra.mxu0 0
        %646 = vmatprep.subr.bf16.mxu0 0
        %647 = vmatpush1.bf16.xpose.msra.mxu0 0
        %648 = vmatprep.subr.bf16.mxu0 0
        %649 = vmatpush1.bf16.xpose.msra.mxu0 0
        %650 = vmatprep.subr.bf16.mxu0 0
        %651 = vmatpush1.bf16.xpose.msra.mxu0 0
        %652 = vmatprep.subr.bf16.mxu0 0
        %653 = vmatpush1.bf16.xpose.msra.mxu0 0
        %654 = vmatprep.subr.bf16.mxu0 0
        %655 = vmatpush1.bf16.xpose.msra.mxu0 0
        %656 = vmatprep.mubr.bf16.mxu0 0
        %657 = vmatmul.mubr.bf16.gmra.mrb[0].mxu0 %v619
        %v658 = vpop.f32.mrb[0].mxu0
        %v659 = vadd.f32 0.0, %v658
        %v660 = vpop.f32.mrb[0].mxu0
        %v661 = vpop.f32.mrb[0].mxu0
        %v662 = vpop.f32.mrb[0].mxu0
        %663 = vdwg.mxu0
        %v665 = vsel %vm617, %v606, 0
        %v668 = vsel %vm617, %v610, 0
        %670 = vmatprep.subr.bf16.mxu0 0
        %671 = vmatpush1.bf16.xpose.msra.mxu0 %v668
        %672 = vmatprep.subr.bf16.mxu0 0
        %673 = vmatpush1.bf16.xpose.msra.mxu0 0
        %674 = vmatprep.subr.bf16.mxu0 0
        %675 = vmatpush1.bf16.xpose.msra.mxu0 0
        %676 = vmatprep.subr.bf16.mxu0 0
        %677 = vmatpush1.bf16.xpose.msra.mxu0 0
        %678 = vmatprep.subr.bf16.mxu0 0
        %679 = vmatpush1.bf16.xpose.msra.mxu0 0
        %680 = vmatprep.subr.bf16.mxu0 0
        %681 = vmatpush1.bf16.xpose.msra.mxu0 0
        %682 = vmatprep.subr.bf16.mxu0 0
        %683 = vmatpush1.bf16.xpose.msra.mxu0 0
        %684 = vmatprep.subr.bf16.mxu0 0
        %685 = vmatpush1.bf16.xpose.msra.mxu0 0
        %686 = vmatprep.subr.bf16.mxu0 0
        %687 = vmatpush1.bf16.xpose.msra.mxu0 0
        %688 = vmatprep.subr.bf16.mxu0 0
        %689 = vmatpush1.bf16.xpose.msra.mxu0 0
        %690 = vmatprep.subr.bf16.mxu0 0
        %691 = vmatpush1.bf16.xpose.msra.mxu0 0
        %692 = vmatprep.subr.bf16.mxu0 0
        %693 = vmatpush1.bf16.xpose.msra.mxu0 0
        %694 = vmatprep.subr.bf16.mxu0 0
        %695 = vmatpush1.bf16.xpose.msra.mxu0 0
        %696 = vmatprep.subr.bf16.mxu0 0
        %697 = vmatpush1.bf16.xpose.msra.mxu0 0
        %698 = vmatprep.subr.bf16.mxu0 0
        %699 = vmatpush1.bf16.xpose.msra.mxu0 0
        %700 = vmatprep.subr.bf16.mxu0 0
        %701 = vmatpush1.bf16.xpose.msra.mxu0 0
        %702 = vmatprep.mubr.bf16.mxu0 0
        %703 = vmatmul.mubr.bf16.gmra.mrb[0].mxu0 %v665
        %v704 = vpop.f32.mrb[0].mxu0
        %v705 = vadd.f32 0.0, %v704
        %v706 = vpop.f32.mrb[0].mxu0
        %v707 = vpop.f32.mrb[0].mxu0
        %v708 = vpop.f32.mrb[0].mxu0
        %709 = vdwg.mxu0
        %v711 = vsel %vm617, %v607, 0
        %v714 = vsel %vm617, %v611, 0
        %716 = vmatprep.subr.bf16.mxu0 0
        %717 = vmatpush1.bf16.xpose.msra.mxu0 %v714
        %718 = vmatprep.subr.bf16.mxu0 0
        %719 = vmatpush1.bf16.xpose.msra.mxu0 0
        %720 = vmatprep.subr.bf16.mxu0 0
        %721 = vmatpush1.bf16.xpose.msra.mxu0 0
        %722 = vmatprep.subr.bf16.mxu0 0
        %723 = vmatpush1.bf16.xpose.msra.mxu0 0
        %724 = vmatprep.subr.bf16.mxu0 0
        %725 = vmatpush1.bf16.xpose.msra.mxu0 0
        %726 = vmatprep.subr.bf16.mxu0 0
        %727 = vmatpush1.bf16.xpose.msra.mxu0 0
        %728 = vmatprep.subr.bf16.mxu0 0
        %729 = vmatpush1.bf16.xpose.msra.mxu0 0
        %730 = vmatprep.subr.bf16.mxu0 0
        %731 = vmatpush1.bf16.xpose.msra.mxu0 0
        %732 = vmatprep.subr.bf16.mxu0 0
        %733 = vmatpush1.bf16.xpose.msra.mxu0 0
        %734 = vmatprep.subr.bf16.mxu0 0
        %735 = vmatpush1.bf16.xpose.msra.mxu0 0
        %736 = vmatprep.subr.bf16.mxu0 0
        %737 = vmatpush1.bf16.xpose.msra.mxu0 0
        %738 = vmatprep.subr.bf16.mxu0 0
        %739 = vmatpush1.bf16.xpose.msra.mxu0 0
        %740 = vmatprep.subr.bf16.mxu0 0
        %741 = vmatpush1.bf16.xpose.msra.mxu0 0
        %742 = vmatprep.subr.bf16.mxu0 0
        %743 = vmatpush1.bf16.xpose.msra.mxu0 0
        %744 = vmatprep.subr.bf16.mxu0 0
        %745 = vmatpush1.bf16.xpose.msra.mxu0 0
        %746 = vmatprep.subr.bf16.mxu0 0
        %747 = vmatpush1.bf16.xpose.msra.mxu0 0
        %748 = vmatprep.mubr.bf16.mxu0 0
        %749 = vmatmul.mubr.bf16.gmra.mrb[0].mxu0 %v711
        %v750 = vpop.f32.mrb[0].mxu0
        %v751 = vadd.f32 0.0, %v750
        %v752 = vpop.f32.mrb[0].mxu0
        %v753 = vpop.f32.mrb[0].mxu0
        %v754 = vpop.f32.mrb[0].mxu0
        %755 = vdwg.mxu0
        %v757 = vsel %vm617, %v608, 0
        %v760 = vsel %vm617, %v612, 0
        %762 = vmatprep.subr.bf16.mxu0 0
        %763 = vmatpush1.bf16.xpose.msra.mxu0 %v760
        %764 = vmatprep.subr.bf16.mxu0 0
        %765 = vmatpush1.bf16.xpose.msra.mxu0 0
        %766 = vmatprep.subr.bf16.mxu0 0
        %767 = vmatpush1.bf16.xpose.msra.mxu0 0
        %768 = vmatprep.subr.bf16.mxu0 0
        %769 = vmatpush1.bf16.xpose.msra.mxu0 0
        %770 = vmatprep.subr.bf16.mxu0 0
        %771 = vmatpush1.bf16.xpose.msra.mxu0 0
        %772 = vmatprep.subr.bf16.mxu0 0
        %773 = vmatpush1.bf16.xpose.msra.mxu0 0
        %774 = vmatprep.subr.bf16.mxu0 0
        %775 = vmatpush1.bf16.xpose.msra.mxu0 0
        %776 = vmatprep.subr.bf16.mxu0 0
        %777 = vmatpush1.bf16.xpose.msra.mxu0 0
        %778 = vmatprep.subr.bf16.mxu0 0
        %779 = vmatpush1.bf16.xpose.msra.mxu0 0
        %780 = vmatprep.subr.bf16.mxu0 0
        %781 = vmatpush1.bf16.xpose.msra.mxu0 0
        %782 = vmatprep.subr.bf16.mxu0 0
        %783 = vmatpush1.bf16.xpose.msra.mxu0 0
        %784 = vmatprep.subr.bf16.mxu0 0
        %785 = vmatpush1.bf16.xpose.msra.mxu0 0
        %786 = vmatprep.subr.bf16.mxu0 0
        %787 = vmatpush1.bf16.xpose.msra.mxu0 0
        %788 = vmatprep.subr.bf16.mxu0 0
        %789 = vmatpush1.bf16.xpose.msra.mxu0 0
        %790 = vmatprep.subr.bf16.mxu0 0
        %791 = vmatpush1.bf16.xpose.msra.mxu0 0
        %792 = vmatprep.subr.bf16.mxu0 0
        %793 = vmatpush1.bf16.xpose.msra.mxu0 0
        %794 = vmatprep.mubr.bf16.mxu0 0
        %795 = vmatmul.mubr.bf16.gmra.mrb[0].mxu0 %v757
        %v796 = vpop.f32.mrb[0].mxu0
        %v797 = vadd.f32 0.0, %v796
        %v798 = vpop.f32.mrb[0].mxu0
        %v799 = vpop.f32.mrb[0].mxu0
        %v800 = vpop.f32.mrb[0].mxu0
        %801 = vdwg.mxu0
        %v802 = vld [vmem:[#allocation2] sm:$0xff]
        %v803 = vld [vmem:[#allocation2 + $0x8] sm:$0xff]
        %v804 = vld [vmem:[#allocation2 + $0x10] sm:$0xff]
        %v805 = vld [vmem:[#allocation2 + $0x18] sm:$0xff]
        %v806 = vsel %vm617, %v659, -inf
        %807 = vmax.xlane.f32.xlu0 %v806
        %v808 = vpop.xlane.xlu0 %807
        %v809 = vsel %vm617, %v705, -inf
        %810 = vmax.xlane.f32.xlu0 %v809
        %v811 = vpop.xlane.xlu0 %810
        %v812 = vsel %vm617, %v751, -inf
        %813 = vmax.xlane.f32.xlu0 %v812
        %v814 = vpop.xlane.xlu0 %813
        %v815 = vsel %vm617, %v797, -inf
        %816 = vmax.xlane.f32.xlu0 %v815
        %v817 = vpop.xlane.xlu0 %816
        %v818 = vmax.f32 %v802, %v808
        %v819 = vmax.f32 %v803, %v811
        %v820 = vmax.f32 %v804, %v814
        %v821 = vmax.f32 %v805, %v817
        %v822 = vsub.f32 %v802, %v818
        %v823 = vsub.f32 %v803, %v819
        %v824 = vsub.f32 %v804, %v820
        %v825 = vsub.f32 %v805, %v821
        %v826 = vmul.f32 %v822, 1.442695
        %v827 = vpow.pop %v826
        %v828 = vmul.f32 %v823, 1.442695
        %v829 = vpow.pop %v828
        %v830 = vmul.f32 %v824, 1.442695
        %v831 = vpow.pop %v830
        %v832 = vmul.f32 %v825, 1.442695
        %v833 = vpow.pop %v832
        %835 = vset.pattern.permute.xlu0 0
        %836 = vperm.xlu0 %835, %v818
        %v837 = vpop.permute.xlu0 %836
        %840 = vset.pattern.permute.xlu0 0
        %841 = vperm.xlu0 %840, %v819
        %v842 = vpop.permute.xlu0 %841
        %845 = vset.pattern.permute.xlu0 0
        %846 = vperm.xlu0 %845, %v820
        %v847 = vpop.permute.xlu0 %846
        %850 = vset.pattern.permute.xlu0 0
        %851 = vperm.xlu0 %850, %v821
        %v852 = vpop.permute.xlu0 %851
        %v854 = vsub.f32 %v659, %v837
        %v855 = vsub.f32 %v705, %v842
        %v856 = vsub.f32 %v751, %v847
        %v857 = vsub.f32 %v797, %v852
        %v858 = vmul.f32 %v854, 1.442695
        %v859 = vpow.pop %v858
        %v860 = vmul.f32 %v855, 1.442695
        %v861 = vpow.pop %v860
        %v862 = vmul.f32 %v856, 1.442695
        %v863 = vpow.pop %v862
        %v864 = vmul.f32 %v857, 1.442695
        %v865 = vpow.pop %v864
        %v866 = vld [vmem:[#allocation3] sm:$0xff]
        %v867 = vld [vmem:[#allocation3 + $0x8] sm:$0xff]
        %v868 = vld [vmem:[#allocation3 + $0x10] sm:$0xff]
        %v869 = vld [vmem:[#allocation3 + $0x18] sm:$0xff]
        %v870 = vmul.f32 %v827, %v866
        %v871 = vmul.f32 %v829, %v867
        %v872 = vmul.f32 %v831, %v868
        %v873 = vmul.f32 %v833, %v869
        %v874 = vsel %vm617, %v859, 0.0
        %875 = vadd.xlane.f32.xlu0 %v874
        %v876 = vpop.xlane.xlu0 %875
        %v877 = vsel %vm617, %v861, 0.0
        %878 = vadd.xlane.f32.xlu0 %v877
        %v879 = vpop.xlane.xlu0 %878
        %v880 = vsel %vm617, %v863, 0.0
        %881 = vadd.xlane.f32.xlu0 %v880
        %v882 = vpop.xlane.xlu0 %881
        %v883 = vsel %vm617, %v865, 0.0
        %884 = vadd.xlane.f32.xlu0 %v883
        %v885 = vpop.xlane.xlu0 %884
        %v886 = vadd.f32 %v870, %v876
        %v887 = vadd.f32 %v871, %v879
        %v888 = vadd.f32 %v872, %v882
        %v889 = vadd.f32 %v873, %v885
        %vm890 = vcmask 7168
        %891 = vst.msk [vmem:[#allocation3] sm:$0xff] %vm890, %v886
        %892 = vst.msk [vmem:[#allocation3 + $0x8] sm:$0xff] %vm890, %v887
        %893 = vst.msk [vmem:[#allocation3 + $0x10] sm:$0xff] %vm890, %v888
        %894 = vst.msk [vmem:[#allocation3 + $0x18] sm:$0xff] %vm890, %v889
        %v895 = vpack.c.bf16 %v859, %v859
        %v896 = vpack.c.bf16 %v861, %v861
        %v897 = vpack.c.bf16 %v863, %v863
        %v898 = vpack.c.bf16 %v865, %v865
        %v900 = vsel %vm617, %v895, 0
        %vm902 = vcmask 1043456
        %v904 = vsel %vm902, %v613, 0
        %906 = vmatprep.subr.bf16.mxu0 0
        %907 = vmatpush1.bf16.msra.mxu0 %v904
        %908 = vmatprep.subr.bf16.mxu0 0
        %909 = vmatpush1.bf16.msra.mxu0 0
        %910 = vmatprep.subr.bf16.mxu0 0
        %911 = vmatpush1.bf16.msra.mxu0 0
        %912 = vmatprep.subr.bf16.mxu0 0
        %913 = vmatpush1.bf16.msra.mxu0 0
        %914 = vmatprep.subr.bf16.mxu0 0
        %915 = vmatpush1.bf16.msra.mxu0 0
        %916 = vmatprep.subr.bf16.mxu0 0
        %917 = vmatpush1.bf16.msra.mxu0 0
        %918 = vmatprep.subr.bf16.mxu0 0
        %919 = vmatpush1.bf16.msra.mxu0 0
        %920 = vmatprep.subr.bf16.mxu0 0
        %921 = vmatpush1.bf16.msra.mxu0 0
        %922 = vmatprep.subr.bf16.mxu0 0
        %923 = vmatpush1.bf16.msra.mxu0 0
        %924 = vmatprep.subr.bf16.mxu0 0
        %925 = vmatpush1.bf16.msra.mxu0 0
        %926 = vmatprep.subr.bf16.mxu0 0
        %927 = vmatpush1.bf16.msra.mxu0 0
        %928 = vmatprep.subr.bf16.mxu0 0
        %929 = vmatpush1.bf16.msra.mxu0 0
        %930 = vmatprep.subr.bf16.mxu0 0
        %931 = vmatpush1.bf16.msra.mxu0 0
        %932 = vmatprep.subr.bf16.mxu0 0
        %933 = vmatpush1.bf16.msra.mxu0 0
        %934 = vmatprep.subr.bf16.mxu0 0
        %935 = vmatpush1.bf16.msra.mxu0 0
        %936 = vmatprep.subr.bf16.mxu0 0
        %937 = vmatpush1.bf16.msra.mxu0 0
        %938 = vmatprep.mubr.bf16.mxu0 0
        %939 = vmatmul.mubr.bf16.gmra.mrb[0].mxu0 %v900
        %v940 = vpop.f32.mrb[0].mxu0
        %v941 = vadd.f32 0.0, %v940
        %v942 = vpop.f32.mrb[0].mxu0
        %v943 = vpop.f32.mrb[0].mxu0
        %v944 = vpop.f32.mrb[0].mxu0
        %945 = vdwg.mxu0
        %v947 = vsel %vm617, %v896, 0
        %v950 = vsel %vm902, %v614, 0
        %952 = vmatprep.subr.bf16.mxu0 0
        %953 = vmatpush1.bf16.msra.mxu0 %v950
        %954 = vmatprep.subr.bf16.mxu0 0
        %955 = vmatpush1.bf16.msra.mxu0 0
        %956 = vmatprep.subr.bf16.mxu0 0
        %957 = vmatpush1.bf16.msra.mxu0 0
        %958 = vmatprep.subr.bf16.mxu0 0
        %959 = vmatpush1.bf16.msra.mxu0 0
        %960 = vmatprep.subr.bf16.mxu0 0
        %961 = vmatpush1.bf16.msra.mxu0 0
        %962 = vmatprep.subr.bf16.mxu0 0
        %963 = vmatpush1.bf16.msra.mxu0 0
        %964 = vmatprep.subr.bf16.mxu0 0
        %965 = vmatpush1.bf16.msra.mxu0 0
        %966 = vmatprep.subr.bf16.mxu0 0
        %967 = vmatpush1.bf16.msra.mxu0 0
        %968 = vmatprep.subr.bf16.mxu0 0
        %969 = vmatpush1.bf16.msra.mxu0 0
        %970 = vmatprep.subr.bf16.mxu0 0
        %971 = vmatpush1.bf16.msra.mxu0 0
        %972 = vmatprep.subr.bf16.mxu0 0
        %973 = vmatpush1.bf16.msra.mxu0 0
        %974 = vmatprep.subr.bf16.mxu0 0
        %975 = vmatpush1.bf16.msra.mxu0 0
        %976 = vmatprep.subr.bf16.mxu0 0
        %977 = vmatpush1.bf16.msra.mxu0 0
        %978 = vmatprep.subr.bf16.mxu0 0
        %979 = vmatpush1.bf16.msra.mxu0 0
        %980 = vmatprep.subr.bf16.mxu0 0
        %981 = vmatpush1.bf16.msra.mxu0 0
        %982 = vmatprep.subr.bf16.mxu0 0
        %983 = vmatpush1.bf16.msra.mxu0 0
        %984 = vmatprep.mubr.bf16.mxu0 0
        %985 = vmatmul.mubr.bf16.gmra.mrb[0].mxu0 %v947
        %v986 = vpop.f32.mrb[0].mxu0
        %v987 = vadd.f32 0.0, %v986
        %v988 = vpop.f32.mrb[0].mxu0
        %v989 = vpop.f32.mrb[0].mxu0
        %v990 = vpop.f32.mrb[0].mxu0
        %991 = vdwg.mxu0
        %v993 = vsel %vm617, %v897, 0
        %v996 = vsel %vm902, %v615, 0
        %998 = vmatprep.subr.bf16.mxu0 0
        %999 = vmatpush1.bf16.msra.mxu0 %v996
        %1000 = vmatprep.subr.bf16.mxu0 0
        %1001 = vmatpush1.bf16.msra.mxu0 0
        %1002 = vmatprep.subr.bf16.mxu0 0
        %1003 = vmatpush1.bf16.msra.mxu0 0
        %1004 = vmatprep.subr.bf16.mxu0 0
        %1005 = vmatpush1.bf16.msra.mxu0 0
        %1006 = vmatprep.subr.bf16.mxu0 0
        %1007 = vmatpush1.bf16.msra.mxu0 0
        %1008 = vmatprep.subr.bf16.mxu0 0
        %1009 = vmatpush1.bf16.msra.mxu0 0
        %1010 = vmatprep.subr.bf16.mxu0 0
        %1011 = vmatpush1.bf16.msra.mxu0 0
        %1012 = vmatprep.subr.bf16.mxu0 0
        %1013 = vmatpush1.bf16.msra.mxu0 0
        %1014 = vmatprep.subr.bf16.mxu0 0
        %1015 = vmatpush1.bf16.msra.mxu0 0
        %1016 = vmatprep.subr.bf16.mxu0 0
        %1017 = vmatpush1.bf16.msra.mxu0 0
        %1018 = vmatprep.subr.bf16.mxu0 0
        %1019 = vmatpush1.bf16.msra.mxu0 0
        %1020 = vmatprep.subr.bf16.mxu0 0
        %1021 = vmatpush1.bf16.msra.mxu0 0
        %1022 = vmatprep.subr.bf16.mxu0 0
        %1023 = vmatpush1.bf16.msra.mxu0 0
        %1024 = vmatprep.subr.bf16.mxu0 0
        %1025 = vmatpush1.bf16.msra.mxu0 0
        %1026 = vmatprep.subr.bf16.mxu0 0
        %1027 = vmatpush1.bf16.msra.mxu0 0
        %1028 = vmatprep.subr.bf16.mxu0 0
        %1029 = vmatpush1.bf16.msra.mxu0 0
        %1030 = vmatprep.mubr.bf16.mxu0 0
        %1031 = vmatmul.mubr.bf16.gmra.mrb[0].mxu0 %v993
        %v1032 = vpop.f32.mrb[0].mxu0
        %v1033 = vadd.f32 0.0, %v1032
        %v1034 = vpop.f32.mrb[0].mxu0
        %v1035 = vpop.f32.mrb[0].mxu0
        %v1036 = vpop.f32.mrb[0].mxu0
        %1037 = vdwg.mxu0
        %v1039 = vsel %vm617, %v898, 0
        %v1042 = vsel %vm902, %v616, 0
        %1044 = vmatprep.subr.bf16.mxu0 0
        %1045 = vmatpush1.bf16.msra.mxu0 %v1042
        %1046 = vmatprep.subr.bf16.mxu0 0
        %1047 = vmatpush1.bf16.msra.mxu0 0
        %1048 = vmatprep.subr.bf16.mxu0 0
        %1049 = vmatpush1.bf16.msra.mxu0 0
        %1050 = vmatprep.subr.bf16.mxu0 0
        %1051 = vmatpush1.bf16.msra.mxu0 0
        %1052 = vmatprep.subr.bf16.mxu0 0
        %1053 = vmatpush1.bf16.msra.mxu0 0
        %1054 = vmatprep.subr.bf16.mxu0 0
        %1055 = vmatpush1.bf16.msra.mxu0 0
        %1056 = vmatprep.subr.bf16.mxu0 0
        %1057 = vmatpush1.bf16.msra.mxu0 0
        %1058 = vmatprep.subr.bf16.mxu0 0
        %1059 = vmatpush1.bf16.msra.mxu0 0
        %1060 = vmatprep.subr.bf16.mxu0 0
        %1061 = vmatpush1.bf16.msra.mxu0 0
        %1062 = vmatprep.subr.bf16.mxu0 0
        %1063 = vmatpush1.bf16.msra.mxu0 0
        %1064 = vmatprep.subr.bf16.mxu0 0
        %1065 = vmatpush1.bf16.msra.mxu0 0
        %1066 = vmatprep.subr.bf16.mxu0 0
        %1067 = vmatpush1.bf16.msra.mxu0 0
        %1068 = vmatprep.subr.bf16.mxu0 0
        %1069 = vmatpush1.bf16.msra.mxu0 0
        %1070 = vmatprep.subr.bf16.mxu0 0
        %1071 = vmatpush1.bf16.msra.mxu0 0
        %1072 = vmatprep.subr.bf16.mxu0 0
        %1073 = vmatpush1.bf16.msra.mxu0 0
        %1074 = vmatprep.subr.bf16.mxu0 0
        %1075 = vmatpush1.bf16.msra.mxu0 0
        %1076 = vmatprep.mubr.bf16.mxu0 0
        %1077 = vmatmul.mubr.bf16.gmra.mrb[0].mxu0 %v1039
        %v1078 = vpop.f32.mrb[0].mxu0
        %v1079 = vadd.f32 0.0, %v1078
        %v1080 = vpop.f32.mrb[0].mxu0
        %v1081 = vpop.f32.mrb[0].mxu0
        %v1082 = vpop.f32.mrb[0].mxu0
        %1083 = vdwg.mxu0
        %v1084 = vld [vmem:[#allocation4] sm:$0xff]
        %v1085 = vld [vmem:[#allocation4 + $0x8] sm:$0xff]
        %v1086 = vld [vmem:[#allocation4 + $0x10] sm:$0xff]
        %v1087 = vld [vmem:[#allocation4 + $0x18] sm:$0xff]
        %1089 = vset.pattern.permute.xlu0 0
        %1090 = vperm.xlu0 %1089, %v827
        %v1091 = vpop.permute.xlu0 %1090
        %1094 = vset.pattern.permute.xlu0 0
        %1095 = vperm.xlu0 %1094, %v829
        %v1096 = vpop.permute.xlu0 %1095
        %1099 = vset.pattern.permute.xlu0 0
        %1100 = vperm.xlu0 %1099, %v831
        %v1101 = vpop.permute.xlu0 %1100
        %1104 = vset.pattern.permute.xlu0 0
        %1105 = vperm.xlu0 %1104, %v833
        %v1106 = vpop.permute.xlu0 %1105
        %v1108 = vmul.f32 %v1091, %v1084
        %v1109 = vmul.f32 %v1096, %v1085
        %v1110 = vmul.f32 %v1101, %v1086
        %v1111 = vmul.f32 %v1106, %v1087
        %v1112 = vadd.f32 %v1108, %v941
        %v1113 = vadd.f32 %v1109, %v987
        %v1114 = vadd.f32 %v1110, %v1033
        %v1115 = vadd.f32 %v1111, %v1079
        %1116 = vst.msk [vmem:[#allocation4] sm:$0xff] %vm617, %v1112
        %1117 = vst.msk [vmem:[#allocation4 + $0x8] sm:$0xff] %vm617, %v1113
        %1118 = vst.msk [vmem:[#allocation4 + $0x10] sm:$0xff] %vm617, %v1114
        %1119 = vst.msk [vmem:[#allocation4 + $0x18] sm:$0xff] %vm617, %v1115
        %1120 = vst.msk [vmem:[#allocation2] sm:$0xff] %vm890, %v818
        %1121 = vst.msk [vmem:[#allocation2 + $0x8] sm:$0xff] %vm890, %v819
        %1122 = vst.msk [vmem:[#allocation2 + $0x10] sm:$0xff] %vm890, %v820
        %1123 = vst.msk [vmem:[#allocation2 + $0x18] sm:$0xff] %vm890, %v821
        // Predicated region
        $region89: #{tpu_custom_call.1} parent=67 // pred_check
          %p1124 = pneg %p587
        $region90: #{tpu_custom_call.1} parent=67 // pred_check_branch
          %1126 = sbr.rel (%p1124) target = $region92
        $region91: #{tpu_custom_call.1} parent=67 // pred_region
          %v1127 = vld [vmem:[#allocation4] sm:$0xff]
          %v1128 = vld [vmem:[#allocation4 + $0x8] sm:$0xff]
          %v1129 = vld [vmem:[#allocation4 + $0x10] sm:$0xff]
          %v1130 = vld [vmem:[#allocation4 + $0x18] sm:$0xff]
          %v1131 = vld [vmem:[#allocation3] sm:$0xff]
          %v1132 = vld [vmem:[#allocation3 + $0x8] sm:$0xff]
          %v1133 = vld [vmem:[#allocation3 + $0x10] sm:$0xff]
          %v1134 = vld [vmem:[#allocation3 + $0x18] sm:$0xff]
          %v1135 = vrcp.pop %v1131
          %v1136 = vrcp.pop %v1132
          %v1137 = vrcp.pop %v1133
          %v1138 = vrcp.pop %v1134
          %1140 = vset.pattern.permute.xlu0 0
          %1141 = vperm.xlu0 %1140, %v1135
          %v1142 = vpop.permute.xlu0 %1141
          %1145 = vset.pattern.permute.xlu0 0
          %1146 = vperm.xlu0 %1145, %v1136
          %v1147 = vpop.permute.xlu0 %1146
          %1150 = vset.pattern.permute.xlu0 0
          %1151 = vperm.xlu0 %1150, %v1137
          %v1152 = vpop.permute.xlu0 %1151
          %1155 = vset.pattern.permute.xlu0 0
          %1156 = vperm.xlu0 %1155, %v1138
          %v1157 = vpop.permute.xlu0 %1156
          %v1159 = vmul.f32 %v1127, %v1142
          %v1160 = vmul.f32 %v1128, %v1147
          %v1161 = vmul.f32 %v1129, %v1152
          %v1162 = vmul.f32 %v1130, %v1157
          %v1163 = vpack.c.bf16 %v1159, %v1159
          %v1164 = vpack.c.bf16 %v1160, %v1160
          %v1165 = vpack.c.bf16 %v1161, %v1161
          %v1166 = vpack.c.bf16 %v1162, %v1162
          %v1167 = vld [vmem:[#allocation8] sm:$0xf]
          %s1168 = scalar_lea.vmem [#allocation8], 4
          %v1169 = vld [vmem:[%s1168] sm:$0xf]
          %v1171 = vsel %vm617, %v1164, 0
          %v1174 = vsel %vm902, %v1169, 0
          %1176 = vmatprep.subr.bf16.mxu0 0
          %1177 = vmatpush1.bf16.msra.mxu0 %v1174
          %1178 = vmatprep.subr.bf16.mxu0 0
          %1179 = vmatpush1.bf16.msra.mxu0 0
          %1180 = vmatprep.subr.bf16.mxu0 0
          %1181 = vmatpush1.bf16.msra.mxu0 0
          %1182 = vmatprep.subr.bf16.mxu0 0
          %1183 = vmatpush1.bf16.msra.mxu0 0
          %1184 = vmatprep.subr.bf16.mxu0 0
          %1185 = vmatpush1.bf16.msra.mxu0 0
          %1186 = vmatprep.subr.bf16.mxu0 0
          %1187 = vmatpush1.bf16.msra.mxu0 0
          %1188 = vmatprep.subr.bf16.mxu0 0
          %1189 = vmatpush1.bf16.msra.mxu0 0
          %1190 = vmatprep.subr.bf16.mxu0 0
          %1191 = vmatpush1.bf16.msra.mxu0 0
          %1192 = vmatprep.subr.bf16.mxu0 0
          %1193 = vmatpush1.bf16.msra.mxu0 0
          %1194 = vmatprep.subr.bf16.mxu0 0
          %1195 = vmatpush1.bf16.msra.mxu0 0
          %1196 = vmatprep.subr.bf16.mxu0 0
          %1197 = vmatpush1.bf16.msra.mxu0 0
          %1198 = vmatprep.subr.bf16.mxu0 0
          %1199 = vmatpush1.bf16.msra.mxu0 0
          %1200 = vmatprep.subr.bf16.mxu0 0
          %1201 = vmatpush1.bf16.msra.mxu0 0
          %1202 = vmatprep.subr.bf16.mxu0 0
          %1203 = vmatpush1.bf16.msra.mxu0 0
          %1204 = vmatprep.subr.bf16.mxu0 0
          %1205 = vmatpush1.bf16.msra.mxu0 0
          %1206 = vmatprep.subr.bf16.mxu0 0
          %1207 = vmatpush1.bf16.msra.mxu0 0
          %1208 = vmatprep.mubr.bf16.mxu0 0
          %1209 = vmatmul.mubr.bf16.gmra.mrb[0].mxu0 %v1171
          %v1210 = vpop.f32.mrb[0].mxu0
          %v1211 = vadd.f32 0.0, %v1210
          %v1212 = vpop.f32.mrb[0].mxu0
          %v1213 = vpop.f32.mrb[0].mxu0
          %v1214 = vpop.f32.mrb[0].mxu0
          %1215 = vdwg.mxu0
          %v1217 = vsel %vm617, %v1163, 0
          %v1220 = vsel %vm902, %v1167, 0
          %1222 = vmatprep.subr.bf16.mxu0 0
          %1223 = vmatpush1.bf16.msra.mxu0 %v1220
          %1224 = vmatprep.subr.bf16.mxu0 0
          %1225 = vmatpush1.bf16.msra.mxu0 0
          %1226 = vmatprep.subr.bf16.mxu0 0
          %1227 = vmatpush1.bf16.msra.mxu0 0
          %1228 = vmatprep.subr.bf16.mxu0 0
          %1229 = vmatpush1.bf16.msra.mxu0 0
          %1230 = vmatprep.subr.bf16.mxu0 0
          %1231 = vmatpush1.bf16.msra.mxu0 0
          %1232 = vmatprep.subr.bf16.mxu0 0
          %1233 = vmatpush1.bf16.msra.mxu0 0
          %1234 = vmatprep.subr.bf16.mxu0 0
          %1235 = vmatpush1.bf16.msra.mxu0 0
          %1236 = vmatprep.subr.bf16.mxu0 0
          %1237 = vmatpush1.bf16.msra.mxu0 0
          %1238 = vmatprep.subr.bf16.mxu0 0
          %1239 = vmatpush1.bf16.msra.mxu0 0
          %1240 = vmatprep.subr.bf16.mxu0 0
          %1241 = vmatpush1.bf16.msra.mxu0 0
          %1242 = vmatprep.subr.bf16.mxu0 0
          %1243 = vmatpush1.bf16.msra.mxu0 0
          %1244 = vmatprep.subr.bf16.mxu0 0
          %1245 = vmatpush1.bf16.msra.mxu0 0
          %1246 = vmatprep.subr.bf16.mxu0 0
          %1247 = vmatpush1.bf16.msra.mxu0 0
          %1248 = vmatprep.subr.bf16.mxu0 0
          %1249 = vmatpush1.bf16.msra.mxu0 0
          %1250 = vmatprep.subr.bf16.mxu0 0
          %1251 = vmatpush1.bf16.msra.mxu0 0
          %1252 = vmatprep.subr.bf16.mxu0 0
          %1253 = vmatpush1.bf16.msra.mxu0 0
          %1254 = vmatprep.mubr.bf16.mxu0 0
          %1255 = vmatmul.mubr.bf16.gmra.mrb[0].mxu0 %v1217
          %v1256 = vpop.f32.mrb[0].mxu0
          %v1257 = vadd.f32 %v1211, %v1256
          %v1258 = vpop.f32.mrb[0].mxu0
          %v1259 = vpop.f32.mrb[0].mxu0
          %v1260 = vpop.f32.mrb[0].mxu0
          %1261 = vdwg.mxu0
          %s1262 = scalar_lea.vmem [#allocation8], 8
          %v1263 = vld [vmem:[%s1262] sm:$0xf]
          %v1265 = vsel %vm617, %v1165, 0
          %v1268 = vsel %vm902, %v1263, 0
          %1270 = vmatprep.subr.bf16.mxu0 0
          %1271 = vmatpush1.bf16.msra.mxu0 %v1268
          %1272 = vmatprep.subr.bf16.mxu0 0
          %1273 = vmatpush1.bf16.msra.mxu0 0
          %1274 = vmatprep.subr.bf16.mxu0 0
          %1275 = vmatpush1.bf16.msra.mxu0 0
          %1276 = vmatprep.subr.bf16.mxu0 0
          %1277 = vmatpush1.bf16.msra.mxu0 0
          %1278 = vmatprep.subr.bf16.mxu0 0
          %1279 = vmatpush1.bf16.msra.mxu0 0
          %1280 = vmatprep.subr.bf16.mxu0 0
          %1281 = vmatpush1.bf16.msra.mxu0 0
          %1282 = vmatprep.subr.bf16.mxu0 0
          %1283 = vmatpush1.bf16.msra.mxu0 0
          %1284 = vmatprep.subr.bf16.mxu0 0
          %1285 = vmatpush1.bf16.msra.mxu0 0
          %1286 = vmatprep.subr.bf16.mxu0 0
          %1287 = vmatpush1.bf16.msra.mxu0 0
          %1288 = vmatprep.subr.bf16.mxu0 0
          %1289 = vmatpush1.bf16.msra.mxu0 0
          %1290 = vmatprep.subr.bf16.mxu0 0
          %1291 = vmatpush1.bf16.msra.mxu0 0
          %1292 = vmatprep.subr.bf16.mxu0 0
          %1293 = vmatpush1.bf16.msra.mxu0 0
          %1294 = vmatprep.subr.bf16.mxu0 0
          %1295 = vmatpush1.bf16.msra.mxu0 0
          %1296 = vmatprep.subr.bf16.mxu0 0
          %1297 = vmatpush1.bf16.msra.mxu0 0
          %1298 = vmatprep.subr.bf16.mxu0 0
          %1299 = vmatpush1.bf16.msra.mxu0 0
          %1300 = vmatprep.subr.bf16.mxu0 0
          %1301 = vmatpush1.bf16.msra.mxu0 0
          %1302 = vmatprep.mubr.bf16.mxu0 0
          %1303 = vmatmul.mubr.bf16.gmra.mrb[0].mxu0 %v1265
          %v1304 = vpop.f32.mrb[0].mxu0
          %v1305 = vadd.f32 0.0, %v1304
          %v1306 = vpop.f32.mrb[0].mxu0
          %v1307 = vpop.f32.mrb[0].mxu0
          %v1308 = vpop.f32.mrb[0].mxu0
          %1309 = vdwg.mxu0
          %v1310 = vadd.f32 %v1257, %v1305
          %s1311 = scalar_lea.vmem [#allocation8], 12
          %v1312 = vld [vmem:[%s1311] sm:$0xf]
          %v1314 = vsel %vm617, %v1166, 0
          %v1317 = vsel %vm902, %v1312, 0
          %1319 = vmatprep.subr.bf16.mxu0 0
          %1320 = vmatpush1.bf16.msra.mxu0 %v1317
          %1321 = vmatprep.subr.bf16.mxu0 0
          %1322 = vmatpush1.bf16.msra.mxu0 0
          %1323 = vmatprep.subr.bf16.mxu0 0
          %1324 = vmatpush1.bf16.msra.mxu0 0
          %1325 = vmatprep.subr.bf16.mxu0 0
          %1326 = vmatpush1.bf16.msra.mxu0 0
          %1327 = vmatprep.subr.bf16.mxu0 0
          %1328 = vmatpush1.bf16.msra.mxu0 0
          %1329 = vmatprep.subr.bf16.mxu0 0
          %1330 = vmatpush1.bf16.msra.mxu0 0
          %1331 = vmatprep.subr.bf16.mxu0 0
          %1332 = vmatpush1.bf16.msra.mxu0 0
          %1333 = vmatprep.subr.bf16.mxu0 0
          %1334 = vmatpush1.bf16.msra.mxu0 0
          %1335 = vmatprep.subr.bf16.mxu0 0
          %1336 = vmatpush1.bf16.msra.mxu0 0
          %1337 = vmatprep.subr.bf16.mxu0 0
          %1338 = vmatpush1.bf16.msra.mxu0 0
          %1339 = vmatprep.subr.bf16.mxu0 0
          %1340 = vmatpush1.bf16.msra.mxu0 0
          %1341 = vmatprep.subr.bf16.mxu0 0
          %1342 = vmatpush1.bf16.msra.mxu0 0
          %1343 = vmatprep.subr.bf16.mxu0 0
          %1344 = vmatpush1.bf16.msra.mxu0 0
          %1345 = vmatprep.subr.bf16.mxu0 0
          %1346 = vmatpush1.bf16.msra.mxu0 0
          %1347 = vmatprep.subr.bf16.mxu0 0
          %1348 = vmatpush1.bf16.msra.mxu0 0
          %1349 = vmatprep.subr.bf16.mxu0 0
          %1350 = vmatpush1.bf16.msra.mxu0 0
          %1351 = vmatprep.mubr.bf16.mxu0 0
          %1352 = vmatmul.mubr.bf16.gmra.mrb[0].mxu0 %v1314
          %v1353 = vpop.f32.mrb[0].mxu0
          %v1354 = vadd.f32 0.0, %v1353
          %v1355 = vpop.f32.mrb[0].mxu0
          %v1356 = vpop.f32.mrb[0].mxu0
          %v1357 = vpop.f32.mrb[0].mxu0
          %1358 = vdwg.mxu0
          %v1359 = vadd.f32 %v1310, %v1354
          %v1360 = vld [vmem:[%s569] sm:$0xff]
          %v1361 = vadd.f32 %v1360, %v1359
          %v1362 = vld [vmem:[%s5] sm:$0x1]
          %v1364 = vlaneseq
          %v1365 = vshrl.u32 %v1364, 7
          %v1366 = vsub.s32 0, %v1365
          %v1367 = vrot.slane %v1362, %v1366
          %v1369 = vadd.f32 %v1361, %v1367
          %v1370 = vld [vmem:[%s6] sm:$0x1]
          %v1371 = vld [vmem:[#allocation10] sm:$0x1]
          %vm1372 = vcmask 261120
          %v1373 = vsel %vm1372, %v1369, 0.0
          %1374 = vadd.xlane.f32.xlu0 %v1373
          %v1375 = vpop.xlane.xlu0 %1374
          %v1376 = vrcp.pop 32.0
          %v1377 = vmul.f32 %v1375, %v1376
          %v1378 = vsub.f32 %v1369, %v1377
          %v1379 = vmul.f32 %v1378, %v1378
          %v1380 = vsel %vm1372, %v1379, 0.0
          %1381 = vadd.xlane.f32.xlu0 %v1380
          %v1382 = vpop.xlane.xlu0 %1381
          %v1383 = vmul.f32 %v1382, %v1376
          %v1384 = vadd.f32 %v1383, 1e-05
          %v1385 = vrsqrt.pop %v1384
          %v1386 = vmul.f32 %v1378, %v1385
          %v1388 = vlaneseq
          %v1389 = vshrl.u32 %v1388, 7
          %v1390 = vsub.s32 0, %v1389
          %v1391 = vrot.slane %v1370, %v1390
          %v1393 = vmul.f32 %v1386, %v1391
          %v1395 = vlaneseq
          %v1396 = vshrl.u32 %v1395, 7
          %v1397 = vsub.s32 0, %v1396
          %v1398 = vrot.slane %v1371, %v1397
          %v1400 = vadd.f32 %v1393, %v1398
          %v1401 = vpack.c.bf16 %v1400, %v1400
          %v1402 = vld [vmem:[%s8] sm:$0xf]
          %v1403 = vld [vmem:[%s8 + $0x4] sm:$0xf]
          %v1404 = vld [vmem:[%s8 + $0x8] sm:$0xf]
          %v1405 = vld [vmem:[%s8 + $0xc] sm:$0xf]
          %v1406 = vld [vmem:[#allocation11] sm:$0x1]
          %v1408 = vlaneseq
          %v1409 = vshrl.u32 %v1408, 7
          %v1410 = vsub.s32 0, %v1409
          %v1411 = vrot.slane %v1406, %v1410
          %v1417 = vunpack.c.l.b16 %v1402
          %v1418 = vunpack.c.l.b16 %v1403
          %v1419 = vunpack.c.l.b16 %v1404
          %v1420 = vunpack.c.l.b16 %v1405
          %v1421 = vpack.c.b16 %v1418, %v1417
          %v1422 = vpack.c.b16 %v1420, %v1419
          %v1426 = vsel %vm1372, %v1401, 0
          %1428 = vmatprep.subr.bf16.mxu0 0
          %1429 = vmatpush1.bf16.msra.mxu0 %v1421
          %1430 = vmatprep.subr.bf16.mxu0 0
          %1431 = vmatpush1.bf16.msra.mxu0 %v1422
          %1432 = vmatprep.subr.bf16.mxu0 0
          %1433 = vmatpush1.bf16.msra.mxu0 0
          %1434 = vmatprep.subr.bf16.mxu0 0
          %1435 = vmatpush1.bf16.msra.mxu0 0
          %1436 = vmatprep.subr.bf16.mxu0 0
          %1437 = vmatpush1.bf16.msra.mxu0 0
          %1438 = vmatprep.subr.bf16.mxu0 0
          %1439 = vmatpush1.bf16.msra.mxu0 0
          %1440 = vmatprep.subr.bf16.mxu0 0
          %1441 = vmatpush1.bf16.msra.mxu0 0
          %1442 = vmatprep.subr.bf16.mxu0 0
          %1443 = vmatpush1.bf16.msra.mxu0 0
          %1444 = vmatprep.subr.bf16.mxu0 0
          %1445 = vmatpush1.bf16.msra.mxu0 0
          %1446 = vmatprep.subr.bf16.mxu0 0
          %1447 = vmatpush1.bf16.msra.mxu0 0
          %1448 = vmatprep.subr.bf16.mxu0 0
          %1449 = vmatpush1.bf16.msra.mxu0 0
          %1450 = vmatprep.subr.bf16.mxu0 0
          %1451 = vmatpush1.bf16.msra.mxu0 0
          %1452 = vmatprep.subr.bf16.mxu0 0
          %1453 = vmatpush1.bf16.msra.mxu0 0
          %1454 = vmatprep.subr.bf16.mxu0 0
          %1455 = vmatpush1.bf16.msra.mxu0 0
          %1456 = vmatprep.subr.bf16.mxu0 0
          %1457 = vmatpush1.bf16.msra.mxu0 0
          %1458 = vmatprep.subr.bf16.mxu0 0
          %1459 = vmatpush1.bf16.msra.mxu0 0
          %1460 = vmatprep.mubr.bf16.mxu0 0
          %1461 = vmatmul.mubr.bf16.gmra.mrb[0].mxu0 %v1426
          %v1462 = vpop.f32.mrb[0].mxu0
          %v1463 = vadd.f32 %v1411, %v1462
          %v1464 = vpop.f32.mrb[0].mxu0
          %v1465 = vpop.f32.mrb[0].mxu0
          %v1466 = vpop.f32.mrb[0].mxu0
          %1467 = vdwg.mxu0
          %v1468 = vmul.f32 %v1463, 0.5
          %v1469 = vmul.f32 %v1463, 0.70710677
          %v1470 = verf.f32.pop %v1469
          %v1471 = vadd.f32 %v1470, 1.0
          %v1472 = vmul.f32 %v1468, %v1471
          %v1473 = vpack.c.bf16 %v1472, %v1472
          %v1474 = vld [vmem:[%s10] sm:$0xf]
          %v1475 = vld [vmem:[%s10 + $0x4] sm:$0xf]
          %v1476 = vld [vmem:[%s10 + $0x8] sm:$0xf]
          %v1477 = vld [vmem:[%s10 + $0xc] sm:$0xf]
          %v1478 = vld [vmem:[%s10 + $0x10] sm:$0xf]
          %v1479 = vld [vmem:[%s10 + $0x14] sm:$0xf]
          %v1480 = vld [vmem:[%s10 + $0x18] sm:$0xf]
          %v1481 = vld [vmem:[%s10 + $0x1c] sm:$0xf]
          %v1482 = vld [vmem:[%s10 + $0x20] sm:$0xf]
          %v1483 = vld [vmem:[%s10 + $0x24] sm:$0xf]
          %v1484 = vld [vmem:[%s10 + $0x28] sm:$0xf]
          %v1485 = vld [vmem:[%s10 + $0x2c] sm:$0xf]
          %v1486 = vld [vmem:[%s10 + $0x30] sm:$0xf]
          %v1487 = vld [vmem:[%s10 + $0x34] sm:$0xf]
          %v1488 = vld [vmem:[%s10 + $0x38] sm:$0xf]
          %v1489 = vld [vmem:[%s10 + $0x3c] sm:$0xf]
          %v1490 = vld [vmem:[%s11] sm:$0x1]
          %v1492 = vlaneseq
          %v1493 = vshrl.u32 %v1492, 7
          %v1494 = vsub.s32 0, %v1493
          %v1495 = vrot.slane %v1490, %v1494
          %v1513 = vunpack.c.l.b16 %v1474
          %v1514 = vunpack.c.l.b16 %v1475
          %v1515 = vunpack.c.l.b16 %v1476
          %v1516 = vunpack.c.l.b16 %v1477
          %v1517 = vunpack.c.l.b16 %v1478
          %v1518 = vunpack.c.l.b16 %v1479
          %v1519 = vunpack.c.l.b16 %v1480
          %v1520 = vunpack.c.l.b16 %v1481
          %v1521 = vunpack.c.l.b16 %v1482
          %v1522 = vunpack.c.l.b16 %v1483
          %v1523 = vunpack.c.l.b16 %v1484
          %v1524 = vunpack.c.l.b16 %v1485
          %v1525 = vunpack.c.l.b16 %v1486
          %v1526 = vunpack.c.l.b16 %v1487
          %v1527 = vunpack.c.l.b16 %v1488
          %v1528 = vunpack.c.l.b16 %v1489
          %v1529 = vpack.c.b16 %v1514, %v1513
          %v1530 = vpack.c.b16 %v1516, %v1515
          %v1531 = vpack.c.b16 %v1518, %v1517
          %v1532 = vpack.c.b16 %v1520, %v1519
          %v1533 = vpack.c.b16 %v1522, %v1521
          %v1534 = vpack.c.b16 %v1524, %v1523
          %v1535 = vpack.c.b16 %v1526, %v1525
          %v1536 = vpack.c.b16 %v1528, %v1527
          %1545 = vmatprep.subr.bf16.mxu0 0
          %1546 = vmatpush1.bf16.msra.mxu0 %v1529
          %1547 = vmatprep.subr.bf16.mxu0 0
          %1548 = vmatpush1.bf16.msra.mxu0 %v1530
          %1549 = vmatprep.subr.bf16.mxu0 0
          %1550 = vmatpush1.bf16.msra.mxu0 %v1531
          %1551 = vmatprep.subr.bf16.mxu0 0
          %1552 = vmatpush1.bf16.msra.mxu0 %v1532
          %1553 = vmatprep.subr.bf16.mxu0 0
          %1554 = vmatpush1.bf16.msra.mxu0 %v1533
          %1555 = vmatprep.subr.bf16.mxu0 0
          %1556 = vmatpush1.bf16.msra.mxu0 %v1534
          %1557 = vmatprep.subr.bf16.mxu0 0
          %1558 = vmatpush1.bf16.msra.mxu0 %v1535
          %1559 = vmatprep.subr.bf16.mxu0 0
          %1560 = vmatpush1.bf16.msra.mxu0 %v1536
          %1561 = vmatprep.subr.bf16.mxu0 0
          %1562 = vmatpush1.bf16.msra.mxu0 0
          %1563 = vmatprep.subr.bf16.mxu0 0
          %1564 = vmatpush1.bf16.msra.mxu0 0
          %1565 = vmatprep.subr.bf16.mxu0 0
          %1566 = vmatpush1.bf16.msra.mxu0 0
          %1567 = vmatprep.subr.bf16.mxu0 0
          %1568 = vmatpush1.bf16.msra.mxu0 0
          %1569 = vmatprep.subr.bf16.mxu0 0
          %1570 = vmatpush1.bf16.msra.mxu0 0
          %1571 = vmatprep.subr.bf16.mxu0 0
          %1572 = vmatpush1.bf16.msra.mxu0 0
          %1573 = vmatprep.subr.bf16.mxu0 0
          %1574 = vmatpush1.bf16.msra.mxu0 0
          %1575 = vmatprep.subr.bf16.mxu0 0
          %1576 = vmatpush1.bf16.msra.mxu0 0
          %1577 = vmatprep.mubr.bf16.mxu0 0
          %1578 = vmatmul.mubr.bf16.gmra.mrb[0].mxu0 %v1473
          %v1579 = vpop.f32.mrb[0].mxu0
          %v1580 = vadd.f32 %v1495, %v1579
          %v1581 = vpop.f32.mrb[0].mxu0
          %v1582 = vpop.f32.mrb[0].mxu0
          %v1583 = vpop.f32.mrb[0].mxu0
          %1584 = vdwg.mxu0
          %v1585 = vadd.f32 %v1369, %v1580
          %1586 = vst.msk [vmem:[%s562] sm:$0xff] %vm1372, %v1585
        $region92: #{tpu_custom_call.1} parent=67 // pred_fallthru
          _
        %s1587 = sand.u32 %s340, 1
        %s1588 = scalar_lea.sflag [#allocation7], %s1587
        %s1589 = sand.u32 %s340, 1
        %s1590 = smul.addr %s1589, 8
        %s1591 = scalar_lea.vmem [#allocation13], %s1590
        // Predicated region
        $region93: #{tpu_custom_call.1} parent=67 // pred_check
          %p1592 = pneg %p350
        $region94: #{tpu_custom_call.1} parent=67 // pred_check_branch
          %1594 = sbr.rel (%p1592) target = $region96
        $region95: #{tpu_custom_call.1} parent=67 // pred_region
          %s1596 = ssub.s32 128, 128
          %1597 = vsyncadd %s1588, %s1596
          %s1598 = sadd.s32 %s37, %s36
          %s1599 = smul.addr %s1598, 128
          %s1600 = scalar_lea.hbm %s12, %s1599
          %s1602 = sshll.u32 %s1591, 4
          %s1603 = int_to_ptr.vmem [resolvable:$true] %s1602
          %1605 = dma.vmem_to_hbm [thread:$0]  %s1603, 128, %s1600, %s1588
        $region96: #{tpu_custom_call.1} parent=67 // pred_fallthru
          _
      $region68: #{tpu_custom_call.1} parent=5 // pred_fallthru
        _
      %p1606 = scmp.le.s32.totalorder 2, %s26
      // Predicated region
      $region97: #{tpu_custom_call.1} parent=5 // pred_check
        %p1607 = pneg %p1606
      $region98: #{tpu_custom_call.1} parent=5 // pred_check_branch
        %1609 = sbr.rel (%p1607) target = $region100
      $region99: #{tpu_custom_call.1} parent=5 // pred_region
        %s1610 = ssub.s32 %s26, 2
        // Predicated region
        $region101: #{tpu_custom_call.1} parent=99 // pred_check
          %p1611 = pneg %p356
        $region102: #{tpu_custom_call.1} parent=99 // pred_check_branch
          %1613 = sbr.rel (%p1611) target = $region104
        $region103: #{tpu_custom_call.1} parent=99 // pred_region
          %s1614 = sand.u32 %s341, 1
          %s1615 = scalar_lea.sflag [#allocation7], %s1614
          %s1616 = sand.u32 %s341, 1
          %s1617 = smul.addr %s1616, 8
          %s1618 = scalar_lea.vmem [#allocation13], %s1617
          %1619 = dma.done %s1615, 128
        $region104: #{tpu_custom_call.1} parent=99 // pred_fallthru
          _
      $region100: #{tpu_custom_call.1} parent=5 // pred_fallthru
        _
    $region6: #{tpu_custom_call.1} parent=1 // loop_footer
      %s30 = sadd.s32 1, %s26
    $region7: #{tpu_custom_call.1} parent=1 // loop_footer_branch
      %25 = sbr.rel target = $region3
    $region8: #{tpu_custom_call.1} parent=1 // loop_exit
      _
    %1620 = vsyncpa [#allocation6], 1
    %s1621 = scalar_lea.sflag [#allocation6], 1
    %1622 = vsyncpa %s1621, 1
    %1623 = vsyncpa [#allocation9], 1
    %1624 = vsyncpa [#allocation12], 1
    %1625 = vsyncpa [#allocation7], 1
    %s1626 = scalar_lea.sflag [#allocation7], 1
    %1627 = vsyncpa %s1626, 1

// kernel: tpu_custom_call.1
$region0: #{tpu_custom_call.1}
  #allocation0 [shape = 'u32[]', space=smem, size = 0x4, offset = 0x4, fixed_abs, tag = 'smem constant byte address 0x4 - core index']
  #allocation1 [shape = 'u32[144,128]{1,0:T(1,128)}', space=vmem, size = 0x12000, scoped, tag = 'internal scratch']
  #allocation2 [shape = 'f32[4,8,1]{2,1,0:T(8,128)}', space=vmem, size = 0x4000, scoped, tag = 'scratch operand']
  #allocation3 [shape = 'f32[4,8,1]{2,1,0:T(8,128)}', space=vmem, size = 0x4000, scoped, tag = 'scratch operand']
  #allocation4 [shape = 'f32[4,8,8]{2,1,0:T(8,128)}', space=vmem, size = 0x4000, scoped, tag = 'scratch operand']
  %s0 = inlined_call_operand.vmem [shape: f32[2,8,32], index: 0, kind: input, shape index: {}]
  %s1 = inlined_call_operand.vmem [shape: bf16[2,4,8,8], index: 1, kind: input, shape index: {}]
  %s2 = inlined_call_operand.vmem [shape: bf16[2,4,8,8], index: 2, kind: input, shape index: {}]
  %s3 = inlined_call_operand.hbm [shape: bf16[2,4,8,8], index: 3, kind: input, shape index: {}]
  %s4 = inlined_call_operand.hbm [shape: bf16[4,8,32], index: 4, kind: input, shape index: {}]
  %s5 = inlined_call_operand.vmem [shape: f32[1,32], index: 5, kind: input, shape index: {}]
  %s6 = inlined_call_operand.vmem [shape: f32[1,32], index: 6, kind: input, shape index: {}]
  %s7 = inlined_call_operand.hbm [shape: f32[1,32], index: 7, kind: input, shape index: {}]
  %s8 = inlined_call_operand.vmem [shape: bf16[32,128], index: 8, kind: input, shape index: {}]
  %s9 = inlined_call_operand.hbm [shape: f32[1,128], index: 9, kind: input, shape index: {}]
  %s10 = inlined_call_operand.vmem [shape: bf16[128,32], index: 10, kind: input, shape index: {}]
  %s11 = inlined_call_operand.vmem [shape: f32[1,32], index: 11, kind: input, shape index: {}]
  %s12 = inlined_call_operand.hbm [shape: f32[2,8,32], index: 12, kind: output, shape index: {}]
  %s13 = sld [smem:[#allocation0]]
  $region105: #{tpu_custom_call.1} parent=0
    _
  %s15 = ssub.s32 1, %s13
  %s16 = scalar_select 0, %s15, %s13
  $region1: #{tpu_custom_call.1} parent=0
    #allocation5 [shape = 'u8[16384]{0}', space=vmem, size = 0x4000, scoped, tag = 'input window, operand 3']
    #allocation6 [shape = 's32[2]{0}', space=sflag, size = 0x8, scoped, tag = 'scoped memory for tpu_custom_call.1']
    #allocation7 [shape = 's32[2]{0}', space=sflag, size = 0x8, scoped, tag = 'scoped memory for tpu_custom_call.1']
    #allocation8 [shape = 'u8[8192]{0}', space=vmem, size = 0x2000, scoped, tag = 'input window, operand 4, single buffered']
    #allocation9 [shape = 's32[1]{0}', space=sflag, size = 0x4, scoped, tag = 'scoped memory for tpu_custom_call.1']
    #allocation10 [shape = 'u8[512]{0}', space=vmem, size = 0x400, scoped, tag = 'input window, operand 7, single buffered']
    #allocation11 [shape = 'u8[512]{0}', space=vmem, size = 0x400, scoped, tag = 'input window, operand 9, single buffered']
    #allocation12 [shape = 's32[1]{0}', space=sflag, size = 0x4, scoped, tag = 'scoped memory for tpu_custom_call.1']
    #allocation13 [shape = 'u8[8192]{0}', space=vmem, size = 0x2000, scoped, tag = 'output window, operand 0']
    %17 = vsyncpa [#allocation6], 0
    %s18 = scalar_lea.sflag [#allocation6], 1
    %19 = vsyncpa %s18, 0
    %20 = vsyncpa [#allocation9], 0
    %21 = vsyncpa [#allocation12], 0
    %22 = vsyncpa [#allocation7], 0
    %s23 = scalar_lea.sflag [#allocation7], 1
    %24 = vsyncpa %s23, 0
    loop: start=0, step=1, limit=4
    $region2: #{tpu_custom_call.1} parent=1 // loop_pre_header
      _
    $region3: #{tpu_custom_call.1} parent=1 // loop_header
      %s26 = sphi 0, %s30
      %p27 = scmp.ge.s32.totalorder %s26, 4
      %s33 = sphi 0, %s52
      %s34 = sphi 0, %s48
      %s35 = sphi 0, %s44
      %s36 = sphi 0, %s33
      %s37 = sphi 0, %s34
      %s38 = sphi 0, %s35
      %s39 = sphi 0, %s36
      %s40 = sphi 0, %s37
      %s41 = sphi 0, %s38
      %s57 = sphi 0, %s59
      %s60 = sphi 0, %s57
      %s61 = sphi 0, %s60
      %s77 = sphi 0, %s61
      %s85 = sphi 0, %s87
      %s88 = sphi 0, %s85
      %s89 = sphi 0, %s88
      %s105 = sphi 0, %s89
      %s113 = sphi 0, %s115
      %s116 = sphi 0, %s113
      %s117 = sphi 0, %s116
      %s133 = sphi 0, %s117
      %s141 = sphi 0, %s143
      %s144 = sphi 0, %s141
      %s145 = sphi 0, %s144
      %s161 = sphi 0, %s145
      %s165 = sphi 0, %s165
      %s167 = sphi 0, %s165
      %s168 = sphi 0, %s167
      %s182 = sphi 0, %s168
      %s186 = sphi 0, %s186
      %s188 = sphi 0, %s186
      %s189 = sphi 0, %s188
      %s203 = sphi 0, %s189
      %s207 = sphi 0, %s207
      %s209 = sphi 0, %s207
      %s210 = sphi 0, %s209
      %s224 = sphi 0, %s210
      %s228 = sphi 0, %s228
      %s230 = sphi 0, %s228
      %s231 = sphi 0, %s230
      %s245 = sphi 0, %s231
      %s249 = sphi 0, %s249
      %s251 = sphi 0, %s249
      %s252 = sphi 0, %s251
      %s266 = sphi 0, %s252
      %s270 = sphi 0, %s270
      %s272 = sphi 0, %s270
      %s273 = sphi 0, %s272
      %s287 = sphi 0, %s273
      %s291 = sphi 0, %s291
      %s293 = sphi 0, %s291
      %s294 = sphi 0, %s293
      %s308 = sphi 0, %s294
      %s312 = sphi 0, %s312
      %s314 = sphi 0, %s312
      %s315 = sphi 0, %s314
      %s329 = sphi 0, %s315
      %s337 = sphi 0, %s339
      %s340 = sphi 0, %s337
      %s341 = sphi 0, %s340
      %s357 = sphi 0, %s341
    $region4: #{tpu_custom_call.1} parent=1 // loop_header_branch
      %29 = sbr.rel (%p27) target = $region8
    $region5: #{tpu_custom_call.1} parent=1 // loop_body
      %s31 = ssub.s32 %s26, 1
      %s32 = ssub.s32 %s26, 2
      %s42 = sadd.s32 1, %s35
      %p43 = scmp.ge.s32.totalorder %s42, 1
      %s44 = scalar_select %p43, 0, %s42
      %s45 = sadd.s32 1, %s34
      %s46 = scalar_select %p43, %s45, %s34
      %p47 = scmp.ge.s32.totalorder %s46, 1
      %s48 = scalar_select %p47, 0, %s46
      %s49 = sadd.s32 1, %s33
      %s50 = scalar_select %p47, %s49, %s33
      %p51 = scmp.ge.s32.totalorder %s50, 2
      %s52 = scalar_select %p51, 0, %s50
      %s53 = ssub.s32 %s33, %s52
      %s54 = ssub.s32 %s34, %s48
      %s55 = sor.u32 %s53, %s54
      %p56 = scmp.eq.s32.totalorder %s55, 0
      %s58 = sadd.s32 %s57, 1
      %s59 = scalar_select %p56, %s57, %s58
      %p62 = pneg %p56
      %p63 = scmp.eq.s32.totalorder %s26, 1
      %p64 = por %p62, %p63
      %p65 = scmp.ne.s32.totalorder %s57, %s60
      %p66 = scmp.eq.s32.totalorder %s26, 0
      %p67 = por %p65, %p66
      %p68 = scmp.ne.s32.totalorder %s57, %s60
      %p69 = scmp.eq.s32.totalorder %s31, 1
      %p70 = por %p68, %p69
      %p71 = scmp.ne.s32.totalorder %s60, %s61
      %p72 = scmp.eq.s32.totalorder %s31, 0
      %p73 = por %p71, %p72
      %p74 = scmp.ne.s32.totalorder %s60, %s61
      %p75 = scmp.eq.s32.totalorder %s32, 1
      %p76 = por %p74, %p75
      %p78 = scmp.ne.s32.totalorder %s61, %s77
      %p79 = scmp.eq.s32.totalorder %s32, 0
      %p80 = por %p78, %p79
      %s81 = ssub.s32 %s33, %s52
      %s82 = ssub.s32 %s34, %s48
      %s83 = sor.u32 %s81, %s82
      %p84 = scmp.eq.s32.totalorder %s83, 0
      %s86 = sadd.s32 %s85, 1
      %s87 = scalar_select %p84, %s85, %s86
      %p90 = pneg %p84
      %p91 = scmp.eq.s32.totalorder %s26, 1
      %p92 = por %p90, %p91
      %p93 = scmp.ne.s32.totalorder %s85, %s88
      %p94 = scmp.eq.s32.totalorder %s26, 0
      %p95 = por %p93, %p94
      %p96 = scmp.ne.s32.totalorder %s85, %s88
      %p97 = scmp.eq.s32.totalorder %s31, 1
      %p98 = por %p96, %p97
      %p99 = scmp.ne.s32.totalorder %s88, %s89
      %p100 = scmp.eq.s32.totalorder %s31, 0
      %p101 = por %p99, %p100
      %p102 = scmp.ne.s32.totalorder %s88, %s89
      %p103 = scmp.eq.s32.totalorder %s32, 1
      %p104 = por %p102, %p103
      %p106 = scmp.ne.s32.totalorder %s89, %s105
      %p107 = scmp.eq.s32.totalorder %s32, 0
      %p108 = por %p106, %p107
      %s109 = ssub.s32 %s33, %s52
      %s110 = ssub.s32 %s35, %s44
      %s111 = sor.u32 %s109, %s110
      %p112 = scmp.eq.s32.totalorder %s111, 0
      %s114 = sadd.s32 %s113, 1
      %s115 = scalar_select %p112, %s113, %s114
      %p118 = pneg %p112
      %p119 = scmp.eq.s32.totalorder %s26, 1
      %p120 = por %p118, %p119
      %p121 = scmp.ne.s32.totalorder %s113, %s116
      %p122 = scmp.eq.s32.totalorder %s26, 0
      %p123 = por %p121, %p122
      %p124 = scmp.ne.s32.totalorder %s113, %s116
      %p125 = scmp.eq.s32.totalorder %s31, 1
      %p126 = por %p124, %p125
      %p127 = scmp.ne.s32.totalorder %s116, %s117
      %p128 = scmp.eq.s32.totalorder %s31, 0
      %p129 = por %p127, %p128
      %p130 = scmp.ne.s32.totalorder %s116, %s117
      %p131 = scmp.eq.s32.totalorder %s32, 1
      %p132 = por %p130, %p131
      %p134 = scmp.ne.s32.totalorder %s117, %s133
      %p135 = scmp.eq.s32.totalorder %s32, 0
      %p136 = por %p134, %p135
      %s137 = ssub.s32 %s33, %s52
      %s138 = ssub.s32 %s35, %s44
      %s139 = sor.u32 %s137, %s138
      %p140 = scmp.eq.s32.totalorder %s139, 0
      %s142 = sadd.s32 %s141, 1
      %s143 = scalar_select %p140, %s141, %s142
      %p146 = pneg %p140
      %p147 = scmp.eq.s32.totalorder %s26, 1
      %p148 = por %p146, %p147
      %p149 = scmp.ne.s32.totalorder %s141, %s144
      %p150 = scmp.eq.s32.totalorder %s26, 0
      %p151 = por %p149, %p150
      %p152 = scmp.ne.s32.totalorder %s141, %s144
      %p153 = scmp.eq.s32.totalorder %s31, 1
      %p154 = por %p152, %p153
      %p155 = scmp.ne.s32.totalorder %s144, %s145
      %p156 = scmp.eq.s32.totalorder %s31, 0
      %p157 = por %p155, %p156
      %p158 = scmp.ne.s32.totalorder %s144, %s145
      %p159 = scmp.eq.s32.totalorder %s32, 1
      %p160 = por %p158, %p159
      %p162 = scmp.ne.s32.totalorder %s145, %s161
      %p163 = scmp.eq.s32.totalorder %s32, 0
      %p164 = por %p162, %p163
      %s166 = sadd.s32 %s165, 1
      %p169 = scmp.eq.s32.totalorder %s26, 1
      %p170 = scmp.ne.s32.totalorder %s165, %s167
      %p171 = scmp.eq.s32.totalorder %s26, 0
      %p172 = por %p170, %p171
      %p173 = scmp.ne.s32.totalorder %s165, %s167
      %p174 = scmp.eq.s32.totalorder %s31, 1
      %p175 = por %p173, %p174
      %p176 = scmp.ne.s32.totalorder %s167, %s168
      %p177 = scmp.eq.s32.totalorder %s31, 0
      %p178 = por %p176, %p177
      %p179 = scmp.ne.s32.totalorder %s167, %s168
      %p180 = scmp.eq.s32.totalorder %s32, 1
      %p181 = por %p179, %p180
      %p183 = scmp.ne.s32.totalorder %s168, %s182
      %p184 = scmp.eq.s32.totalorder %s32, 0
      %p185 = por %p183, %p184
      %s187 = sadd.s32 %s186, 1
      %p190 = scmp.eq.s32.totalorder %s26, 1
      %p191 = scmp.ne.s32.totalorder %s186, %s188
      %p192 = scmp.eq.s32.totalorder %s26, 0
      %p193 = por %p191, %p192
      %p194 = scmp.ne.s32.totalorder %s186, %s188
      %p195 = scmp.eq.s32.totalorder %s31, 1
      %p196 = por %p194, %p195
      %p197 = scmp.ne.s32.totalorder %s188, %s189
      %p198 = scmp.eq.s32.totalorder %s31, 0
      %p199 = por %p197, %p198
      %p200 = scmp.ne.s32.totalorder %s188, %s189
      %p201 = scmp.eq.s32.totalorder %s32, 1
      %p202 = por %p200, %p201
      %p204 = scmp.ne.s32.totalorder %s189, %s203
      %p205 = scmp.eq.s32.totalorder %s32, 0
      %p206 = por %p204, %p205
      %s208 = sadd.s32 %s207, 1
      %p211 = scmp.eq.s32.totalorder %s26, 1
      %p212 = scmp.ne.s32.totalorder %s207, %s209
      %p213 = scmp.eq.s32.totalorder %s26, 0
      %p214 = por %p212, %p213
      %p215 = scmp.ne.s32.totalorder %s207, %s209
      %p216 = scmp.eq.s32.totalorder %s31, 1
      %p217 = por %p215, %p216
      %p218 = scmp.ne.s32.totalorder %s209, %s210
      %p219 = scmp.eq.s32.totalorder %s31, 0
      %p220 = por %p218, %p219
      %p221 = scmp.ne.s32.totalorder %s209, %s210
      %p222 = scmp.eq.s32.totalorder %s32, 1
      %p223 = por %p221, %p222
      %p225 = scmp.ne.s32.totalorder %s210, %s224
      %p226 = scmp.eq.s32.totalorder %s32, 0
      %p227 = por %p225, %p226
      %s229 = sadd.s32 %s228, 1
      %p232 = scmp.eq.s32.totalorder %s26, 1
      %p233 = scmp.ne.s32.totalorder %s228, %s230
      %p234 = scmp.eq.s32.totalorder %s26, 0
      %p235 = por %p233, %p234
      %p236 = scmp.ne.s32.totalorder %s228, %s230
      %p237 = scmp.eq.s32.totalorder %s31, 1
      %p238 = por %p236, %p237
      %p239 = scmp.ne.s32.totalorder %s230, %s231
      %p240 = scmp.eq.s32.totalorder %s31, 0
      %p241 = por %p239, %p240
      %p242 = scmp.ne.s32.totalorder %s230, %s231
      %p243 = scmp.eq.s32.totalorder %s32, 1
      %p244 = por %p242, %p243
      %p246 = scmp.ne.s32.totalorder %s231, %s245
      %p247 = scmp.eq.s32.totalorder %s32, 0
      %p248 = por %p246, %p247
      %s250 = sadd.s32 %s249, 1
      %p253 = scmp.eq.s32.totalorder %s26, 1
      %p254 = scmp.ne.s32.totalorder %s249, %s251
      %p255 = scmp.eq.s32.totalorder %s26, 0
      %p256 = por %p254, %p255
      %p257 = scmp.ne.s32.totalorder %s249, %s251
      %p258 = scmp.eq.s32.totalorder %s31, 1
      %p259 = por %p257, %p258
      %p260 = scmp.ne.s32.totalorder %s251, %s252
      %p261 = scmp.eq.s32.totalorder %s31, 0
      %p262 = por %p260, %p261
      %p263 = scmp.ne.s32.totalorder %s251, %s252
      %p264 = scmp.eq.s32.totalorder %s32, 1
      %p265 = por %p263, %p264
      %p267 = scmp.ne.s32.totalorder %s252, %s266
      %p268 = scmp.eq.s32.totalorder %s32, 0
      %p269 = por %p267, %p268
      %s271 = sadd.s32 %s270, 1
      %p274 = scmp.eq.s32.totalorder %s26, 1
      %p275 = scmp.ne.s32.totalorder %s270, %s272
      %p276 = scmp.eq.s32.totalorder %s26, 0
      %p277 = por %p275, %p276
      %p278 = scmp.ne.s32.totalorder %s270, %s272
      %p279 = scmp.eq.s32.totalorder %s31, 1
      %p280 = por %p278, %p279
      %p281 = scmp.ne.s32.totalorder %s272, %s273
      %p282 = scmp.eq.s32.totalorder %s31, 0
      %p283 = por %p281, %p282
      %p284 = scmp.ne.s32.totalorder %s272, %s273
      %p285 = scmp.eq.s32.totalorder %s32, 1
      %p286 = por %p284, %p285
      %p288 = scmp.ne.s32.totalorder %s273, %s287
      %p289 = scmp.eq.s32.totalorder %s32, 0
      %p290 = por %p288, %p289
      %s292 = sadd.s32 %s291, 1
      %p295 = scmp.eq.s32.totalorder %s26, 1
      %p296 = scmp.ne.s32.totalorder %s291, %s293
      %p297 = scmp.eq.s32.totalorder %s26, 0
      %p298 = por %p296, %p297
      %p299 = scmp.ne.s32.totalorder %s291, %s293
      %p300 = scmp.eq.s32.totalorder %s31, 1
      %p301 = por %p299, %p300
      %p302 = scmp.ne.s32.totalorder %s293, %s294
      %p303 = scmp.eq.s32.totalorder %s31, 0
      %p304 = por %p302, %p303
      %p305 = scmp.ne.s32.totalorder %s293, %s294
      %p306 = scmp.eq.s32.totalorder %s32, 1
      %p307 = por %p305, %p306
      %p309 = scmp.ne.s32.totalorder %s294, %s308
      %p310 = scmp.eq.s32.totalorder %s32, 0
      %p311 = por %p309, %p310
      %s313 = sadd.s32 %s312, 1
      %p316 = scmp.eq.s32.totalorder %s26, 1
      %p317 = scmp.ne.s32.totalorder %s312, %s314
      %p318 = scmp.eq.s32.totalorder %s26, 0
      %p319 = por %p317, %p318
      %p320 = scmp.ne.s32.totalorder %s312, %s314
      %p321 = scmp.eq.s32.totalorder %s31, 1
      %p322 = por %p320, %p321
      %p323 = scmp.ne.s32.totalorder %s314, %s315
      %p324 = scmp.eq.s32.totalorder %s31, 0
      %p325 = por %p323, %p324
      %p326 = scmp.ne.s32.totalorder %s314, %s315
      %p327 = scmp.eq.s32.totalorder %s32, 1
      %p328 = por %p326, %p327
      %p330 = scmp.ne.s32.totalorder %s315, %s329
      %p331 = scmp.eq.s32.totalorder %s32, 0
      %p332 = por %p330, %p331
      %s333 = ssub.s32 %s33, %s52
      %s334 = ssub.s32 %s34, %s48
      %s335 = sor.u32 %s333, %s334
      %p336 = scmp.eq.s32.totalorder %s335, 0
      %s338 = sadd.s32 %s337, 1
      %s339 = scalar_select %p336, %s337, %s338
      %p342 = pneg %p336
      %p343 = scmp.eq.s32.totalorder %s26, 1
      %p344 = por %p342, %p343
      %p345 = scmp.ne.s32.totalorder %s337, %s340
      %p346 = scmp.eq.s32.totalorder %s26, 0
      %p347 = por %p345, %p346
      %p348 = scmp.ne.s32.totalorder %s337, %s340
      %p349 = scmp.eq.s32.totalorder %s31, 1
      %p350 = por %p348, %p349
      %p351 = scmp.ne.s32.totalorder %s340, %s341
      %p352 = scmp.eq.s32.totalorder %s31, 0
      %p353 = por %p351, %p352
      %p354 = scmp.ne.s32.totalorder %s340, %s341
      %p355 = scmp.eq.s32.totalorder %s32, 1
      %p356 = por %p354, %p355
      %p358 = scmp.ne.s32.totalorder %s341, %s357
      %p359 = scmp.eq.s32.totalorder %s32, 0
      %p360 = por %p358, %p359
      %p361 = scmp.le.s32.totalorder 1, %s26
      %p362 = scmp.lt.s32.totalorder %s26, 3
      %p363 = pnand %p361, %p362
      %p364 = pneg %p363
      // Predicated region
      $region9: #{tpu_custom_call.1} parent=5 // pred_check
        _
      $region10: #{tpu_custom_call.1} parent=5 // pred_check_branch
        %366 = sbr.rel (%p363) target = $region12
      $region11: #{tpu_custom_call.1} parent=5 // pred_region
        %s367 = ssub.s32 %s26, 1
        // Predicated region
        $region13: #{tpu_custom_call.1} parent=11 // pred_check
          %p368 = pneg %p178
        $region14: #{tpu_custom_call.1} parent=11 // pred_check_branch
          %370 = sbr.rel (%p368) target = $region16
        $region15: #{tpu_custom_call.1} parent=11 // pred_region
          %s372 = ssub.s32 256, 256
          %373 = vsyncadd [#allocation9], %s372
          %s374 = sshll.u32 [#allocation8], 4
          %s375 = int_to_ptr.vmem [resolvable:$true] %s374
          %380 = dma.hbm_to_vmem [thread:$0]  %s4, 256, %s375, [#allocation9], 64, 64, 4
        $region16: #{tpu_custom_call.1} parent=11 // pred_fallthru
          _
        // Predicated region
        $region17: #{tpu_custom_call.1} parent=11 // pred_check
          %p381 = pneg %p199
        $region18: #{tpu_custom_call.1} parent=11 // pred_check_branch
          %383 = sbr.rel (%p381) target = $region20
        $region19: #{tpu_custom_call.1} parent=11 // pred_region
          _
        $region20: #{tpu_custom_call.1} parent=11 // pred_fallthru
          _
        // Predicated region
        $region21: #{tpu_custom_call.1} parent=11 // pred_check
          %p384 = pneg %p220
        $region22: #{tpu_custom_call.1} parent=11 // pred_check_branch
          %386 = sbr.rel (%p384) target = $region24
        $region23: #{tpu_custom_call.1} parent=11 // pred_region
          _
        $region24: #{tpu_custom_call.1} parent=11 // pred_fallthru
          _
        // Predicated region
        $region25: #{tpu_custom_call.1} parent=11 // pred_check
          %p387 = pneg %p241
        $region26: #{tpu_custom_call.1} parent=11 // pred_check_branch
          %389 = sbr.rel (%p387) target = $region28
        $region27: #{tpu_custom_call.1} parent=11 // pred_region
          %s391 = ssub.s32 16, 16
          %392 = vsyncadd [#allocation9], %s391
          %s394 = sshll.u32 [#allocation10], 4
          %s395 = int_to_ptr.vmem [resolvable:$true] %s394
          %397 = dma.hbm_to_vmem [thread:$0]  %s7, 16, %s395, [#allocation9]
        $region28: #{tpu_custom_call.1} parent=11 // pred_fallthru
          _
        // Predicated region
        $region29: #{tpu_custom_call.1} parent=11 // pred_check
          %p398 = pneg %p262
        $region30: #{tpu_custom_call.1} parent=11 // pred_check_branch
          %400 = sbr.rel (%p398) target = $region32
        $region31: #{tpu_custom_call.1} parent=11 // pred_region
          _
        $region32: #{tpu_custom_call.1} parent=11 // pred_fallthru
          _
        // Predicated region
        $region33: #{tpu_custom_call.1} parent=11 // pred_check
          %p401 = pneg %p283
        $region34: #{tpu_custom_call.1} parent=11 // pred_check_branch
          %403 = sbr.rel (%p401) target = $region36
        $region35: #{tpu_custom_call.1} parent=11 // pred_region
          %s405 = ssub.s32 16, 16
          %406 = vsyncadd [#allocation12], %s405
          %s408 = sshll.u32 [#allocation11], 4
          %s409 = int_to_ptr.vmem [resolvable:$true] %s408
          %411 = dma.hbm_to_vmem [thread:$0]  %s9, 16, %s409, [#allocation12]
        $region36: #{tpu_custom_call.1} parent=11 // pred_fallthru
          _
        // Predicated region
        $region37: #{tpu_custom_call.1} parent=11 // pred_check
          %p412 = pneg %p304
        $region38: #{tpu_custom_call.1} parent=11 // pred_check_branch
          %414 = sbr.rel (%p412) target = $region40
        $region39: #{tpu_custom_call.1} parent=11 // pred_region
          _
        $region40: #{tpu_custom_call.1} parent=11 // pred_fallthru
          _
        // Predicated region
        $region41: #{tpu_custom_call.1} parent=11 // pred_check
          %p415 = pneg %p325
        $region42: #{tpu_custom_call.1} parent=11 // pred_check_branch
          %417 = sbr.rel (%p415) target = $region44
        $region43: #{tpu_custom_call.1} parent=11 // pred_region
          _
        $region44: #{tpu_custom_call.1} parent=11 // pred_fallthru
          _
      $region12: #{tpu_custom_call.1} parent=5 // pred_fallthru
        _
      %p418 = scmp.lt.s32.totalorder %s26, 2
      // Predicated region
      $region45: #{tpu_custom_call.1} parent=5 // pred_check
        %p419 = pneg %p418
      $region46: #{tpu_custom_call.1} parent=5 // pred_check_branch
        %421 = sbr.rel (%p419) target = $region48
      $region47: #{tpu_custom_call.1} parent=5 // pred_region
        // Predicated region
        $region49: #{tpu_custom_call.1} parent=47 // pred_check
          %p422 = pneg %p67
        $region50: #{tpu_custom_call.1} parent=47 // pred_check_branch
          %424 = sbr.rel (%p422) target = $region52
        $region51: #{tpu_custom_call.1} parent=47 // pred_region
          %p425 = scmp.lt.s32.totalorder %s33, 1
          %s426 = scalar_select %p425, %s33, 1
          %p427 = scmp.lt.s32.totalorder %s34, 0
          %s428 = scalar_select %p427, %s34, 0
          %s429 = sadd.s32 %s428, %s426
          %s430 = smul.addr %s429, 8
          %s431 = scalar_lea.vmem %s0, %s430
        $region52: #{tpu_custom_call.1} parent=47 // pred_fallthru
          _
        // Predicated region
        $region53: #{tpu_custom_call.1} parent=47 // pred_check
          %p432 = pneg %p95
        $region54: #{tpu_custom_call.1} parent=47 // pred_check_branch
          %434 = sbr.rel (%p432) target = $region56
        $region55: #{tpu_custom_call.1} parent=47 // pred_region
          %p435 = scmp.lt.s32.totalorder %s33, 1
          %s436 = scalar_select %p435, %s33, 1
          %p437 = scmp.lt.s32.totalorder %s34, 0
          %s438 = scalar_select %p437, %s34, 0
          %s439 = smul.addr %s436, 4
          %s440 = sadd.s32 %s438, %s439
          %s441 = smul.addr %s440, 4
          %s442 = scalar_lea.vmem %s1, %s441
        $region56: #{tpu_custom_call.1} parent=47 // pred_fallthru
          _
        // Predicated region
        $region57: #{tpu_custom_call.1} parent=47 // pred_check
          %p443 = pneg %p123
        $region58: #{tpu_custom_call.1} parent=47 // pred_check_branch
          %445 = sbr.rel (%p443) target = $region60
        $region59: #{tpu_custom_call.1} parent=47 // pred_region
          %p446 = scmp.lt.s32.totalorder %s33, 1
          %s447 = scalar_select %p446, %s33, 1
          %p448 = scmp.lt.s32.totalorder %s35, 0
          %s449 = scalar_select %p448, %s35, 0
          %s450 = smul.addr %s447, 4
          %s451 = sadd.s32 %s449, %s450
          %s452 = smul.addr %s451, 4
          %s453 = scalar_lea.vmem %s2, %s452
        $region60: #{tpu_custom_call.1} parent=47 // pred_fallthru
          _
        // Predicated region
        $region61: #{tpu_custom_call.1} parent=47 // pred_check
          %p454 = pneg %p151
        $region62: #{tpu_custom_call.1} parent=47 // pred_check_branch
          %456 = sbr.rel (%p454) target = $region64
        $region63: #{tpu_custom_call.1} parent=47 // pred_region
          %s457 = sand.u32 %s141, 1
          %s458 = scalar_lea.sflag [#allocation6], %s457
          %s459 = sand.u32 %s141, 1
          %s460 = smul.addr %s459, 16
          %s461 = scalar_lea.vmem [#allocation5], %s460
          %s463 = ssub.s32 256, 256
          %464 = vsyncadd %s458, %s463
          %s465 = smul.addr %s33, 4
          %s466 = sadd.s32 %s35, %s465
          %s467 = smul.addr %s466, 64
          %s468 = scalar_lea.hbm %s3, %s467
          %s469 = sshll.u32 %s461, 4
          %s470 = int_to_ptr.vmem [resolvable:$true] %s469
          %475 = dma.hbm_to_vmem [thread:$0]  %s468, 256, %s470, %s458, 64, 64, 4
        $region64: #{tpu_custom_call.1} parent=47 // pred_fallthru
          _
      $region48: #{tpu_custom_call.1} parent=5 // pred_fallthru
        _
      %p476 = scmp.le.s32.totalorder 1, %s26
      %p477 = scmp.lt.s32.totalorder %s26, 3
      %p478 = pnand %p476, %p477
      %p479 = pneg %p478
      // Predicated region
      $region65: #{tpu_custom_call.1} parent=5 // pred_check
        _
      $region66: #{tpu_custom_call.1} parent=5 // pred_check_branch
        %481 = sbr.rel (%p478) target = $region68
      $region67: #{tpu_custom_call.1} parent=5 // pred_region
        %s482 = ssub.s32 %s26, 1
        %s483 = sand.u32 %s144, 1
        %s484 = scalar_lea.sflag [#allocation6], %s483
        %s485 = sand.u32 %s144, 1
        %s486 = smul.addr %s485, 16
        %s487 = scalar_lea.vmem [#allocation5], %s486
        // Predicated region
        $region69: #{tpu_custom_call.1} parent=67 // pred_check
          %p488 = pneg %p157
        $region70: #{tpu_custom_call.1} parent=67 // pred_check_branch
          %490 = sbr.rel (%p488) target = $region72
        $region71: #{tpu_custom_call.1} parent=67 // pred_region
          %491 = dma.done %s484, 256
        $region72: #{tpu_custom_call.1} parent=67 // pred_fallthru
          _
        // Predicated region
        $region73: #{tpu_custom_call.1} parent=67 // pred_check
          %p492 = pneg %p178
        $region74: #{tpu_custom_call.1} parent=67 // pred_check_branch
          %494 = sbr.rel (%p492) target = $region76
        $region75: #{tpu_custom_call.1} parent=67 // pred_region
          %495 = dma.done [#allocation9], 256
        $region76: #{tpu_custom_call.1} parent=67 // pred_fallthru
          _
        // Predicated region
        $region77: #{tpu_custom_call.1} parent=67 // pred_check
          %p496 = pneg %p241
        $region78: #{tpu_custom_call.1} parent=67 // pred_check_branch
          %498 = sbr.rel (%p496) target = $region80
        $region79: #{tpu_custom_call.1} parent=67 // pred_region
          %499 = dma.done [#allocation9], 16
        $region80: #{tpu_custom_call.1} parent=67 // pred_fallthru
          _
        // Predicated region
        $region81: #{tpu_custom_call.1} parent=67 // pred_check
          %p500 = pneg %p283
        $region82: #{tpu_custom_call.1} parent=67 // pred_check_branch
          %502 = sbr.rel (%p500) target = $region84
        $region83: #{tpu_custom_call.1} parent=67 // pred_region
          %503 = dma.done [#allocation12], 16
        $region84: #{tpu_custom_call.1} parent=67 // pred_fallthru
          _
        %p504 = scmp.lt.s32.totalorder %s36, 1
        %s505 = scalar_select %p504, %s36, 1
        %p506 = scmp.lt.s32.totalorder %s37, 0
        %s507 = scalar_select %p506, %s37, 0
        %s508 = sadd.s32 %s507, %s505
        %s509 = smul.addr %s508, 8
        %s510 = scalar_lea.vmem %s0, %s509
        %p511 = pneg %p73
        %p512 = pneg %p70
        %p513 = scmp.lt.s32.totalorder %s36, 1
        %s514 = scalar_select %p513, %s36, 1
        %p515 = scmp.lt.s32.totalorder %s37, 0
        %s516 = scalar_select %p515, %s37, 0
        %s517 = smul.addr %s514, 4
        %s518 = sadd.s32 %s516, %s517
        %s519 = smul.addr %s518, 4
        %s520 = scalar_lea.vmem %s1, %s519
        %p521 = pneg %p101
        %p522 = pneg %p98
        %p523 = scmp.lt.s32.totalorder %s36, 1
        %s524 = scalar_select %p523, %s36, 1
        %p525 = scmp.lt.s32.totalorder %s38, 0
        %s526 = scalar_select %p525, %s38, 0
        %s527 = smul.addr %s524, 4
        %s528 = sadd.s32 %s526, %s527
        %s529 = smul.addr %s528, 4
        %s530 = scalar_lea.vmem %s2, %s529
        %p531 = pneg %p129
        %p532 = pneg %p126
        %s533 = sand.u32 %s144, 1
        %s534 = scalar_lea.sflag [#allocation6], %s533
        %s535 = sand.u32 %s144, 1
        %s536 = smul.addr %s535, 16
        %s537 = scalar_lea.vmem [#allocation5], %s536
        %p538 = pneg %p157
        %p539 = pneg %p154
        %p540 = pneg %p178
        %p541 = pneg %p175
        %p542 = pneg %p199
        %p543 = pneg %p196
        %p544 = pneg %p220
        %p545 = pneg %p217
        %p546 = pneg %p241
        %p547 = pneg %p238
        %p548 = pneg %p262
        %p549 = pneg %p259
        %p550 = pneg %p283
        %p551 = pneg %p280
        %p552 = pneg %p304
        %p553 = pneg %p301
        %p554 = pneg %p325
        %p555 = pneg %p322
        %p556 = pneg %p353
        %p557 = pneg %p350
        %s558 = sand.u32 %s340, 1
        %s559 = scalar_lea.sflag [#allocation7], %s558
        %s560 = sand.u32 %s340, 1
        %s561 = smul.addr %s560, 8
        %s562 = scalar_lea.vmem [#allocation13], %s561
        %p563 = scmp.lt.s32.totalorder %s36, 1
        %s564 = scalar_select %p563, %s36, 1
        %p565 = scmp.lt.s32.totalorder %s37, 0
        %s566 = scalar_select %p565, %s37, 0
        %s567 = sadd.s32 %s566, %s564
        %s568 = smul.addr %s567, 8
        %s569 = scalar_lea.vmem %s0, %s568
        %p570 = scmp.lt.s32.totalorder %s36, 1
        %s571 = scalar_select %p570, %s36, 1
        %p572 = scmp.lt.s32.totalorder %s37, 0
        %s573 = scalar_select %p572, %s37, 0
        %s574 = smul.addr %s571, 4
        %s575 = sadd.s32 %s573, %s574
        %s576 = smul.addr %s575, 4
        %s577 = scalar_lea.vmem %s1, %s576
        %p578 = scmp.lt.s32.totalorder %s36, 1
        %s579 = scalar_select %p578, %s36, 1
        %p580 = scmp.lt.s32.totalorder %s38, 0
        %s581 = scalar_select %p580, %s38, 0
        %s582 = smul.addr %s579, 4
        %s583 = sadd.s32 %s581, %s582
        %s584 = smul.addr %s583, 4
        %s585 = scalar_lea.vmem %s2, %s584
        %p587 = scmp.eq.s32.totalorder %s38, 0
        // Predicated region
        $region85: #{tpu_custom_call.1} parent=67 // pred_check
          %p588 = pneg %p587
        $region86: #{tpu_custom_call.1} parent=67 // pred_check_branch
          %590 = sbr.rel (%p588) target = $region88
        $region87: #{tpu_custom_call.1} parent=67 // pred_region
          %vm591 = vcmask 7168
          %592 = vst.msk [vmem:[#allocation2] sm:$0xff] %vm591, -1e+30
          %593 = vst.msk [vmem:[#allocation2 + $0x8] sm:$0xff] %vm591, -1e+30
          %594 = vst.msk [vmem:[#allocation2 + $0x10] sm:$0xff] %vm591, -1e+30
          %595 = vst.msk [vmem:[#allocation2 + $0x18] sm:$0xff] %vm591, -1e+30
          %596 = vst.msk [vmem:[#allocation3] sm:$0xff] %vm591, 0.0
          %597 = vst.msk [vmem:[#allocation3 + $0x8] sm:$0xff] %vm591, 0.0
          %598 = vst.msk [vmem:[#allocation3 + $0x10] sm:$0xff] %vm591, 0.0
          %599 = vst.msk [vmem:[#allocation3 + $0x18] sm:$0xff] %vm591, 0.0
          %vm600 = vcmask 64512
          %601 = vst.msk [vmem:[#allocation4] sm:$0xff] %vm600, 0.0
          %602 = vst.msk [vmem:[#allocation4 + $0x8] sm:$0xff] %vm600, 0.0
          %603 = vst.msk [vmem:[#allocation4 + $0x10] sm:$0xff] %vm600, 0.0
          %604 = vst.msk [vmem:[#allocation4 + $0x18] sm:$0xff] %vm600, 0.0
        $region88: #{tpu_custom_call.1} parent=67 // pred_fallthru
          _
        %v605 = vld [vmem:[%s577] sm:$0xf]
        %v606 = vld [vmem:[%s577 + $0x4] sm:$0xf]
        %v607 = vld [vmem:[%s577 + $0x8] sm:$0xf]
        %v608 = vld [vmem:[%s577 + $0xc] sm:$0xf]
        %v609 = vld [vmem:[%s585] sm:$0xf]
        %v610 = vld [vmem:[%s585 + $0x4] sm:$0xf]
        %v611 = vld [vmem:[%s585 + $0x8] sm:$0xf]
        %v612 = vld [vmem:[%s585 + $0xc] sm:$0xf]
        %v613 = vld [vmem:[%s487] sm:$0xf]
        %v614 = vld [vmem:[%s487 + $0x4] sm:$0xf]
        %v615 = vld [vmem:[%s487 + $0x8] sm:$0xf]
        %v616 = vld [vmem:[%s487 + $0xc] sm:$0xf]
        %vm617 = vcmask 64512
        %v619 = vsel %vm617, %v605, 0
        %v622 = vsel %vm617, %v609, 0
        %624 = vmatprep.subr.bf16.mxu0 0
        %625 = vmatpush1.bf16.xpose.msra.mxu0 %v622
        %626 = vmatprep.subr.bf16.mxu0 0
        %627 = vmatpush1.bf16.xpose.msra.mxu0 0
        %628 = vmatprep.subr.bf16.mxu0 0
        %629 = vmatpush1.bf16.xpose.msra.mxu0 0
        %630 = vmatprep.subr.bf16.mxu0 0
        %631 = vmatpush1.bf16.xpose.msra.mxu0 0
        %632 = vmatprep.subr.bf16.mxu0 0
        %633 = vmatpush1.bf16.xpose.msra.mxu0 0
        %634 = vmatprep.subr.bf16.mxu0 0
        %635 = vmatpush1.bf16.xpose.msra.mxu0 0
        %636 = vmatprep.subr.bf16.mxu0 0
        %637 = vmatpush1.bf16.xpose.msra.mxu0 0
        %638 = vmatprep.subr.bf16.mxu0 0
        %639 = vmatpush1.bf16.xpose.msra.mxu0 0
        %640 = vmatprep.subr.bf16.mxu0 0
        %641 = vmatpush1.bf16.xpose.msra.mxu0 0
        %642 = vmatprep.subr.bf16.mxu0 0
        %643 = vmatpush1.bf16.xpose.msra.mxu0 0
        %644 = vmatprep.subr.bf16.mxu0 0
        %645 = vmatpush1.bf16.xpose.msra.mxu0 0
        %646 = vmatprep.subr.bf16.mxu0 0
        %647 = vmatpush1.bf16.xpose.msra.mxu0 0
        %648 = vmatprep.subr.bf16.mxu0 0
        %649 = vmatpush1.bf16.xpose.msra.mxu0 0
        %650 = vmatprep.subr.bf16.mxu0 0
        %651 = vmatpush1.bf16.xpose.msra.mxu0 0
        %652 = vmatprep.subr.bf16.mxu0 0
        %653 = vmatpush1.bf16.xpose.msra.mxu0 0
        %654 = vmatprep.subr.bf16.mxu0 0
        %655 = vmatpush1.bf16.xpose.msra.mxu0 0
        %656 = vmatprep.mubr.bf16.mxu0 0
        %657 = vmatmul.mubr.bf16.gmra.mrb[0].mxu0 %v619
        %v658 = vpop.f32.mrb[0].mxu0
        %v659 = vadd.f32 0.0, %v658
        %v660 = vpop.f32.mrb[0].mxu0
        %v661 = vpop.f32.mrb[0].mxu0
        %v662 = vpop.f32.mrb[0].mxu0
        %663 = vdwg.mxu0
        %v665 = vsel %vm617, %v606, 0
        %v668 = vsel %vm617, %v610, 0
        %670 = vmatprep.subr.bf16.mxu0 0
        %671 = vmatpush1.bf16.xpose.msra.mxu0 %v668
        %672 = vmatprep.subr.bf16.mxu0 0
        %673 = vmatpush1.bf16.xpose.msra.mxu0 0
        %674 = vmatprep.subr.bf16.mxu0 0
        %675 = vmatpush1.bf16.xpose.msra.mxu0 0
        %676 = vmatprep.subr.bf16.mxu0 0
        %677 = vmatpush1.bf16.xpose.msra.mxu0 0
        %678 = vmatprep.subr.bf16.mxu0 0
        %679 = vmatpush1.bf16.xpose.msra.mxu0 0
        %680 = vmatprep.subr.bf16.mxu0 0
        %681 = vmatpush1.bf16.xpose.msra.mxu0 0
        %682 = vmatprep.subr.bf16.mxu0 0
        %683 = vmatpush1.bf16.xpose.msra.mxu0 0
        %684 = vmatprep.subr.bf16.mxu0 0
        %685 = vmatpush1.bf16.xpose.msra.mxu0 0
        %686 = vmatprep.subr.bf16.mxu0 0
        %687 = vmatpush1.bf16.xpose.msra.mxu0 0
        %688 = vmatprep.subr.bf16.mxu0 0
        %689 = vmatpush1.bf16.xpose.msra.mxu0 0
        %690 = vmatprep.subr.bf16.mxu0 0
        %691 = vmatpush1.bf16.xpose.msra.mxu0 0
        %692 = vmatprep.subr.bf16.mxu0 0
        %693 = vmatpush1.bf16.xpose.msra.mxu0 0
        %694 = vmatprep.subr.bf16.mxu0 0
        %695 = vmatpush1.bf16.xpose.msra.mxu0 0
        %696 = vmatprep.subr.bf16.mxu0 0
        %697 = vmatpush1.bf16.xpose.msra.mxu0 0
        %698 = vmatprep.subr.bf16.mxu0 0
        %699 = vmatpush1.bf16.xpose.msra.mxu0 0
        %700 = vmatprep.subr.bf16.mxu0 0
        %701 = vmatpush1.bf16.xpose.msra.mxu0 0
        %702 = vmatprep.mubr.bf16.mxu0 0
        %703 = vmatmul.mubr.bf16.gmra.mrb[0].mxu0 %v665
        %v704 = vpop.f32.mrb[0].mxu0
        %v705 = vadd.f32 0.0, %v704
        %v706 = vpop.f32.mrb[0].mxu0
        %v707 = vpop.f32.mrb[0].mxu0
        %v708 = vpop.f32.mrb[0].mxu0
        %709 = vdwg.mxu0
        %v711 = vsel %vm617, %v607, 0
        %v714 = vsel %vm617, %v611, 0
        %716 = vmatprep.subr.bf16.mxu0 0
        %717 = vmatpush1.bf16.xpose.msra.mxu0 %v714
        %718 = vmatprep.subr.bf16.mxu0 0
        %719 = vmatpush1.bf16.xpose.msra.mxu0 0
        %720 = vmatprep.subr.bf16.mxu0 0
        %721 = vmatpush1.bf16.xpose.msra.mxu0 0
        %722 = vmatprep.subr.bf16.mxu0 0
        %723 = vmatpush1.bf16.xpose.msra.mxu0 0
        %724 = vmatprep.subr.bf16.mxu0 0
        %725 = vmatpush1.bf16.xpose.msra.mxu0 0
        %726 = vmatprep.subr.bf16.mxu0 0
        %727 = vmatpush1.bf16.xpose.msra.mxu0 0
        %728 = vmatprep.subr.bf16.mxu0 0
        %729 = vmatpush1.bf16.xpose.msra.mxu0 0
        %730 = vmatprep.subr.bf16.mxu0 0
        %731 = vmatpush1.bf16.xpose.msra.mxu0 0
        %732 = vmatprep.subr.bf16.mxu0 0
        %733 = vmatpush1.bf16.xpose.msra.mxu0 0
        %734 = vmatprep.subr.bf16.mxu0 0
        %735 = vmatpush1.bf16.xpose.msra.mxu0 0
        %736 = vmatprep.subr.bf16.mxu0 0
        %737 = vmatpush1.bf16.xpose.msra.mxu0 0
        %738 = vmatprep.subr.bf16.mxu0 0
        %739 = vmatpush1.bf16.xpose.msra.mxu0 0
        %740 = vmatprep.subr.bf16.mxu0 0
        %741 = vmatpush1.bf16.xpose.msra.mxu0 0
        %742 = vmatprep.subr.bf16.mxu0 0
        %743 = vmatpush1.bf16.xpose.msra.mxu0 0
        %744 = vmatprep.subr.bf16.mxu0 0
        %745 = vmatpush1.bf16.xpose.msra.mxu0 0
        %746 = vmatprep.subr.bf16.mxu0 0
        %747 = vmatpush1.bf16.xpose.msra.mxu0 0
        %748 = vmatprep.mubr.bf16.mxu0 0
        %749 = vmatmul.mubr.bf16.gmra.mrb[0].mxu0 %v711
        %v750 = vpop.f32.mrb[0].mxu0
        %v751 = vadd.f32 0.0, %v750
        %v752 = vpop.f32.mrb[0].mxu0
        %v753 = vpop.f32.mrb[0].mxu0
        %v754 = vpop.f32.mrb[0].mxu0
        %755 = vdwg.mxu0
        %v757 = vsel %vm617, %v608, 0
        %v760 = vsel %vm617, %v612, 0
        %762 = vmatprep.subr.bf16.mxu0 0
        %763 = vmatpush1.bf16.xpose.msra.mxu0 %v760
        %764 = vmatprep.subr.bf16.mxu0 0
        %765 = vmatpush1.bf16.xpose.msra.mxu0 0
        %766 = vmatprep.subr.bf16.mxu0 0
        %767 = vmatpush1.bf16.xpose.msra.mxu0 0
        %768 = vmatprep.subr.bf16.mxu0 0
        %769 = vmatpush1.bf16.xpose.msra.mxu0 0
        %770 = vmatprep.subr.bf16.mxu0 0
        %771 = vmatpush1.bf16.xpose.msra.mxu0 0
        %772 = vmatprep.subr.bf16.mxu0 0
        %773 = vmatpush1.bf16.xpose.msra.mxu0 0
        %774 = vmatprep.subr.bf16.mxu0 0
        %775 = vmatpush1.bf16.xpose.msra.mxu0 0
        %776 = vmatprep.subr.bf16.mxu0 0
        %777 = vmatpush1.bf16.xpose.msra.mxu0 0
        %778 = vmatprep.subr.bf16.mxu0 0
        %779 = vmatpush1.bf16.xpose.msra.mxu0 0
        %780 = vmatprep.subr.bf16.mxu0 0
        %781 = vmatpush1.bf16.xpose.msra.mxu0 0
        %782 = vmatprep.subr.bf16.mxu0 0
        %783 = vmatpush1.bf16.xpose.msra.mxu0 0
        %784 = vmatprep.subr.bf16.mxu0 0
        %785 = vmatpush1.bf16.xpose.msra.mxu0 0
        %786 = vmatprep.subr.bf16.mxu0 0
        %787 = vmatpush1.bf16.xpose.msra.mxu0 0
        %788 = vmatprep.subr.bf16.mxu0 0
        %789 = vmatpush1.bf16.xpose.msra.mxu0 0
        %790 = vmatprep.subr.bf16.mxu0 0
        %791 = vmatpush1.bf16.xpose.msra.mxu0 0
        %792 = vmatprep.subr.bf16.mxu0 0
        %793 = vmatpush1.bf16.xpose.msra.mxu0 0
        %794 = vmatprep.mubr.bf16.mxu0 0
        %795 = vmatmul.mubr.bf16.gmra.mrb[0].mxu0 %v757
        %v796 = vpop.f32.mrb[0].mxu0
        %v797 = vadd.f32 0.0, %v796
        %v798 = vpop.f32.mrb[0].mxu0
        %v799 = vpop.f32.mrb[0].mxu0
        %v800 = vpop.f32.mrb[0].mxu0
        %801 = vdwg.mxu0
        %v802 = vld [vmem:[#allocation2] sm:$0xff]
        %v803 = vld [vmem:[#allocation2 + $0x8] sm:$0xff]
        %v804 = vld [vmem:[#allocation2 + $0x10] sm:$0xff]
        %v805 = vld [vmem:[#allocation2 + $0x18] sm:$0xff]
        %v806 = vsel %vm617, %v659, -inf
        %807 = vmax.xlane.f32.xlu0 %v806
        %v808 = vpop.xlane.xlu0 %807
        %v809 = vsel %vm617, %v705, -inf
        %810 = vmax.xlane.f32.xlu0 %v809
        %v811 = vpop.xlane.xlu0 %810
        %v812 = vsel %vm617, %v751, -inf
        %813 = vmax.xlane.f32.xlu0 %v812
        %v814 = vpop.xlane.xlu0 %813
        %v815 = vsel %vm617, %v797, -inf
        %816 = vmax.xlane.f32.xlu0 %v815
        %v817 = vpop.xlane.xlu0 %816
        %v818 = vmax.f32 %v802, %v808
        %v819 = vmax.f32 %v803, %v811
        %v820 = vmax.f32 %v804, %v814
        %v821 = vmax.f32 %v805, %v817
        %v822 = vsub.f32 %v802, %v818
        %v823 = vsub.f32 %v803, %v819
        %v824 = vsub.f32 %v804, %v820
        %v825 = vsub.f32 %v805, %v821
        %v826 = vmul.f32 %v822, 1.442695
        %v827 = vpow.pop %v826
        %v828 = vmul.f32 %v823, 1.442695
        %v829 = vpow.pop %v828
        %v830 = vmul.f32 %v824, 1.442695
        %v831 = vpow.pop %v830
        %v832 = vmul.f32 %v825, 1.442695
        %v833 = vpow.pop %v832
        %835 = vset.pattern.permute.xlu0 0
        %836 = vperm.xlu0 %835, %v818
        %v837 = vpop.permute.xlu0 %836
        %840 = vset.pattern.permute.xlu0 0
        %841 = vperm.xlu0 %840, %v819
        %v842 = vpop.permute.xlu0 %841
        %845 = vset.pattern.permute.xlu0 0
        %846 = vperm.xlu0 %845, %v820
        %v847 = vpop.permute.xlu0 %846
        %850 = vset.pattern.permute.xlu0 0
        %851 = vperm.xlu0 %850, %v821
        %v852 = vpop.permute.xlu0 %851
        %v854 = vsub.f32 %v659, %v837
        %v855 = vsub.f32 %v705, %v842
        %v856 = vsub.f32 %v751, %v847
        %v857 = vsub.f32 %v797, %v852
        %v858 = vmul.f32 %v854, 1.442695
        %v859 = vpow.pop %v858
        %v860 = vmul.f32 %v855, 1.442695
        %v861 = vpow.pop %v860
        %v862 = vmul.f32 %v856, 1.442695
        %v863 = vpow.pop %v862
        %v864 = vmul.f32 %v857, 1.442695
        %v865 = vpow.pop %v864
        %v866 = vld [vmem:[#allocation3] sm:$0xff]
        %v867 = vld [vmem:[#allocation3 + $0x8] sm:$0xff]
        %v868 = vld [vmem:[#allocation3 + $0x10] sm:$0xff]
        %v869 = vld [vmem:[#allocation3 + $0x18] sm:$0xff]
        %v870 = vmul.f32 %v827, %v866
        %v871 = vmul.f32 %v829, %v867
        %v872 = vmul.f32 %v831, %v868
        %v873 = vmul.f32 %v833, %v869
        %v874 = vsel %vm617, %v859, 0.0
        %875 = vadd.xlane.f32.xlu0 %v874
        %v876 = vpop.xlane.xlu0 %875
        %v877 = vsel %vm617, %v861, 0.0
        %878 = vadd.xlane.f32.xlu0 %v877
        %v879 = vpop.xlane.xlu0 %878
        %v880 = vsel %vm617, %v863, 0.0
        %881 = vadd.xlane.f32.xlu0 %v880
        %v882 = vpop.xlane.xlu0 %881
        %v883 = vsel %vm617, %v865, 0.0
        %884 = vadd.xlane.f32.xlu0 %v883
        %v885 = vpop.xlane.xlu0 %884
        %v886 = vadd.f32 %v870, %v876
        %v887 = vadd.f32 %v871, %v879
        %v888 = vadd.f32 %v872, %v882
        %v889 = vadd.f32 %v873, %v885
        %vm890 = vcmask 7168
        %891 = vst.msk [vmem:[#allocation3] sm:$0xff] %vm890, %v886
        %892 = vst.msk [vmem:[#allocation3 + $0x8] sm:$0xff] %vm890, %v887
        %893 = vst.msk [vmem:[#allocation3 + $0x10] sm:$0xff] %vm890, %v888
        %894 = vst.msk [vmem:[#allocation3 + $0x18] sm:$0xff] %vm890, %v889
        %v895 = vpack.c.bf16 %v859, %v859
        %v896 = vpack.c.bf16 %v861, %v861
        %v897 = vpack.c.bf16 %v863, %v863
        %v898 = vpack.c.bf16 %v865, %v865
        %v900 = vsel %vm617, %v895, 0
        %vm902 = vcmask 1043456
        %v904 = vsel %vm902, %v613, 0
        %906 = vmatprep.subr.bf16.mxu0 0
        %907 = vmatpush1.bf16.msra.mxu0 %v904
        %908 = vmatprep.subr.bf16.mxu0 0
        %909 = vmatpush1.bf16.msra.mxu0 0
        %910 = vmatprep.subr.bf16.mxu0 0
        %911 = vmatpush1.bf16.msra.mxu0 0
        %912 = vmatprep.subr.bf16.mxu0 0
        %913 = vmatpush1.bf16.msra.mxu0 0
        %914 = vmatprep.subr.bf16.mxu0 0
        %915 = vmatpush1.bf16.msra.mxu0 0
        %916 = vmatprep.subr.bf16.mxu0 0
        %917 = vmatpush1.bf16.msra.mxu0 0
        %918 = vmatprep.subr.bf16.mxu0 0
        %919 = vmatpush1.bf16.msra.mxu0 0
        %920 = vmatprep.subr.bf16.mxu0 0
        %921 = vmatpush1.bf16.msra.mxu0 0
        %922 = vmatprep.subr.bf16.mxu0 0
        %923 = vmatpush1.bf16.msra.mxu0 0
        %924 = vmatprep.subr.bf16.mxu0 0
        %925 = vmatpush1.bf16.msra.mxu0 0
        %926 = vmatprep.subr.bf16.mxu0 0
        %927 = vmatpush1.bf16.msra.mxu0 0
        %928 = vmatprep.subr.bf16.mxu0 0
        %929 = vmatpush1.bf16.msra.mxu0 0
        %930 = vmatprep.subr.bf16.mxu0 0
        %931 = vmatpush1.bf16.msra.mxu0 0
        %932 = vmatprep.subr.bf16.mxu0 0
        %933 = vmatpush1.bf16.msra.mxu0 0
        %934 = vmatprep.subr.bf16.mxu0 0
        %935 = vmatpush1.bf16.msra.mxu0 0
        %936 = vmatprep.subr.bf16.mxu0 0
        %937 = vmatpush1.bf16.msra.mxu0 0
        %938 = vmatprep.mubr.bf16.mxu0 0
        %939 = vmatmul.mubr.bf16.gmra.mrb[0].mxu0 %v900
        %v940 = vpop.f32.mrb[0].mxu0
        %v941 = vadd.f32 0.0, %v940
        %v942 = vpop.f32.mrb[0].mxu0
        %v943 = vpop.f32.mrb[0].mxu0
        %v944 = vpop.f32.mrb[0].mxu0
        %945 = vdwg.mxu0
        %v947 = vsel %vm617, %v896, 0
        %v950 = vsel %vm902, %v614, 0
        %952 = vmatprep.subr.bf16.mxu0 0
        %953 = vmatpush1.bf16.msra.mxu0 %v950
        %954 = vmatprep.subr.bf16.mxu0 0
        %955 = vmatpush1.bf16.msra.mxu0 0
        %956 = vmatprep.subr.bf16.mxu0 0
        %957 = vmatpush1.bf16.msra.mxu0 0
        %958 = vmatprep.subr.bf16.mxu0 0
        %959 = vmatpush1.bf16.msra.mxu0 0
        %960 = vmatprep.subr.bf16.mxu0 0
        %961 = vmatpush1.bf16.msra.mxu0 0
        %962 = vmatprep.subr.bf16.mxu0 0
        %963 = vmatpush1.bf16.msra.mxu0 0
        %964 = vmatprep.subr.bf16.mxu0 0
        %965 = vmatpush1.bf16.msra.mxu0 0
        %966 = vmatprep.subr.bf16.mxu0 0
        %967 = vmatpush1.bf16.msra.mxu0 0
        %968 = vmatprep.subr.bf16.mxu0 0
        %969 = vmatpush1.bf16.msra.mxu0 0
        %970 = vmatprep.subr.bf16.mxu0 0
        %971 = vmatpush1.bf16.msra.mxu0 0
        %972 = vmatprep.subr.bf16.mxu0 0
        %973 = vmatpush1.bf16.msra.mxu0 0
        %974 = vmatprep.subr.bf16.mxu0 0
        %975 = vmatpush1.bf16.msra.mxu0 0
        %976 = vmatprep.subr.bf16.mxu0 0
        %977 = vmatpush1.bf16.msra.mxu0 0
        %978 = vmatprep.subr.bf16.mxu0 0
        %979 = vmatpush1.bf16.msra.mxu0 0
        %980 = vmatprep.subr.bf16.mxu0 0
        %981 = vmatpush1.bf16.msra.mxu0 0
        %982 = vmatprep.subr.bf16.mxu0 0
        %983 = vmatpush1.bf16.msra.mxu0 0
        %984 = vmatprep.mubr.bf16.mxu0 0
        %985 = vmatmul.mubr.bf16.gmra.mrb[0].mxu0 %v947
        %v986 = vpop.f32.mrb[0].mxu0
        %v987 = vadd.f32 0.0, %v986
        %v988 = vpop.f32.mrb[0].mxu0
        %v989 = vpop.f32.mrb[0].mxu0
        %v990 = vpop.f32.mrb[0].mxu0
        %991 = vdwg.mxu0
        %v993 = vsel %vm617, %v897, 0
        %v996 = vsel %vm902, %v615, 0
        %998 = vmatprep.subr.bf16.mxu0 0
        %999 = vmatpush1.bf16.msra.mxu0 %v996
        %1000 = vmatprep.subr.bf16.mxu0 0
        %1001 = vmatpush1.bf16.msra.mxu0 0
        %1002 = vmatprep.subr.bf16.mxu0 0
        %1003 = vmatpush1.bf16.msra.mxu0 0
        %1004 = vmatprep.subr.bf16.mxu0 0
        %1005 = vmatpush1.bf16.msra.mxu0 0
        %1006 = vmatprep.subr.bf16.mxu0 0
        %1007 = vmatpush1.bf16.msra.mxu0 0
        %1008 = vmatprep.subr.bf16.mxu0 0
        %1009 = vmatpush1.bf16.msra.mxu0 0
        %1010 = vmatprep.subr.bf16.mxu0 0
        %1011 = vmatpush1.bf16.msra.mxu0 0
        %1012 = vmatprep.subr.bf16.mxu0 0
        %1013 = vmatpush1.bf16.msra.mxu0 0
        %1014 = vmatprep.subr.bf16.mxu0 0
        %1015 = vmatpush1.bf16.msra.mxu0 0
        %1016 = vmatprep.subr.bf16.mxu0 0
        %1017 = vmatpush1.bf16.msra.mxu0 0
        %1018 = vmatprep.subr.bf16.mxu0 0
        %1019 = vmatpush1.bf16.msra.mxu0 0
        %1020 = vmatprep.subr.bf16.mxu0 0
        %1021 = vmatpush1.bf16.msra.mxu0 0
        %1022 = vmatprep.subr.bf16.mxu0 0
        %1023 = vmatpush1.bf16.msra.mxu0 0
        %1024 = vmatprep.subr.bf16.mxu0 0
        %1025 = vmatpush1.bf16.msra.mxu0 0
        %1026 = vmatprep.subr.bf16.mxu0 0
        %1027 = vmatpush1.bf16.msra.mxu0 0
        %1028 = vmatprep.subr.bf16.mxu0 0
        %1029 = vmatpush1.bf16.msra.mxu0 0
        %1030 = vmatprep.mubr.bf16.mxu0 0
        %1031 = vmatmul.mubr.bf16.gmra.mrb[0].mxu0 %v993
        %v1032 = vpop.f32.mrb[0].mxu0
        %v1033 = vadd.f32 0.0, %v1032
        %v1034 = vpop.f32.mrb[0].mxu0
        %v1035 = vpop.f32.mrb[0].mxu0
        %v1036 = vpop.f32.mrb[0].mxu0
        %1037 = vdwg.mxu0
        %v1039 = vsel %vm617, %v898, 0
        %v1042 = vsel %vm902, %v616, 0
        %1044 = vmatprep.subr.bf16.mxu0 0
        %1045 = vmatpush1.bf16.msra.mxu0 %v1042
        %1046 = vmatprep.subr.bf16.mxu0 0
        %1047 = vmatpush1.bf16.msra.mxu0 0
        %1048 = vmatprep.subr.bf16.mxu0 0
        %1049 = vmatpush1.bf16.msra.mxu0 0
        %1050 = vmatprep.subr.bf16.mxu0 0
        %1051 = vmatpush1.bf16.msra.mxu0 0
        %1052 = vmatprep.subr.bf16.mxu0 0
        %1053 = vmatpush1.bf16.msra.mxu0 0
        %1054 = vmatprep.subr.bf16.mxu0 0
        %1055 = vmatpush1.bf16.msra.mxu0 0
        %1056 = vmatprep.subr.bf16.mxu0 0
        %1057 = vmatpush1.bf16.msra.mxu0 0
        %1058 = vmatprep.subr.bf16.mxu0 0
        %1059 = vmatpush1.bf16.msra.mxu0 0
        %1060 = vmatprep.subr.bf16.mxu0 0
        %1061 = vmatpush1.bf16.msra.mxu0 0
        %1062 = vmatprep.subr.bf16.mxu0 0
        %1063 = vmatpush1.bf16.msra.mxu0 0
        %1064 = vmatprep.subr.bf16.mxu0 0
        %1065 = vmatpush1.bf16.msra.mxu0 0
        %1066 = vmatprep.subr.bf16.mxu0 0
        %1067 = vmatpush1.bf16.msra.mxu0 0
        %1068 = vmatprep.subr.bf16.mxu0 0
        %1069 = vmatpush1.bf16.msra.mxu0 0
        %1070 = vmatprep.subr.bf16.mxu0 0
        %1071 = vmatpush1.bf16.msra.mxu0 0
        %1072 = vmatprep.subr.bf16.mxu0 0
        %1073 = vmatpush1.bf16.msra.mxu0 0
        %1074 = vmatprep.subr.bf16.mxu0 0
        %1075 = vmatpush1.bf16.msra.mxu0 0
        %1076 = vmatprep.mubr.bf16.mxu0 0
        %1077 = vmatmul.mubr.bf16.gmra.mrb[0].mxu0 %v1039
        %v1078 = vpop.f32.mrb[0].mxu0
        %v1079 = vadd.f32 0.0, %v1078
        %v1080 = vpop.f32.mrb[0].mxu0
        %v1081 = vpop.f32.mrb[0].mxu0
        %v1082 = vpop.f32.mrb[0].mxu0
        %1083 = vdwg.mxu0
        %v1084 = vld [vmem:[#allocation4] sm:$0xff]
        %v1085 = vld [vmem:[#allocation4 + $0x8] sm:$0xff]
        %v1086 = vld [vmem:[#allocation4 + $0x10] sm:$0xff]
        %v1087 = vld [vmem:[#allocation4 + $0x18] sm:$0xff]
        %1089 = vset.pattern.permute.xlu0 0
        %1090 = vperm.xlu0 %1089, %v827
        %v1091 = vpop.permute.xlu0 %1090
        %1094 = vset.pattern.permute.xlu0 0
        %1095 = vperm.xlu0 %1094, %v829
        %v1096 = vpop.permute.xlu0 %1095
        %1099 = vset.pattern.permute.xlu0 0
        %1100 = vperm.xlu0 %1099, %v831
        %v1101 = vpop.permute.xlu0 %1100
        %1104 = vset.pattern.permute.xlu0 0
        %1105 = vperm.xlu0 %1104, %v833
        %v1106 = vpop.permute.xlu0 %1105
        %v1108 = vmul.f32 %v1091, %v1084
        %v1109 = vmul.f32 %v1096, %v1085
        %v1110 = vmul.f32 %v1101, %v1086
        %v1111 = vmul.f32 %v1106, %v1087
        %v1112 = vadd.f32 %v1108, %v941
        %v1113 = vadd.f32 %v1109, %v987
        %v1114 = vadd.f32 %v1110, %v1033
        %v1115 = vadd.f32 %v1111, %v1079
        %1116 = vst.msk [vmem:[#allocation4] sm:$0xff] %vm617, %v1112
        %1117 = vst.msk [vmem:[#allocation4 + $0x8] sm:$0xff] %vm617, %v1113
        %1118 = vst.msk [vmem:[#allocation4 + $0x10] sm:$0xff] %vm617, %v1114
        %1119 = vst.msk [vmem:[#allocation4 + $0x18] sm:$0xff] %vm617, %v1115
        %1120 = vst.msk [vmem:[#allocation2] sm:$0xff] %vm890, %v818
        %1121 = vst.msk [vmem:[#allocation2 + $0x8] sm:$0xff] %vm890, %v819
        %1122 = vst.msk [vmem:[#allocation2 + $0x10] sm:$0xff] %vm890, %v820
        %1123 = vst.msk [vmem:[#allocation2 + $0x18] sm:$0xff] %vm890, %v821
        // Predicated region
        $region89: #{tpu_custom_call.1} parent=67 // pred_check
          %p1124 = pneg %p587
        $region90: #{tpu_custom_call.1} parent=67 // pred_check_branch
          %1126 = sbr.rel (%p1124) target = $region92
        $region91: #{tpu_custom_call.1} parent=67 // pred_region
          %v1127 = vld [vmem:[#allocation4] sm:$0xff]
          %v1128 = vld [vmem:[#allocation4 + $0x8] sm:$0xff]
          %v1129 = vld [vmem:[#allocation4 + $0x10] sm:$0xff]
          %v1130 = vld [vmem:[#allocation4 + $0x18] sm:$0xff]
          %v1131 = vld [vmem:[#allocation3] sm:$0xff]
          %v1132 = vld [vmem:[#allocation3 + $0x8] sm:$0xff]
          %v1133 = vld [vmem:[#allocation3 + $0x10] sm:$0xff]
          %v1134 = vld [vmem:[#allocation3 + $0x18] sm:$0xff]
          %v1135 = vrcp.pop %v1131
          %v1136 = vrcp.pop %v1132
          %v1137 = vrcp.pop %v1133
          %v1138 = vrcp.pop %v1134
          %1140 = vset.pattern.permute.xlu0 0
          %1141 = vperm.xlu0 %1140, %v1135
          %v1142 = vpop.permute.xlu0 %1141
          %1145 = vset.pattern.permute.xlu0 0
          %1146 = vperm.xlu0 %1145, %v1136
          %v1147 = vpop.permute.xlu0 %1146
          %1150 = vset.pattern.permute.xlu0 0
          %1151 = vperm.xlu0 %1150, %v1137
          %v1152 = vpop.permute.xlu0 %1151
          %1155 = vset.pattern.permute.xlu0 0
          %1156 = vperm.xlu0 %1155, %v1138
          %v1157 = vpop.permute.xlu0 %1156
          %v1159 = vmul.f32 %v1127, %v1142
          %v1160 = vmul.f32 %v1128, %v1147
          %v1161 = vmul.f32 %v1129, %v1152
          %v1162 = vmul.f32 %v1130, %v1157
          %v1163 = vpack.c.bf16 %v1159, %v1159
          %v1164 = vpack.c.bf16 %v1160, %v1160
          %v1165 = vpack.c.bf16 %v1161, %v1161
          %v1166 = vpack.c.bf16 %v1162, %v1162
          %v1167 = vld [vmem:[#allocation8] sm:$0xf]
          %s1168 = scalar_lea.vmem [#allocation8], 4
          %v1169 = vld [vmem:[%s1168] sm:$0xf]
          %v1171 = vsel %vm617, %v1164, 0
          %v1174 = vsel %vm902, %v1169, 0
          %1176 = vmatprep.subr.bf16.mxu0 0
          %1177 = vmatpush1.bf16.msra.mxu0 %v1174
          %1178 = vmatprep.subr.bf16.mxu0 0
          %1179 = vmatpush1.bf16.msra.mxu0 0
          %1180 = vmatprep.subr.bf16.mxu0 0
          %1181 = vmatpush1.bf16.msra.mxu0 0
          %1182 = vmatprep.subr.bf16.mxu0 0
          %1183 = vmatpush1.bf16.msra.mxu0 0
          %1184 = vmatprep.subr.bf16.mxu0 0
          %1185 = vmatpush1.bf16.msra.mxu0 0
          %1186 = vmatprep.subr.bf16.mxu0 0
          %1187 = vmatpush1.bf16.msra.mxu0 0
          %1188 = vmatprep.subr.bf16.mxu0 0
          %1189 = vmatpush1.bf16.msra.mxu0 0
          %1190 = vmatprep.subr.bf16.mxu0 0
          %1191 = vmatpush1.bf16.msra.mxu0 0
          %1192 = vmatprep.subr.bf16.mxu0 0
          %1193 = vmatpush1.bf16.msra.mxu0 0
          %1194 = vmatprep.subr.bf16.mxu0 0
          %1195 = vmatpush1.bf16.msra.mxu0 0
          %1196 = vmatprep.subr.bf16.mxu0 0
          %1197 = vmatpush1.bf16.msra.mxu0 0
          %1198 = vmatprep.subr.bf16.mxu0 0
          %1199 = vmatpush1.bf16.msra.mxu0 0
          %1200 = vmatprep.subr.bf16.mxu0 0
          %1201 = vmatpush1.bf16.msra.mxu0 0
          %1202 = vmatprep.subr.bf16.mxu0 0
          %1203 = vmatpush1.bf16.msra.mxu0 0
          %1204 = vmatprep.subr.bf16.mxu0 0
          %1205 = vmatpush1.bf16.msra.mxu0 0
          %1206 = vmatprep.subr.bf16.mxu0 0
          %1207 = vmatpush1.bf16.msra.mxu0 0
          %1208 = vmatprep.mubr.bf16.mxu0 0
          %1209 = vmatmul.mubr.bf16.gmra.mrb[0].mxu0 %v1171
          %v1210 = vpop.f32.mrb[0].mxu0
          %v1211 = vadd.f32 0.0, %v1210
          %v1212 = vpop.f32.mrb[0].mxu0
          %v1213 = vpop.f32.mrb[0].mxu0
          %v1214 = vpop.f32.mrb[0].mxu0
          %1215 = vdwg.mxu0
          %v1217 = vsel %vm617, %v1163, 0
          %v1220 = vsel %vm902, %v1167, 0
          %1222 = vmatprep.subr.bf16.mxu0 0
          %1223 = vmatpush1.bf16.msra.mxu0 %v1220
          %1224 = vmatprep.subr.bf16.mxu0 0
          %1225 = vmatpush1.bf16.msra.mxu0 0
          %1226 = vmatprep.subr.bf16.mxu0 0
          %1227 = vmatpush1.bf16.msra.mxu0 0
          %1228 = vmatprep.subr.bf16.mxu0 0
          %1229 = vmatpush1.bf16.msra.mxu0 0
          %1230 = vmatprep.subr.bf16.mxu0 0
          %1231 = vmatpush1.bf16.msra.mxu0 0
          %1232 = vmatprep.subr.bf16.mxu0 0
          %1233 = vmatpush1.bf16.msra.mxu0 0
          %1234 = vmatprep.subr.bf16.mxu0 0
          %1235 = vmatpush1.bf16.msra.mxu0 0
          %1236 = vmatprep.subr.bf16.mxu0 0
          %1237 = vmatpush1.bf16.msra.mxu0 0
          %1238 = vmatprep.subr.bf16.mxu0 0
          %1239 = vmatpush1.bf16.msra.mxu0 0
          %1240 = vmatprep.subr.bf16.mxu0 0
          %1241 = vmatpush1.bf16.msra.mxu0 0
          %1242 = vmatprep.subr.bf16.mxu0 0
          %1243 = vmatpush1.bf16.msra.mxu0 0
          %1244 = vmatprep.subr.bf16.mxu0 0
          %1245 = vmatpush1.bf16.msra.mxu0 0
          %1246 = vmatprep.subr.bf16.mxu0 0
          %1247 = vmatpush1.bf16.msra.mxu0 0
          %1248 = vmatprep.subr.bf16.mxu0 0
          %1249 = vmatpush1.bf16.msra.mxu0 0
          %1250 = vmatprep.subr.bf16.mxu0 0
          %1251 = vmatpush1.bf16.msra.mxu0 0
          %1252 = vmatprep.subr.bf16.mxu0 0
          %1253 = vmatpush1.bf16.msra.mxu0 0
          %1254 = vmatprep.mubr.bf16.mxu0 0
          %1255 = vmatmul.mubr.bf16.gmra.mrb[0].mxu0 %v1217
          %v1256 = vpop.f32.mrb[0].mxu0
          %v1257 = vadd.f32 %v1211, %v1256
          %v1258 = vpop.f32.mrb[0].mxu0
          %v1259 = vpop.f32.mrb[0].mxu0
          %v1260 = vpop.f32.mrb[0].mxu0
          %1261 = vdwg.mxu0
          %s1262 = scalar_lea.vmem [#allocation8], 8
          %v1263 = vld [vmem:[%s1262] sm:$0xf]
          %v1265 = vsel %vm617, %v1165, 0
          %v1268 = vsel %vm902, %v1263, 0
          %1270 = vmatprep.subr.bf16.mxu0 0
          %1271 = vmatpush1.bf16.msra.mxu0 %v1268
          %1272 = vmatprep.subr.bf16.mxu0 0
          %1273 = vmatpush1.bf16.msra.mxu0 0
          %1274 = vmatprep.subr.bf16.mxu0 0
          %1275 = vmatpush1.bf16.msra.mxu0 0
          %1276 = vmatprep.subr.bf16.mxu0 0
          %1277 = vmatpush1.bf16.msra.mxu0 0
          %1278 = vmatprep.subr.bf16.mxu0 0
          %1279 = vmatpush1.bf16.msra.mxu0 0
          %1280 = vmatprep.subr.bf16.mxu0 0
          %1281 = vmatpush1.bf16.msra.mxu0 0
          %1282 = vmatprep.subr.bf16.mxu0 0
          %1283 = vmatpush1.bf16.msra.mxu0 0
          %1284 = vmatprep.subr.bf16.mxu0 0
          %1285 = vmatpush1.bf16.msra.mxu0 0
          %1286 = vmatprep.subr.bf16.mxu0 0
          %1287 = vmatpush1.bf16.msra.mxu0 0
          %1288 = vmatprep.subr.bf16.mxu0 0
          %1289 = vmatpush1.bf16.msra.mxu0 0
          %1290 = vmatprep.subr.bf16.mxu0 0
          %1291 = vmatpush1.bf16.msra.mxu0 0
          %1292 = vmatprep.subr.bf16.mxu0 0
          %1293 = vmatpush1.bf16.msra.mxu0 0
          %1294 = vmatprep.subr.bf16.mxu0 0
          %1295 = vmatpush1.bf16.msra.mxu0 0
          %1296 = vmatprep.subr.bf16.mxu0 0
          %1297 = vmatpush1.bf16.msra.mxu0 0
          %1298 = vmatprep.subr.bf16.mxu0 0
          %1299 = vmatpush1.bf16.msra.mxu0 0
          %1300 = vmatprep.subr.bf16.mxu0 0
          %1301 = vmatpush1.bf16.msra.mxu0 0
          %1302 = vmatprep.mubr.bf16.mxu0 0
          %1303 = vmatmul.mubr.bf16.gmra.mrb[0].mxu0 %v1265
          %v1304 = vpop.f32.mrb[0].mxu0
          %v1305 = vadd.f32 0.0, %v1304
          %v1306 = vpop.f32.mrb[0].mxu0
          %v1307 = vpop.f32.mrb[0].mxu0
          %v1308 = vpop.f32.mrb[0].mxu0
          %1309 = vdwg.mxu0
          %v1310 = vadd.f32 %v1257, %v1305
          %s1311 = scalar_lea.vmem [#allocation8], 12
          %v1312 = vld [vmem:[%s1311] sm:$0xf]
          %v1314 = vsel %vm617, %v1166, 0
          %v1317 = vsel %vm902, %v1312, 0
          %1319 = vmatprep.subr.bf16.mxu0 0
          %1320 = vmatpush1.bf16.msra.mxu0 %v1317
          %1321 = vmatprep.subr.bf16.mxu0 0
          %1322 = vmatpush1.bf16.msra.mxu0 0
          %1323 = vmatprep.subr.bf16.mxu0 0
          %1324 = vmatpush1.bf16.msra.mxu0 0
          %1325 = vmatprep.subr.bf16.mxu0 0
          %1326 = vmatpush1.bf16.msra.mxu0 0
          %1327 = vmatprep.subr.bf16.mxu0 0
          %1328 = vmatpush1.bf16.msra.mxu0 0
          %1329 = vmatprep.subr.bf16.mxu0 0
          %1330 = vmatpush1.bf16.msra.mxu0 0
          %1331 = vmatprep.subr.bf16.mxu0 0
          %1332 = vmatpush1.bf16.msra.mxu0 0
          %1333 = vmatprep.subr.bf16.mxu0 0
          %1334 = vmatpush1.bf16.msra.mxu0 0
          %1335 = vmatprep.subr.bf16.mxu0 0
          %1336 = vmatpush1.bf16.msra.mxu0 0
          %1337 = vmatprep.subr.bf16.mxu0 0
          %1338 = vmatpush1.bf16.msra.mxu0 0
          %1339 = vmatprep.subr.bf16.mxu0 0
          %1340 = vmatpush1.bf16.msra.mxu0 0
          %1341 = vmatprep.subr.bf16.mxu0 0
          %1342 = vmatpush1.bf16.msra.mxu0 0
          %1343 = vmatprep.subr.bf16.mxu0 0
          %1344 = vmatpush1.bf16.msra.mxu0 0
          %1345 = vmatprep.subr.bf16.mxu0 0
          %1346 = vmatpush1.bf16.msra.mxu0 0
          %1347 = vmatprep.subr.bf16.mxu0 0
          %1348 = vmatpush1.bf16.msra.mxu0 0
          %1349 = vmatprep.subr.bf16.mxu0 0
          %1350 = vmatpush1.bf16.msra.mxu0 0
          %1351 = vmatprep.mubr.bf16.mxu0 0
          %1352 = vmatmul.mubr.bf16.gmra.mrb[0].mxu0 %v1314
          %v1353 = vpop.f32.mrb[0].mxu0
          %v1354 = vadd.f32 0.0, %v1353
          %v1355 = vpop.f32.mrb[0].mxu0
          %v1356 = vpop.f32.mrb[0].mxu0
          %v1357 = vpop.f32.mrb[0].mxu0
          %1358 = vdwg.mxu0
          %v1359 = vadd.f32 %v1310, %v1354
          %v1360 = vld [vmem:[%s569] sm:$0xff]
          %v1361 = vadd.f32 %v1360, %v1359
          %v1362 = vld [vmem:[%s5] sm:$0x1]
          %v1364 = vlaneseq
          %v1365 = vshrl.u32 %v1364, 7
          %v1366 = vsub.s32 0, %v1365
          %v1367 = vrot.slane %v1362, %v1366
          %v1369 = vadd.f32 %v1361, %v1367
          %v1370 = vld [vmem:[%s6] sm:$0x1]
          %v1371 = vld [vmem:[#allocation10] sm:$0x1]
          %vm1372 = vcmask 261120
          %v1373 = vsel %vm1372, %v1369, 0.0
          %1374 = vadd.xlane.f32.xlu0 %v1373
          %v1375 = vpop.xlane.xlu0 %1374
          %v1376 = vrcp.pop 32.0
          %v1377 = vmul.f32 %v1375, %v1376
          %v1378 = vsub.f32 %v1369, %v1377
          %v1379 = vmul.f32 %v1378, %v1378
          %v1380 = vsel %vm1372, %v1379, 0.0
          %1381 = vadd.xlane.f32.xlu0 %v1380
          %v1382 = vpop.xlane.xlu0 %1381
          %v1383 = vmul.f32 %v1382, %v1376
          %v1384 = vadd.f32 %v1383, 1e-05
          %v1385 = vrsqrt.pop %v1384
          %v1386 = vmul.f32 %v1378, %v1385
          %v1388 = vlaneseq
          %v1389 = vshrl.u32 %v1388, 7
          %v1390 = vsub.s32 0, %v1389
          %v1391 = vrot.slane %v1370, %v1390
          %v1393 = vmul.f32 %v1386, %v1391
          %v1395 = vlaneseq
          %v1396 = vshrl.u32 %v1395, 7
          %v1397 = vsub.s32 0, %v1396
          %v1398 = vrot.slane %v1371, %v1397
          %v1400 = vadd.f32 %v1393, %v1398
          %v1401 = vpack.c.bf16 %v1400, %v1400
          %v1402 = vld [vmem:[%s8] sm:$0xf]
          %v1403 = vld [vmem:[%s8 + $0x4] sm:$0xf]
          %v1404 = vld [vmem:[%s8 + $0x8] sm:$0xf]
          %v1405 = vld [vmem:[%s8 + $0xc] sm:$0xf]
          %v1406 = vld [vmem:[#allocation11] sm:$0x1]
          %v1408 = vlaneseq
          %v1409 = vshrl.u32 %v1408, 7
          %v1410 = vsub.s32 0, %v1409
          %v1411 = vrot.slane %v1406, %v1410
          %v1417 = vunpack.c.l.b16 %v1402
          %v1418 = vunpack.c.l.b16 %v1403
          %v1419 = vunpack.c.l.b16 %v1404
          %v1420 = vunpack.c.l.b16 %v1405
          %v1421 = vpack.c.b16 %v1418, %v1417
          %v1422 = vpack.c.b16 %v1420, %v1419
          %v1426 = vsel %vm1372, %v1401, 0
          %1428 = vmatprep.subr.bf16.mxu0 0
          %1429 = vmatpush1.bf16.msra.mxu0 %v1421
          %1430 = vmatprep.subr.bf16.mxu0 0
          %1431 = vmatpush1.bf16.msra.mxu0 %v1422
          %1432 = vmatprep.subr.bf16.mxu0 0
          %1433 = vmatpush1.bf16.msra.mxu0 0
          %1434 = vmatprep.subr.bf16.mxu0 0
          %1435 = vmatpush1.bf16.msra.mxu0 0
          %1436 = vmatprep.subr.bf16.mxu0 0
          %1437 = vmatpush1.bf16.msra.mxu0 0
          %1438 = vmatprep.subr.bf16.mxu0 0
          %1439 = vmatpush1.bf16.msra.mxu0 0
          %1440 = vmatprep.subr.bf16.mxu0 0
          %1441 = vmatpush1.bf16.msra.mxu0 0
          %1442 = vmatprep.subr.bf16.mxu0 0
          %1443 = vmatpush1.bf16.msra.mxu0 0
          %1444 = vmatprep.subr.bf16.mxu0 0
          %1445 = vmatpush1.bf16.msra.mxu0 0
          %1446 = vmatprep.subr.bf16.mxu0 0
          %1447 = vmatpush1.bf16.msra.mxu0 0
          %1448 = vmatprep.subr.bf16.mxu0 0
          %1449 = vmatpush1.bf16.msra.mxu0 0
          %1450 = vmatprep.subr.bf16.mxu0 0
          %1451 = vmatpush1.bf16.msra.mxu0 0
          %1452 = vmatprep.subr.bf16.mxu0 0
          %1453 = vmatpush1.bf16.msra.mxu0 0
          %1454 = vmatprep.subr.bf16.mxu0 0
          %1455 = vmatpush1.bf16.msra.mxu0 0
          %1456 = vmatprep.subr.bf16.mxu0 0
          %1457 = vmatpush1.bf16.msra.mxu0 0
          %1458 = vmatprep.subr.bf16.mxu0 0
          %1459 = vmatpush1.bf16.msra.mxu0 0
          %1460 = vmatprep.mubr.bf16.mxu0 0
          %1461 = vmatmul.mubr.bf16.gmra.mrb[0].mxu0 %v1426
          %v1462 = vpop.f32.mrb[0].mxu0
          %v1463 = vadd.f32 %v1411, %v1462
          %v1464 = vpop.f32.mrb[0].mxu0
          %v1465 = vpop.f32.mrb[0].mxu0
          %v1466 = vpop.f32.mrb[0].mxu0
          %1467 = vdwg.mxu0
          %v1468 = vmul.f32 %v1463, 0.5
          %v1469 = vmul.f32 %v1463, 0.70710677
          %v1470 = verf.f32.pop %v1469
          %v1471 = vadd.f32 %v1470, 1.0
          %v1472 = vmul.f32 %v1468, %v1471
          %v1473 = vpack.c.bf16 %v1472, %v1472
          %v1474 = vld [vmem:[%s10] sm:$0xf]
          %v1475 = vld [vmem:[%s10 + $0x4] sm:$0xf]
          %v1476 = vld [vmem:[%s10 + $0x8] sm:$0xf]
          %v1477 = vld [vmem:[%s10 + $0xc] sm:$0xf]
          %v1478 = vld [vmem:[%s10 + $0x10] sm:$0xf]
          %v1479 = vld [vmem:[%s10 + $0x14] sm:$0xf]
          %v1480 = vld [vmem:[%s10 + $0x18] sm:$0xf]
          %v1481 = vld [vmem:[%s10 + $0x1c] sm:$0xf]
          %v1482 = vld [vmem:[%s10 + $0x20] sm:$0xf]
          %v1483 = vld [vmem:[%s10 + $0x24] sm:$0xf]
          %v1484 = vld [vmem:[%s10 + $0x28] sm:$0xf]
          %v1485 = vld [vmem:[%s10 + $0x2c] sm:$0xf]
          %v1486 = vld [vmem:[%s10 + $0x30] sm:$0xf]
          %v1487 = vld [vmem:[%s10 + $0x34] sm:$0xf]
          %v1488 = vld [vmem:[%s10 + $0x38] sm:$0xf]
          %v1489 = vld [vmem:[%s10 + $0x3c] sm:$0xf]
          %v1490 = vld [vmem:[%s11] sm:$0x1]
          %v1492 = vlaneseq
          %v1493 = vshrl.u32 %v1492, 7
          %v1494 = vsub.s32 0, %v1493
          %v1495 = vrot.slane %v1490, %v1494
          %v1513 = vunpack.c.l.b16 %v1474
          %v1514 = vunpack.c.l.b16 %v1475
          %v1515 = vunpack.c.l.b16 %v1476
          %v1516 = vunpack.c.l.b16 %v1477
          %v1517 = vunpack.c.l.b16 %v1478
          %v1518 = vunpack.c.l.b16 %v1479
          %v1519 = vunpack.c.l.b16 %v1480
          %v1520 = vunpack.c.l.b16 %v1481
          %v1521 = vunpack.c.l.b16 %v1482
          %v1522 = vunpack.c.l.b16 %v1483
          %v1523 = vunpack.c.l.b16 %v1484
          %v1524 = vunpack.c.l.b16 %v1485
          %v1525 = vunpack.c.l.b16 %v1486
          %v1526 = vunpack.c.l.b16 %v1487
          %v1527 = vunpack.c.l.b16 %v1488
          %v1528 = vunpack.c.l.b16 %v1489
          %v1529 = vpack.c.b16 %v1514, %v1513
          %v1530 = vpack.c.b16 %v1516, %v1515
          %v1531 = vpack.c.b16 %v1518, %v1517
          %v1532 = vpack.c.b16 %v1520, %v1519
          %v1533 = vpack.c.b16 %v1522, %v1521
          %v1534 = vpack.c.b16 %v1524, %v1523
          %v1535 = vpack.c.b16 %v1526, %v1525
          %v1536 = vpack.c.b16 %v1528, %v1527
          %1545 = vmatprep.subr.bf16.mxu0 0
          %1546 = vmatpush1.bf16.msra.mxu0 %v1529
          %1547 = vmatprep.subr.bf16.mxu0 0
          %1548 = vmatpush1.bf16.msra.mxu0 %v1530
          %1549 = vmatprep.subr.bf16.mxu0 0
          %1550 = vmatpush1.bf16.msra.mxu0 %v1531
          %1551 = vmatprep.subr.bf16.mxu0 0
          %1552 = vmatpush1.bf16.msra.mxu0 %v1532
          %1553 = vmatprep.subr.bf16.mxu0 0
          %1554 = vmatpush1.bf16.msra.mxu0 %v1533
          %1555 = vmatprep.subr.bf16.mxu0 0
          %1556 = vmatpush1.bf16.msra.mxu0 %v1534
          %1557 = vmatprep.subr.bf16.mxu0 0
          %1558 = vmatpush1.bf16.msra.mxu0 %v1535
          %1559 = vmatprep.subr.bf16.mxu0 0
          %1560 = vmatpush1.bf16.msra.mxu0 %v1536
          %1561 = vmatprep.subr.bf16.mxu0 0
          %1562 = vmatpush1.bf16.msra.mxu0 0
          %1563 = vmatprep.subr.bf16.mxu0 0
          %1564 = vmatpush1.bf16.msra.mxu0 0
          %1565 = vmatprep.subr.bf16.mxu0 0
          %1566 = vmatpush1.bf16.msra.mxu0 0
          %1567 = vmatprep.subr.bf16.mxu0 0
          %1568 = vmatpush1.bf16.msra.mxu0 0
          %1569 = vmatprep.subr.bf16.mxu0 0
          %1570 = vmatpush1.bf16.msra.mxu0 0
          %1571 = vmatprep.subr.bf16.mxu0 0
          %1572 = vmatpush1.bf16.msra.mxu0 0
          %1573 = vmatprep.subr.bf16.mxu0 0
          %1574 = vmatpush1.bf16.msra.mxu0 0
          %1575 = vmatprep.subr.bf16.mxu0 0
          %1576 = vmatpush1.bf16.msra.mxu0 0
          %1577 = vmatprep.mubr.bf16.mxu0 0
          %1578 = vmatmul.mubr.bf16.gmra.mrb[0].mxu0 %v1473
          %v1579 = vpop.f32.mrb[0].mxu0
          %v1580 = vadd.f32 %v1495, %v1579
          %v1581 = vpop.f32.mrb[0].mxu0
          %v1582 = vpop.f32.mrb[0].mxu0
          %v1583 = vpop.f32.mrb[0].mxu0
          %1584 = vdwg.mxu0
          %v1585 = vadd.f32 %v1369, %v1580
          %1586 = vst.msk [vmem:[%s562] sm:$0xff] %vm1372, %v1585
        $region92: #{tpu_custom_call.1} parent=67 // pred_fallthru
          _
        %s1587 = sand.u32 %s340, 1
        %s1588 = scalar_lea.sflag [#allocation7], %s1587
        %s1589 = sand.u32 %s340, 1
        %s1590 = smul.addr %s1589, 8
        %s1591 = scalar_lea.vmem [#allocation13], %s1590
        // Predicated region
        $region93: #{tpu_custom_call.1} parent=67 // pred_check
          %p1592 = pneg %p350
        $region94: #{tpu_custom_call.1} parent=67 // pred_check_branch
          %1594 = sbr.rel (%p1592) target = $region96
        $region95: #{tpu_custom_call.1} parent=67 // pred_region
          %s1596 = ssub.s32 128, 128
          %1597 = vsyncadd %s1588, %s1596
          %s1598 = sadd.s32 %s37, %s36
          %s1599 = smul.addr %s1598, 128
          %s1600 = scalar_lea.hbm %s12, %s1599
          %s1602 = sshll.u32 %s1591, 4
          %s1603 = int_to_ptr.vmem [resolvable:$true] %s1602
          %1605 = dma.vmem_to_hbm [thread:$0]  %s1603, 128, %s1600, %s1588
        $region96: #{tpu_custom_call.1} parent=67 // pred_fallthru
          _
      $region68: #{tpu_custom_call.1} parent=5 // pred_fallthru
        _
      %p1606 = scmp.le.s32.totalorder 2, %s26
      // Predicated region
      $region97: #{tpu_custom_call.1} parent=5 // pred_check
        %p1607 = pneg %p1606
      $region98: #{tpu_custom_call.1} parent=5 // pred_check_branch
        %1609 = sbr.rel (%p1607) target = $region100
      $region99: #{tpu_custom_call.1} parent=5 // pred_region
        %s1610 = ssub.s32 %s26, 2
        // Predicated region
        $region101: #{tpu_custom_call.1} parent=99 // pred_check
          %p1611 = pneg %p356
        $region102: #{tpu_custom_call.1} parent=99 // pred_check_branch
          %1613 = sbr.rel (%p1611) target = $region104
        $region103: #{tpu_custom_call.1} parent=99 // pred_region
          %s1614 = sand.u32 %s341, 1
          %s1615 = scalar_lea.sflag [#allocation7], %s1614
          %s1616 = sand.u32 %s341, 1
          %s1617 = smul.addr %s1616, 8
          %s1618 = scalar_lea.vmem [#allocation13], %s1617
          %1619 = dma.done %s1615, 128
        $region104: #{tpu_custom_call.1} parent=99 // pred_fallthru
          _
      $region100: #{tpu_custom_call.1} parent=5 // pred_fallthru
        _
    $region6: #{tpu_custom_call.1} parent=1 // loop_footer
      %s30 = sadd.s32 1, %s26
    $region7: #{tpu_custom_call.1} parent=1 // loop_footer_branch
      %25 = sbr.rel target = $region3
    $region8: #{tpu_custom_call.1} parent=1 // loop_exit
      _
    %1620 = vsyncpa [#allocation6], 1
    %s1621 = scalar_lea.sflag [#allocation6], 1
    %1622 = vsyncpa %s1621, 1
    %1623 = vsyncpa [#allocation9], 1
    %1624 = vsyncpa [#allocation12], 1
    %1625 = vsyncpa [#allocation7], 1
    %s1626 = scalar_lea.sflag [#allocation7], 1
    %1627 = vsyncpa %s1626, 1

</llo_original>
